<compile_context>
chip_gen: v7x
topology: tpu7x:2x2x1
jax: 0.10.0
libtpu: 0.0.40
codegen_flags: <defaults>
</compile_context>

<pallas_src>
import functools

import jax
import jax.numpy as jnp
from jax.experimental import pallas as pl
from jax.experimental.pallas import tpu as pltpu


# -----------------------------------------------------------------------------
# Helpers
# -----------------------------------------------------------------------------
def _reorder(w, H):
    """Reorder gate columns from canonical [i, f, g, o] to kernel [i, f, o, g]."""
    return jnp.concatenate(
        [w[..., :2 * H], w[..., 3 * H:4 * H], w[..., 2 * H:3 * H]], axis=-1)


def _pick_time_chunk(T, max_chunk=16):
    """Largest chunk <= max_chunk that divides T (chunked time grid)."""
    for tc in range(min(T, max_chunk), 0, -1):
        if T % tc == 0:
            return tc
    return 1


# -----------------------------------------------------------------------------
# Kernel 1: fused input-projection GEMM  (x @ W_ih + bias) for all directions.
#   layer 0   : xp = x        @ W                      (one operand)
#   layer k>0 : xp = prev_fwd @ W[:H] + prev_bwd @ W[H:]   (two operands,
#               which avoids materialising concat([fwd, bwd]))
# The (T*B, ndir*4H) result is split per direction before writeback.
# -----------------------------------------------------------------------------
def _make_proj_kernel(n_in, n_out):
    def kern(*refs):
        xs = refs[:n_in]
        ws = refs[n_in:2 * n_in]
        b_ref = refs[2 * n_in]
        outs = refs[2 * n_in + 1:]
        acc = b_ref[...]                                   # (1, n_out*4H)
        for x_ref, w_ref in zip(xs, ws):
            acc = acc + jnp.dot(x_ref[...], w_ref[...],
                                preferred_element_type=jnp.float32)
        g = acc.shape[-1] // n_out
        for d, o_ref in enumerate(outs):
            o_ref[...] = acc[:, d * g:(d + 1) * g]
    return kern


def input_projection(feats, ws, bias, T, B, ndir):
    """feats: list of (T*B, D_i); ws: list of (D_i, ndir*4H); bias (1, ndir*4H).
    Returns per-direction projections, each (T, B, 4H), bias folded in."""
    n_in = len(feats)
    G = ws[0].shape[1] // ndir
    # TODO(synk): tile rows (T*B) with a grid for very long sequences; the
    # whole-array GEMM is fine at these sizes and is one well-shaped MXU op.
    outs = pl.pallas_call(
        _make_proj_kernel(n_in, ndir),
        out_shape=tuple(jax.ShapeDtypeStruct((T * B, G), jnp.float32)
                        for _ in range(ndir)),
    )(*feats, *ws, bias)
    if not isinstance(outs, (tuple, list)):
        outs = (outs,)
    return [o.reshape(T, B, G) for o in outs]


# -----------------------------------------------------------------------------
# Kernel 2: fused (bi)directional recurrence.  Grid over time chunks; h/c for
# every direction live in VMEM scratch; only h @ W_hh runs per step.
# Direction 0 walks time forward, direction 1 backward (mirrored chunk via
# index_map + reversed walk inside the chunk).
# -----------------------------------------------------------------------------
def _make_lstm_kernel(ndir):
    def kern(*refs):
        xp = refs[:ndir]                    # (Tc, B, 4H) per direction
        whh = refs[ndir:2 * ndir]           # (H, 4H)   per direction
        outs = refs[2 * ndir:3 * ndir]      # (Tc, B, H) per direction
        h = refs[3 * ndir:4 * ndir]         # (B, H) scratch
        c = refs[4 * ndir:5 * ndir]         # (B, H) scratch

        chunk = pl.program_id(0)
        Tc = xp[0].shape[0]
        H = whh[0].shape[0]

        @pl.when(chunk == 0)
        def _():
            # PyTorch forward passes explicit zero (h0, c0).
            for d in range(ndir):
                h[d][...] = jnp.zeros_like(h[d])
                c[d][...] = jnp.zeros_like(c[d])

        def step(j, carry):
            del carry
            for d in range(ndir):
                # forward dir uses local row j; backward dir got the mirrored
                # chunk (see index_map) and walks it in reverse.
                jj = j if d == 0 else Tc - 1 - j
                # input projection + bias already folded in (hoisted GEMM).
                g = xp[d][jj] + jnp.dot(h[d][...], whh[d][...],
                                        preferred_element_type=jnp.float32)
                # gate columns [i, f, o, g]: one sigmoid slab + one tanh slab.
                s = jax.nn.sigmoid(g[:, :3 * H])
                t = jnp.tanh(g[:, 3 * H:])
                c_new = s[:, H:2 * H] * c[d][...] + s[:, :H] * t
                h_new = s[:, 2 * H:] * jnp.tanh(c_new)
                h[d][...] = h_new
                c[d][...] = c_new
                outs[d][jj] = h_new
            return 0

        jax.lax.fori_loop(0, Tc, step, 0, unroll=True)
    return kern


def lstm_layer(xps, whhs, time_chunk):
    """xps: per-direction (T, B, 4H) projections; whhs: per-direction (H, 4H).
    Returns per-direction hidden states, each (T, B, H) in natural time order."""
    ndir = len(xps)
    T, B, G = xps[0].shape
    H = whhs[0].shape[0]
    Tc = time_chunk
    n_chunks = T // Tc

    def fwd_map(c):
        return (c, 0, 0)

    def bwd_map(c):
        return (n_chunks - 1 - c, 0, 0)      # reversal = DMA addressing only

    time_maps = [fwd_map, bwd_map][:ndir]

    in_specs = ([pl.BlockSpec((Tc, B, G), m) for m in time_maps] +
                [pl.BlockSpec((H, G), lambda c: (0, 0)) for _ in range(ndir)])
    out_specs = tuple(pl.BlockSpec((Tc, B, H), m) for m in time_maps)
    out_shape = tuple(jax.ShapeDtypeStruct((T, B, H), jnp.float32)
                      for _ in range(ndir))
    scratch = [pltpu.VMEM((B, H), jnp.float32)] * (2 * ndir)

    outs = pl.pallas_call(
        _make_lstm_kernel(ndir),
        out_shape=out_shape,
        grid_spec=pltpu.PrefetchScalarGridSpec(
            num_scalar_prefetch=0,
            grid=(n_chunks,),
            in_specs=in_specs,
            out_specs=out_specs,
            scratch_shapes=scratch,
        ),
        compiler_params=pltpu.CompilerParams(
            dimension_semantics=("arbitrary",)),   # sequential recurrence
    )(*xps, *whhs)
    if not isinstance(outs, (tuple, list)):
        outs = (outs,)
    return list(outs)


# -----------------------------------------------------------------------------
# Parameter construction (deterministic, mimics nn.LSTM/Linear shapes).
# Canonical layout: W_ih (in, 4H), W_hh (H, 4H), bias (1, 4H), gates [i,f,g,o].
# -----------------------------------------------------------------------------
def make_params(key, embed_dim, hidden_dim, output_dim, num_layers,
                bidirectional):
    mul = 2 if bidirectional else 1
    bound = 1.0 / jnp.sqrt(jnp.float32(hidden_dim))
    params = {"layers": []}
    for layer in range(num_layers):
        in_dim = embed_dim if layer == 0 else hidden_dim * mul
        dirs = []
        for _ in range(mul):
            key, k1, k2, k3 = jax.random.split(key, 4)
            dirs.append({
                "w_ih": jax.random.uniform(k1, (in_dim, 4 * hidden_dim),
                                           jnp.float32, -bound, bound),
                "w_hh": jax.random.uniform(k2, (hidden_dim, 4 * hidden_dim),
                                           jnp.float32, -bound, bound),
                "b": jax.random.uniform(k3, (1, 4 * hidden_dim),
                                        jnp.float32, -bound, bound),
            })
        params["layers"].append(dirs)
    key, k1, k2 = jax.random.split(key, 3)
    fbound = 1.0 / jnp.sqrt(jnp.float32(hidden_dim * mul))
    params["fc_w"] = jax.random.uniform(k1, (hidden_dim * mul, output_dim),
                                        jnp.float32, -fbound, fbound)
    params["fc_b"] = jax.random.uniform(k2, (1, output_dim),
                                        jnp.float32, -fbound, fbound)
    return params


def _kernel_weights(dirs, H, in_splits):
    """Build kernel-layout weights for one layer.

    in_splits: list of (row_start, row_len) matching the feature operands of
    the projection GEMM (so stacked-layer inputs need no concat).
    Returns (ws, bias, whhs) with gate columns reordered to [i, f, o, g] and
    all directions fused along the output (N) axis for the projection.
    """
    ws = []
    for (r0, rlen) in in_splits:
        ws.append(jnp.concatenate(
            [_reorder(d["w_ih"][r0:r0 + rlen], H) for d in dirs], axis=1))
    bias = jnp.concatenate([_reorder(d["b"], H) for d in dirs], axis=1)
    whhs = [_reorder(d["w_hh"], H) for d in dirs]
    return ws, bias, whhs


# -----------------------------------------------------------------------------
# Full forward: stacked (optionally bidirectional) LSTM + Linear on last step.
# -----------------------------------------------------------------------------
@functools.partial(jax.jit, static_argnames=("bidirectional", "time_chunk"))
def custom_model_forward(params, x_bte, bidirectional=True, time_chunk=None):
    # x_bte: (B, T, E) -- batch_first, like the PyTorch module.
    x = jnp.transpose(x_bte, (1, 0, 2)).astype(jnp.float32)    # (T, B, E)
    T, B, E = x.shape
    ndir = 2 if bidirectional else 1
    H = params["layers"][0][0]["w_hh"].shape[0]
    Tc = _pick_time_chunk(T) if time_chunk is None else time_chunk

    feats = [x.reshape(T * B, E)]          # per-direction feature slabs
    in_splits = [(0, E)]
    outs = None
    for dirs in params["layers"]:
        ws, bias, whhs = _kernel_weights(dirs, H, in_splits)
        xps = input_projection(feats, ws, bias, T, B, ndir)   # hoisted GEMM
        outs = lstm_layer(xps, whhs, Tc)                      # fused recurrence
        feats = [o.reshape(T * B, H) for o in outs]
        in_splits = [(d * H, H) for d in range(ndir)]

    # out_lstm[:, -1, :] == concat over directions of hidden at position T-1.
    last = jnp.concatenate([o[T - 1] for o in outs], axis=-1)  # (B, ndir*H)
    # Final Linear in plain JAX (per perf review: separate pallas_call for a
    # (B, 2H) @ (2H, 2) is launch-overhead dominated).
    return last @ params["fc_w"] + params["fc_b"]


# -----------------------------------------------------------------------------
# Pure-JAX reference (for correctness check only), canonical [i,f,g,o] layout.
# -----------------------------------------------------------------------------
def _ref_direction(x_tbe, w_ih, w_hh, b):
    H = w_hh.shape[0]
    B = x_tbe.shape[1]

    def step(carry, x_t):
        h, c = carry
        g = x_t @ w_ih + h @ w_hh + b
        i = jax.nn.sigmoid(g[:, :H])
        f = jax.nn.sigmoid(g[:, H:2 * H])
        gg = jnp.tanh(g[:, 2 * H:3 * H])
        o = jax.nn.sigmoid(g[:, 3 * H:])
        c = f * c + i * gg
        h = o * jnp.tanh(c)
        return (h, c), h

    init = (jnp.zeros((B, H), jnp.float32), jnp.zeros((B, H), jnp.float32))
    _, hs = jax.lax.scan(step, init, x_tbe)
    return hs


def reference_forward(params, x_bte, bidirectional=True):
    x = jnp.transpose(x_bte, (1, 0, 2)).astype(jnp.float32)
    for dirs in params["layers"]:
        fwd = _ref_direction(x, dirs[0]["w_ih"], dirs[0]["w_hh"], dirs[0]["b"])
        if bidirectional:
            bwd = _ref_direction(x[::-1], dirs[1]["w_ih"], dirs[1]["w_hh"],
                                 dirs[1]["b"])[::-1]
            x = jnp.concatenate([fwd, bwd], axis=-1)
        else:
            x = fwd
    return x[-1] @ params["fc_w"] + params["fc_b"]


if __name__ == "__main__":
    # Small config consistent with the module's constructor args.
    batch, seq_len = 2, 8
    embed_dim, hidden_dim, output_dim = 32, 16, 2
    num_layers, bidirectional = 2, True

    key = jax.random.PRNGKey(0)
    kx, kp = jax.random.split(key)
    x = jax.random.normal(kx, (batch, seq_len, embed_dim), jnp.float32)
    params = make_params(kp, embed_dim, hidden_dim, output_dim,
                         num_layers, bidirectional)

    out = custom_model_forward(params, x, bidirectional=bidirectional)
    out = jax.block_until_ready(out)

    ref = reference_forward(params, x, bidirectional=bidirectional)
    assert out.shape == (batch, output_dim)
    assert jnp.allclose(out, ref, rtol=1e-4, atol=1e-4), "mismatch vs reference"

    print("KERNEL_OK")
</pallas_src>

<mosaic_0001>
module attributes {stable_mosaic.version = 11 : i64} {
  func.func @kern(%arg0: memref<16x32xf32, #tpu.memory_space<vmem>>, %arg1: memref<32x128xf32, #tpu.memory_space<vmem>>, %arg2: memref<1x128xf32, #tpu.memory_space<vmem>>, %arg3: memref<16x64xf32, #tpu.memory_space<vmem>>, %arg4: memref<16x64xf32, #tpu.memory_space<vmem>>) attributes {dimension_semantics = [], scalar_prefetch = 0 : i64, scratch_operands = 0 : i64, tpu.core_type = #tpu.core_type<tc>} {
    %c0 = arith.constant 0 : index
    %c0_0 = arith.constant 0 : index
    %0 = vector.load %arg2[%c0, %c0_0] : memref<1x128xf32, #tpu.memory_space<vmem>>, vector<1x128xf32>
    %c0_1 = arith.constant 0 : index
    %c0_2 = arith.constant 0 : index
    %1 = vector.load %arg0[%c0_1, %c0_2] : memref<16x32xf32, #tpu.memory_space<vmem>>, vector<16x32xf32>
    %c0_3 = arith.constant 0 : index
    %c0_4 = arith.constant 0 : index
    %2 = vector.load %arg1[%c0_3, %c0_4] : memref<32x128xf32, #tpu.memory_space<vmem>>, vector<32x128xf32>
    %cst = arith.constant dense<0.000000e+00> : vector<16x128xf32>
    %3 = tpu.matmul %1, %2, %cst {dimension_numbers = #tpu.dot_dimension_numbers<[1], [0], [0], [1], [0, 0, 1, 1], [], []>} : vector<16x32xf32>, vector<32x128xf32>, vector<16x128xf32> -> vector<16x128xf32>
    %4 = vector.broadcast %0 : vector<1x128xf32> to vector<16x128xf32>
    %5 = arith.addf %4, %3 : vector<16x128xf32>
    %6 = vector.extract_strided_slice %5 {offsets = [0, 0], sizes = [16, 64], strides = [1, 1]} : vector<16x128xf32> to vector<16x64xf32>
    %c0_5 = arith.constant 0 : index
    %c0_6 = arith.constant 0 : index
    %7 = vector.load %arg3[%c0_5, %c0_6] : memref<16x64xf32, #tpu.memory_space<vmem>>, vector<16x64xf32>
    tpu.vector_store %arg3[%c0_5, %c0_6], %6 {strides = array<i32>} : memref<16x64xf32, #tpu.memory_space<vmem>>, vector<16x64xf32>,
    %8 = vector.extract_strided_slice %5 {offsets = [0, 64], sizes = [16, 64], strides = [1, 1]} : vector<16x128xf32> to vector<16x64xf32>
    %c0_7 = arith.constant 0 : index
    %c0_8 = arith.constant 0 : index
    %9 = vector.load %arg4[%c0_7, %c0_8] : memref<16x64xf32, #tpu.memory_space<vmem>>, vector<16x64xf32>
    tpu.vector_store %arg4[%c0_7, %c0_8], %8 {strides = array<i32>} : memref<16x64xf32, #tpu.memory_space<vmem>>, vector<16x64xf32>,
    return
  }
}

module attributes {stable_mosaic.version = 11 : i64} {
  func.func @kern(%arg0: memref<16x16xf32, #tpu.memory_space<vmem>>, %arg1: memref<16x16xf32, #tpu.memory_space<vmem>>, %arg2: memref<16x128xf32, #tpu.memory_space<vmem>>, %arg3: memref<16x128xf32, #tpu.memory_space<vmem>>, %arg4: memref<1x128xf32, #tpu.memory_space<vmem>>, %arg5: memref<16x64xf32, #tpu.memory_space<vmem>>, %arg6: memref<16x64xf32, #tpu.memory_space<vmem>>) attributes {dimension_semantics = [], scalar_prefetch = 0 : i64, scratch_operands = 0 : i64, tpu.core_type = #tpu.core_type<tc>} {
    %c0 = arith.constant 0 : index
    %c0_0 = arith.constant 0 : index
    %0 = vector.load %arg4[%c0, %c0_0] : memref<1x128xf32, #tpu.memory_space<vmem>>, vector<1x128xf32>
    %c0_1 = arith.constant 0 : index
    %c0_2 = arith.constant 0 : index
    %1 = vector.load %arg0[%c0_1, %c0_2] : memref<16x16xf32, #tpu.memory_space<vmem>>, vector<16x16xf32>
    %c0_3 = arith.constant 0 : index
    %c0_4 = arith.constant 0 : index
    %2 = vector.load %arg2[%c0_3, %c0_4] : memref<16x128xf32, #tpu.memory_space<vmem>>, vector<16x128xf32>
    %cst = arith.constant dense<0.000000e+00> : vector<16x128xf32>
    %3 = tpu.matmul %1, %2, %cst {dimension_numbers = #tpu.dot_dimension_numbers<[1], [0], [0], [1], [0, 0, 1, 1], [], []>} : vector<16x16xf32>, vector<16x128xf32>, vector<16x128xf32> -> vector<16x128xf32>
    %4 = vector.broadcast %0 : vector<1x128xf32> to vector<16x128xf32>
    %5 = arith.addf %4, %3 : vector<16x128xf32>
    %c0_5 = arith.constant 0 : index
    %c0_6 = arith.constant 0 : index
    %6 = vector.load %arg1[%c0_5, %c0_6] : memref<16x16xf32, #tpu.memory_space<vmem>>, vector<16x16xf32>
    %c0_7 = arith.constant 0 : index
    %c0_8 = arith.constant 0 : index
    %7 = vector.load %arg3[%c0_7, %c0_8] : memref<16x128xf32, #tpu.memory_space<vmem>>, vector<16x128xf32>
    %cst_9 = arith.constant dense<0.000000e+00> : vector<16x128xf32>
    %8 = tpu.matmul %6, %7, %cst_9 {dimension_numbers = #tpu.dot_dimension_numbers<[1], [0], [0], [1], [0, 0, 1, 1], [], []>} : vector<16x16xf32>, vector<16x128xf32>, vector<16x128xf32> -> vector<16x128xf32>
    %9 = arith.addf %5, %8 : vector<16x128xf32>
    %10 = vector.extract_strided_slice %9 {offsets = [0, 0], sizes = [16, 64], strides = [1, 1]} : vector<16x128xf32> to vector<16x64xf32>
    %c0_10 = arith.constant 0 : index
    %c0_11 = arith.constant 0 : index
    %11 = vector.load %arg5[%c0_10, %c0_11] : memref<16x64xf32, #tpu.memory_space<vmem>>, vector<16x64xf32>
    tpu.vector_store %arg5[%c0_10, %c0_11], %10 {strides = array<i32>} : memref<16x64xf32, #tpu.memory_space<vmem>>, vector<16x64xf32>,
    %12 = vector.extract_strided_slice %9 {offsets = [0, 64], sizes = [16, 64], strides = [1, 1]} : vector<16x128xf32> to vector<16x64xf32>
    %c0_12 = arith.constant 0 : index
    %c0_13 = arith.constant 0 : index
    %13 = vector.load %arg6[%c0_12, %c0_13] : memref<16x64xf32, #tpu.memory_space<vmem>>, vector<16x64xf32>
    tpu.vector_store %arg6[%c0_12, %c0_13], %12 {strides = array<i32>} : memref<16x64xf32, #tpu.memory_space<vmem>>, vector<16x64xf32>,
    return
  }
}

module attributes {stable_mosaic.version = 11 : i64} {
  func.func @kern(%arg0: i32, %arg1: memref<8x2x64xf32, #tpu.memory_space<vmem>>, %arg2: memref<8x2x64xf32, #tpu.memory_space<vmem>>, %arg3: memref<16x64xf32, #tpu.memory_space<vmem>>, %arg4: memref<16x64xf32, #tpu.memory_space<vmem>>, %arg5: memref<8x2x16xf32, #tpu.memory_space<vmem>>, %arg6: memref<8x2x16xf32, #tpu.memory_space<vmem>>, %arg7: memref<2x16xf32, #tpu.memory_space<vmem>>, %arg8: memref<2x16xf32, #tpu.memory_space<vmem>>, %arg9: memref<2x16xf32, #tpu.memory_space<vmem>>, %arg10: memref<2x16xf32, #tpu.memory_space<vmem>>) attributes {dimension_semantics = [#tpu.dimension_semantics<arbitrary>], iteration_bounds = array<i64: 1>, scalar_prefetch = 0 : i64, scratch_operands = 4 : i64, tpu.core_type = #tpu.core_type<tc>, window_params = [{transform_indices = @transform_0, window_bounds = array<i64: 8, 2, 64>}, {transform_indices = @transform_1, window_bounds = array<i64: 8, 2, 64>}, {pipeline_mode = #tpu.pipeline_mode<synchronous>, transform_indices = @transform_2, window_bounds = array<i64: 16, 64>}, {pipeline_mode = #tpu.pipeline_mode<synchronous>, transform_indices = @transform_3, window_bounds = array<i64: 16, 64>}, {transform_indices = @transform_4, window_bounds = array<i64: 8, 2, 16>}, {transform_indices = @transform_5, window_bounds = array<i64: 8, 2, 16>}]} {
    %c0_i32 = arith.constant 0 : i32
    %0 = arith.cmpi eq, %arg0, %c0_i32 : i32
    %1 = arith.extui %0 : i1 to i32
    %c0_i32_0 = arith.constant 0 : i32
    %2 = arith.cmpi ne, %1, %c0_i32_0 : i32
    scf.if %2 {
      %cst_264 = arith.constant 0.000000e+00 : f32
      %491 = vector.broadcast %cst_264 : f32 to vector<2x16xf32>
      %c0_265 = arith.constant 0 : index
      %c0_266 = arith.constant 0 : index
      %492 = vector.load %arg7[%c0_265, %c0_266] : memref<2x16xf32, #tpu.memory_space<vmem>>, vector<2x16xf32>
      tpu.vector_store %arg7[%c0_265, %c0_266], %491 {strides = array<i32>} : memref<2x16xf32, #tpu.memory_space<vmem>>, vector<2x16xf32>,
      %cst_267 = arith.constant 0.000000e+00 : f32
      %493 = vector.broadcast %cst_267 : f32 to vector<2x16xf32>
      %c0_268 = arith.constant 0 : index
      %c0_269 = arith.constant 0 : index
      %494 = vector.load %arg9[%c0_268, %c0_269] : memref<2x16xf32, #tpu.memory_space<vmem>>, vector<2x16xf32>
      tpu.vector_store %arg9[%c0_268, %c0_269], %493 {strides = array<i32>} : memref<2x16xf32, #tpu.memory_space<vmem>>, vector<2x16xf32>,
      %cst_270 = arith.constant 0.000000e+00 : f32
      %495 = vector.broadcast %cst_270 : f32 to vector<2x16xf32>
      %c0_271 = arith.constant 0 : index
      %c0_272 = arith.constant 0 : index
      %496 = vector.load %arg8[%c0_271, %c0_272] : memref<2x16xf32, #tpu.memory_space<vmem>>, vector<2x16xf32>
      tpu.vector_store %arg8[%c0_271, %c0_272], %495 {strides = array<i32>} : memref<2x16xf32, #tpu.memory_space<vmem>>, vector<2x16xf32>,
      %cst_273 = arith.constant 0.000000e+00 : f32
      %497 = vector.broadcast %cst_273 : f32 to vector<2x16xf32>
      %c0_274 = arith.constant 0 : index
      %c0_275 = arith.constant 0 : index
      %498 = vector.load %arg10[%c0_274, %c0_275] : memref<2x16xf32, #tpu.memory_space<vmem>>, vector<2x16xf32>
      tpu.vector_store %arg10[%c0_274, %c0_275], %497 {strides = array<i32>} : memref<2x16xf32, #tpu.memory_space<vmem>>, vector<2x16xf32>,
    } else {
    }
    %c0_i32_1 = arith.constant 0 : i32
    %3 = arith.index_cast %c0_i32_1 : i32 to index
    %c0 = arith.constant 0 : index
    %c0_2 = arith.constant 0 : index
    %4 = vector.load %arg1[%3, %c0, %c0_2] : memref<8x2x64xf32, #tpu.memory_space<vmem>>, vector<1x2x64xf32>
    %5 = vector.shape_cast %4 : vector<1x2x64xf32> to vector<2x64xf32>
    %c0_3 = arith.constant 0 : index
    %c0_4 = arith.constant 0 : index
    %6 = vector.load %arg7[%c0_3, %c0_4] : memref<2x16xf32, #tpu.memory_space<vmem>>, vector<2x16xf32>
    %c0_5 = arith.constant 0 : index
    %c0_6 = arith.constant 0 : index
    %7 = vector.load %arg3[%c0_5, %c0_6] : memref<16x64xf32, #tpu.memory_space<vmem>>, vector<16x64xf32>
    %cst = arith.constant dense<0.000000e+00> : vector<2x64xf32>
    %8 = tpu.matmul %6, %7, %cst {dimension_numbers = #tpu.dot_dimension_numbers<[1], [0], [0], [1], [0, 0, 1, 1], [], []>} : vector<2x16xf32>, vector<16x64xf32>, vector<2x64xf32> -> vector<2x64xf32>
    %9 = arith.addf %5, %8 : vector<2x64xf32>
    %10 = vector.extract_strided_slice %9 {offsets = [0, 0], sizes = [2, 48], strides = [1, 1]} : vector<2x64xf32> to vector<2x48xf32>
    %11 = arith.negf %10 : vector<2x48xf32>
    %12 = math.exp %11 : vector<2x48xf32>
    %cst_7 = arith.constant 1.000000e+00 : f32
    %13 = vector.broadcast %cst_7 : f32 to vector<2x48xf32>
    %14 = arith.addf %13, %12 : vector<2x48xf32>
    %15 = arith.divf %13, %14 : vector<2x48xf32>
    %16 = vector.extract_strided_slice %9 {offsets = [0, 48], sizes = [2, 16], strides = [1, 1]} : vector<2x64xf32> to vector<2x16xf32>
    %17 = math.tanh %16 : vector<2x16xf32>
    %18 = vector.extract_strided_slice %15 {offsets = [0, 16], sizes = [2, 16], strides = [1, 1]} : vector<2x48xf32> to vector<2x16xf32>
    %c0_8 = arith.constant 0 : index
    %c0_9 = arith.constant 0 : index
    %19 = vector.load %arg9[%c0_8, %c0_9] : memref<2x16xf32, #tpu.memory_space<vmem>>, vector<2x16xf32>
    %20 = arith.mulf %18, %19 : vector<2x16xf32>
    %21 = vector.extract_strided_slice %15 {offsets = [0, 0], sizes = [2, 16], strides = [1, 1]} : vector<2x48xf32> to vector<2x16xf32>
    %22 = arith.mulf %21, %17 : vector<2x16xf32>
    %23 = arith.addf %20, %22 : vector<2x16xf32>
    %24 = vector.extract_strided_slice %15 {offsets = [0, 32], sizes = [2, 16], strides = [1, 1]} : vector<2x48xf32> to vector<2x16xf32>
    %25 = math.tanh %23 : vector<2x16xf32>
    %26 = arith.mulf %24, %25 : vector<2x16xf32>
    %c0_10 = arith.constant 0 : index
    %c0_11 = arith.constant 0 : index
    %27 = vector.load %arg7[%c0_10, %c0_11] : memref<2x16xf32, #tpu.memory_space<vmem>>, vector<2x16xf32>
    tpu.vector_store %arg7[%c0_10, %c0_11], %26 {strides = array<i32>} : memref<2x16xf32, #tpu.memory_space<vmem>>, vector<2x16xf32>,
    %c0_12 = arith.constant 0 : index
    %c0_13 = arith.constant 0 : index
    %28 = vector.load %arg9[%c0_12, %c0_13] : memref<2x16xf32, #tpu.memory_space<vmem>>, vector<2x16xf32>
    tpu.vector_store %arg9[%c0_12, %c0_13], %23 {strides = array<i32>} : memref<2x16xf32, #tpu.memory_space<vmem>>, vector<2x16xf32>,
    %29 = arith.index_cast %c0_i32_1 : i32 to index
    %c0_14 = arith.constant 0 : index
    %c0_15 = arith.constant 0 : index
    %30 = vector.load %arg5[%29, %c0_14, %c0_15] : memref<8x2x16xf32, #tpu.memory_space<vmem>>, vector<1x2x16xf32>
    %31 = vector.shape_cast %30 : vector<1x2x16xf32> to vector<2x16xf32>
    %32 = vector.shape_cast %26 : vector<2x16xf32> to vector<1x2x16xf32>
    tpu.vector_store %arg5[%29, %c0_14, %c0_15], %32 {strides = array<i32>} : memref<8x2x16xf32, #tpu.memory_space<vmem>>, vector<1x2x16xf32>,
    %c7_i32 = arith.constant 7 : i32
    %33 = arith.subi %c7_i32, %c0_i32_1 : i32
    %34 = arith.index_cast %33 : i32 to index
    %c0_16 = arith.constant 0 : index
    %c0_17 = arith.constant 0 : index
    %35 = vector.load %arg2[%34, %c0_16, %c0_17] : memref<8x2x64xf32, #tpu.memory_space<vmem>>, vector<1x2x64xf32>
    %36 = vector.shape_cast %35 : vector<1x2x64xf32> to vector<2x64xf32>
    %c0_18 = arith.constant 0 : index
    %c0_19 = arith.constant 0 : index
    %37 = vector.load %arg8[%c0_18, %c0_19] : memref<2x16xf32, #tpu.memory_space<vmem>>, vector<2x16xf32>
    %c0_20 = arith.constant 0 : index
    %c0_21 = arith.constant 0 : index
    %38 = vector.load %arg4[%c0_20, %c0_21] : memref<16x64xf32, #tpu.memory_space<vmem>>, vector<16x64xf32>
    %cst_22 = arith.constant dense<0.000000e+00> : vector<2x64xf32>
    %39 = tpu.matmul %37, %38, %cst_22 {dimension_numbers = #tpu.dot_dimension_numbers<[1], [0], [0], [1], [0, 0, 1, 1], [], []>} : vector<2x16xf32>, vector<16x64xf32>, vector<2x64xf32> -> vector<2x64xf32>
    %40 = arith.addf %36, %39 : vector<2x64xf32>
    %41 = vector.extract_strided_slice %40 {offsets = [0, 0], sizes = [2, 48], strides = [1, 1]} : vector<2x64xf32> to vector<2x48xf32>
    %42 = arith.negf %41 : vector<2x48xf32>
    %43 = math.exp %42 : vector<2x48xf32>
    %cst_23 = arith.constant 1.000000e+00 : f32
    %44 = vector.broadcast %cst_23 : f32 to vector<2x48xf32>
    %45 = arith.addf %44, %43 : vector<2x48xf32>
    %46 = arith.divf %44, %45 : vector<2x48xf32>
    %47 = vector.extract_strided_slice %40 {offsets = [0, 48], sizes = [2, 16], strides = [1, 1]} : vector<2x64xf32> to vector<2x16xf32>
    %48 = math.tanh %47 : vector<2x16xf32>
    %49 = vector.extract_strided_slice %46 {offsets = [0, 16], sizes = [2, 16], strides = [1, 1]} : vector<2x48xf32> to vector<2x16xf32>
    %c0_24 = arith.constant 0 : index
    %c0_25 = arith.constant 0 : index
    %50 = vector.load %arg10[%c0_24, %c0_25] : memref<2x16xf32, #tpu.memory_space<vmem>>, vector<2x16xf32>
    %51 = arith.mulf %49, %50 : vector<2x16xf32>
    %52 = vector.extract_strided_slice %46 {offsets = [0, 0], sizes = [2, 16], strides = [1, 1]} : vector<2x48xf32> to vector<2x16xf32>
    %53 = arith.mulf %52, %48 : vector<2x16xf32>
    %54 = arith.addf %51, %53 : vector<2x16xf32>
    %55 = vector.extract_strided_slice %46 {offsets = [0, 32], sizes = [2, 16], strides = [1, 1]} : vector<2x48xf32> to vector<2x16xf32>
    %56 = math.tanh %54 : vector<2x16xf32>
    %57 = arith.mulf %55, %56 : vector<2x16xf32>
    %c0_26 = arith.constant 0 : index
    %c0_27 = arith.constant 0 : index
    %58 = vector.load %arg8[%c0_26, %c0_27] : memref<2x16xf32, #tpu.memory_space<vmem>>, vector<2x16xf32>
    tpu.vector_store %arg8[%c0_26, %c0_27], %57 {strides = array<i32>} : memref<2x16xf32, #tpu.memory_space<vmem>>, vector<2x16xf32>,
    %c0_28 = arith.constant 0 : index
    %c0_29 = arith.constant 0 : index
    %59 = vector.load %arg10[%c0_28, %c0_29] : memref<2x16xf32, #tpu.memory_space<vmem>>, vector<2x16xf32>
    tpu.vector_store %arg10[%c0_28, %c0_29], %54 {strides = array<i32>} : memref<2x16xf32, #tpu.memory_space<vmem>>, vector<2x16xf32>,
    %60 = arith.index_cast %33 : i32 to index
    %c0_30 = arith.constant 0 : index
    %c0_31 = arith.constant 0 : index
    %61 = vector.load %arg6[%60, %c0_30, %c0_31] : memref<8x2x16xf32, #tpu.memory_space<vmem>>, vector<1x2x16xf32>
    %62 = vector.shape_cast %61 : vector<1x2x16xf32> to vector<2x16xf32>
    %63 = vector.shape_cast %57 : vector<2x16xf32> to vector<1x2x16xf32>
    tpu.vector_store %arg6[%60, %c0_30, %c0_31], %63 {strides = array<i32>} : memref<8x2x16xf32, #tpu.memory_space<vmem>>, vector<1x2x16xf32>,
    %c1_i32 = arith.constant 1 : i32
    %64 = arith.index_cast %c1_i32 : i32 to index
    %c0_32 = arith.constant 0 : index
    %c0_33 = arith.constant 0 : index
    %65 = vector.load %arg1[%64, %c0_32, %c0_33] : memref<8x2x64xf32, #tpu.memory_space<vmem>>, vector<1x2x64xf32>
    %66 = vector.shape_cast %65 : vector<1x2x64xf32> to vector<2x64xf32>
    %c0_34 = arith.constant 0 : index
    %c0_35 = arith.constant 0 : index
    %67 = vector.load %arg7[%c0_34, %c0_35] : memref<2x16xf32, #tpu.memory_space<vmem>>, vector<2x16xf32>
    %c0_36 = arith.constant 0 : index
    %c0_37 = arith.constant 0 : index
    %68 = vector.load %arg3[%c0_36, %c0_37] : memref<16x64xf32, #tpu.memory_space<vmem>>, vector<16x64xf32>
    %cst_38 = arith.constant dense<0.000000e+00> : vector<2x64xf32>
    %69 = tpu.matmul %67, %68, %cst_38 {dimension_numbers = #tpu.dot_dimension_numbers<[1], [0], [0], [1], [0, 0, 1, 1], [], []>} : vector<2x16xf32>, vector<16x64xf32>, vector<2x64xf32> -> vector<2x64xf32>
    %70 = arith.addf %66, %69 : vector<2x64xf32>
    %71 = vector.extract_strided_slice %70 {offsets = [0, 0], sizes = [2, 48], strides = [1, 1]} : vector<2x64xf32> to vector<2x48xf32>
    %72 = arith.negf %71 : vector<2x48xf32>
    %73 = math.exp %72 : vector<2x48xf32>
    %cst_39 = arith.constant 1.000000e+00 : f32
    %74 = vector.broadcast %cst_39 : f32 to vector<2x48xf32>
    %75 = arith.addf %74, %73 : vector<2x48xf32>
    %76 = arith.divf %74, %75 : vector<2x48xf32>
    %77 = vector.extract_strided_slice %70 {offsets = [0, 48], sizes = [2, 16], strides = [1, 1]} : vector<2x64xf32> to vector<2x16xf32>
    %78 = math.tanh %77 : vector<2x16xf32>
    %79 = vector.extract_strided_slice %76 {offsets = [0, 16], sizes = [2, 16], strides = [1, 1]} : vector<2x48xf32> to vector<2x16xf32>
    %c0_40 = arith.constant 0 : index
    %c0_41 = arith.constant 0 : index
    %80 = vector.load %arg9[%c0_40, %c0_41] : memref<2x16xf32, #tpu.memory_space<vmem>>, vector<2x16xf32>
    %81 = arith.mulf %79, %80 : vector<2x16xf32>
    %82 = vector.extract_strided_slice %76 {offsets = [0, 0], sizes = [2, 16], strides = [1, 1]} : vector<2x48xf32> to vector<2x16xf32>
    %83 = arith.mulf %82, %78 : vector<2x16xf32>
    %84 = arith.addf %81, %83 : vector<2x16xf32>
    %85 = vector.extract_strided_slice %76 {offsets = [0, 32], sizes = [2, 16], strides = [1, 1]} : vector<2x48xf32> to vector<2x16xf32>
    %86 = math.tanh %84 : vector<2x16xf32>
    %87 = arith.mulf %85, %86 : vector<2x16xf32>
    %c0_42 = arith.constant 0 : index
    %c0_43 = arith.constant 0 : index
    %88 = vector.load %arg7[%c0_42, %c0_43] : memref<2x16xf32, #tpu.memory_space<vmem>>, vector<2x16xf32>
    tpu.vector_store %arg7[%c0_42, %c0_43], %87 {strides = array<i32>} : memref<2x16xf32, #tpu.memory_space<vmem>>, vector<2x16xf32>,
    %c0_44 = arith.constant 0 : index
    %c0_45 = arith.constant 0 : index
    %89 = vector.load %arg9[%c0_44, %c0_45] : memref<2x16xf32, #tpu.memory_space<vmem>>, vector<2x16xf32>
    tpu.vector_store %arg9[%c0_44, %c0_45], %84 {strides = array<i32>} : memref<2x16xf32, #tpu.memory_space<vmem>>, vector<2x16xf32>,
    %90 = arith.index_cast %c1_i32 : i32 to index
    %c0_46 = arith.constant 0 : index
    %c0_47 = arith.constant 0 : index
    %91 = vector.load %arg5[%90, %c0_46, %c0_47] : memref<8x2x16xf32, #tpu.memory_space<vmem>>, vector<1x2x16xf32>
    %92 = vector.shape_cast %91 : vector<1x2x16xf32> to vector<2x16xf32>
    %93 = vector.shape_cast %87 : vector<2x16xf32> to vector<1x2x16xf32>
    tpu.vector_store %arg5[%90, %c0_46, %c0_47], %93 {strides = array<i32>} : memref<8x2x16xf32, #tpu.memory_space<vmem>>, vector<1x2x16xf32>,
    %c7_i32_48 = arith.constant 7 : i32
    %94 = arith.subi %c7_i32_48, %c1_i32 : i32
    %95 = arith.index_cast %94 : i32 to index
    %c0_49 = arith.constant 0 : index
    %c0_50 = arith.constant 0 : index
    %96 = vector.load %arg2[%95, %c0_49, %c0_50] : memref<8x2x64xf32, #tpu.memory_space<vmem>>, vector<1x2x64xf32>
    %97 = vector.shape_cast %96 : vector<1x2x64xf32> to vector<2x64xf32>
    %c0_51 = arith.constant 0 : index
    %c0_52 = arith.constant 0 : index
    %98 = vector.load %arg8[%c0_51, %c0_52] : memref<2x16xf32, #tpu.memory_space<vmem>>, vector<2x16xf32>
    %c0_53 = arith.constant 0 : index
    %c0_54 = arith.constant 0 : index
    %99 = vector.load %arg4[%c0_53, %c0_54] : memref<16x64xf32, #tpu.memory_space<vmem>>, vector<16x64xf32>
    %cst_55 = arith.constant dense<0.000000e+00> : vector<2x64xf32>
    %100 = tpu.matmul %98, %99, %cst_55 {dimension_numbers = #tpu.dot_dimension_numbers<[1], [0], [0], [1], [0, 0, 1, 1], [], []>} : vector<2x16xf32>, vector<16x64xf32>, vector<2x64xf32> -> vector<2x64xf32>
    %101 = arith.addf %97, %100 : vector<2x64xf32>
    %102 = vector.extract_strided_slice %101 {offsets = [0, 0], sizes = [2, 48], strides = [1, 1]} : vector<2x64xf32> to vector<2x48xf32>
    %103 = arith.negf %102 : vector<2x48xf32>
    %104 = math.exp %103 : vector<2x48xf32>
    %cst_56 = arith.constant 1.000000e+00 : f32
    %105 = vector.broadcast %cst_56 : f32 to vector<2x48xf32>
    %106 = arith.addf %105, %104 : vector<2x48xf32>
    %107 = arith.divf %105, %106 : vector<2x48xf32>
    %108 = vector.extract_strided_slice %101 {offsets = [0, 48], sizes = [2, 16], strides = [1, 1]} : vector<2x64xf32> to vector<2x16xf32>
    %109 = math.tanh %108 : vector<2x16xf32>
    %110 = vector.extract_strided_slice %107 {offsets = [0, 16], sizes = [2, 16], strides = [1, 1]} : vector<2x48xf32> to vector<2x16xf32>
    %c0_57 = arith.constant 0 : index
    %c0_58 = arith.constant 0 : index
    %111 = vector.load %arg10[%c0_57, %c0_58] : memref<2x16xf32, #tpu.memory_space<vmem>>, vector<2x16xf32>
    %112 = arith.mulf %110, %111 : vector<2x16xf32>
    %113 = vector.extract_strided_slice %107 {offsets = [0, 0], sizes = [2, 16], strides = [1, 1]} : vector<2x48xf32> to vector<2x16xf32>
    %114 = arith.mulf %113, %109 : vector<2x16xf32>
    %115 = arith.addf %112, %114 : vector<2x16xf32>
    %116 = vector.extract_strided_slice %107 {offsets = [0, 32], sizes = [2, 16], strides = [1, 1]} : vector<2x48xf32> to vector<2x16xf32>
    %117 = math.tanh %115 : vector<2x16xf32>
    %118 = arith.mulf %116, %117 : vector<2x16xf32>
    %c0_59 = arith.constant 0 : index
    %c0_60 = arith.constant 0 : index
    %119 = vector.load %arg8[%c0_59, %c0_60] : memref<2x16xf32, #tpu.memory_space<vmem>>, vector<2x16xf32>
    tpu.vector_store %arg8[%c0_59, %c0_60], %118 {strides = array<i32>} : memref<2x16xf32, #tpu.memory_space<vmem>>, vector<2x16xf32>,
    %c0_61 = arith.constant 0 : index
    %c0_62 = arith.constant 0 : index
    %120 = vector.load %arg10[%c0_61, %c0_62] : memref<2x16xf32, #tpu.memory_space<vmem>>, vector<2x16xf32>
    tpu.vector_store %arg10[%c0_61, %c0_62], %115 {strides = array<i32>} : memref<2x16xf32, #tpu.memory_space<vmem>>, vector<2x16xf32>,
    %121 = arith.index_cast %94 : i32 to index
    %c0_63 = arith.constant 0 : index
    %c0_64 = arith.constant 0 : index
    %122 = vector.load %arg6[%121, %c0_63, %c0_64] : memref<8x2x16xf32, #tpu.memory_space<vmem>>, vector<1x2x16xf32>
    %123 = vector.shape_cast %122 : vector<1x2x16xf32> to vector<2x16xf32>
    %124 = vector.shape_cast %118 : vector<2x16xf32> to vector<1x2x16xf32>
    tpu.vector_store %arg6[%121, %c0_63, %c0_64], %124 {strides = array<i32>} : memref<8x2x16xf32, #tpu.memory_space<vmem>>, vector<1x2x16xf32>,
    %c2_i32 = arith.constant 2 : i32
    %125 = arith.index_cast %c2_i32 : i32 to index
    %c0_65 = arith.constant 0 : index
    %c0_66 = arith.constant 0 : index
    %126 = vector.load %arg1[%125, %c0_65, %c0_66] : memref<8x2x64xf32, #tpu.memory_space<vmem>>, vector<1x2x64xf32>
    %127 = vector.shape_cast %126 : vector<1x2x64xf32> to vector<2x64xf32>
    %c0_67 = arith.constant 0 : index
    %c0_68 = arith.constant 0 : index
    %128 = vector.load %arg7[%c0_67, %c0_68] : memref<2x16xf32, #tpu.memory_space<vmem>>, vector<2x16xf32>
    %c0_69 = arith.constant 0 : index
    %c0_70 = arith.constant 0 : index
    %129 = vector.load %arg3[%c0_69, %c0_70] : memref<16x64xf32, #tpu.memory_space<vmem>>, vector<16x64xf32>
    %cst_71 = arith.constant dense<0.000000e+00> : vector<2x64xf32>
    %130 = tpu.matmul %128, %129, %cst_71 {dimension_numbers = #tpu.dot_dimension_numbers<[1], [0], [0], [1], [0, 0, 1, 1], [], []>} : vector<2x16xf32>, vector<16x64xf32>, vector<2x64xf32> -> vector<2x64xf32>
    %131 = arith.addf %127, %130 : vector<2x64xf32>
    %132 = vector.extract_strided_slice %131 {offsets = [0, 0], sizes = [2, 48], strides = [1, 1]} : vector<2x64xf32> to vector<2x48xf32>
    %133 = arith.negf %132 : vector<2x48xf32>
    %134 = math.exp %133 : vector<2x48xf32>
    %cst_72 = arith.constant 1.000000e+00 : f32
    %135 = vector.broadcast %cst_72 : f32 to vector<2x48xf32>
    %136 = arith.addf %135, %134 : vector<2x48xf32>
    %137 = arith.divf %135, %136 : vector<2x48xf32>
    %138 = vector.extract_strided_slice %131 {offsets = [0, 48], sizes = [2, 16], strides = [1, 1]} : vector<2x64xf32> to vector<2x16xf32>
    %139 = math.tanh %138 : vector<2x16xf32>
    %140 = vector.extract_strided_slice %137 {offsets = [0, 16], sizes = [2, 16], strides = [1, 1]} : vector<2x48xf32> to vector<2x16xf32>
    %c0_73 = arith.constant 0 : index
    %c0_74 = arith.constant 0 : index
    %141 = vector.load %arg9[%c0_73, %c0_74] : memref<2x16xf32, #tpu.memory_space<vmem>>, vector<2x16xf32>
    %142 = arith.mulf %140, %141 : vector<2x16xf32>
    %143 = vector.extract_strided_slice %137 {offsets = [0, 0], sizes = [2, 16], strides = [1, 1]} : vector<2x48xf32> to vector<2x16xf32>
    %144 = arith.mulf %143, %139 : vector<2x16xf32>
    %145 = arith.addf %142, %144 : vector<2x16xf32>
    %146 = vector.extract_strided_slice %137 {offsets = [0, 32], sizes = [2, 16], strides = [1, 1]} : vector<2x48xf32> to vector<2x16xf32>
    %147 = math.tanh %145 : vector<2x16xf32>
    %148 = arith.mulf %146, %147 : vector<2x16xf32>
    %c0_75 = arith.constant 0 : index
    %c0_76 = arith.constant 0 : index
    %149 = vector.load %arg7[%c0_75, %c0_76] : memref<2x16xf32, #tpu.memory_space<vmem>>, vector<2x16xf32>
    tpu.vector_store %arg7[%c0_75, %c0_76], %148 {strides = array<i32>} : memref<2x16xf32, #tpu.memory_space<vmem>>, vector<2x16xf32>,
    %c0_77 = arith.constant 0 : index
    %c0_78 = arith.constant 0 : index
    %150 = vector.load %arg9[%c0_77, %c0_78] : memref<2x16xf32, #tpu.memory_space<vmem>>, vector<2x16xf32>
    tpu.vector_store %arg9[%c0_77, %c0_78], %145 {strides = array<i32>} : memref<2x16xf32, #tpu.memory_space<vmem>>, vector<2x16xf32>,
    %151 = arith.index_cast %c2_i32 : i32 to index
    %c0_79 = arith.constant 0 : index
    %c0_80 = arith.constant 0 : index
    %152 = vector.load %arg5[%151, %c0_79, %c0_80] : memref<8x2x16xf32, #tpu.memory_space<vmem>>, vector<1x2x16xf32>
    %153 = vector.shape_cast %152 : vector<1x2x16xf32> to vector<2x16xf32>
    %154 = vector.shape_cast %148 : vector<2x16xf32> to vector<1x2x16xf32>
    tpu.vector_store %arg5[%151, %c0_79, %c0_80], %154 {strides = array<i32>} : memref<8x2x16xf32, #tpu.memory_space<vmem>>, vector<1x2x16xf32>,
    %c7_i32_81 = arith.constant 7 : i32
    %155 = arith.subi %c7_i32_81, %c2_i32 : i32
    %156 = arith.index_cast %155 : i32 to index
    %c0_82 = arith.constant 0 : index
    %c0_83 = arith.constant 0 : index
    %157 = vector.load %arg2[%156, %c0_82, %c0_83] : memref<8x2x64xf32, #tpu.memory_space<vmem>>, vector<1x2x64xf32>
    %158 = vector.shape_cast %157 : vector<1x2x64xf32> to vector<2x64xf32>
    %c0_84 = arith.constant 0 : index
    %c0_85 = arith.constant 0 : index
    %159 = vector.load %arg8[%c0_84, %c0_85] : memref<2x16xf32, #tpu.memory_space<vmem>>, vector<2x16xf32>
    %c0_86 = arith.constant 0 : index
    %c0_87 = arith.constant 0 : index
    %160 = vector.load %arg4[%c0_86, %c0_87] : memref<16x64xf32, #tpu.memory_space<vmem>>, vector<16x64xf32>
    %cst_88 = arith.constant dense<0.000000e+00> : vector<2x64xf32>
    %161 = tpu.matmul %159, %160, %cst_88 {dimension_numbers = #tpu.dot_dimension_numbers<[1], [0], [0], [1], [0, 0, 1, 1], [], []>} : vector<2x16xf32>, vector<16x64xf32>, vector<2x64xf32> -> vector<2x64xf32>
    %162 = arith.addf %158, %161 : vector<2x64xf32>
    %163 = vector.extract_strided_slice %162 {offsets = [0, 0], sizes = [2, 48], strides = [1, 1]} : vector<2x64xf32> to vector<2x48xf32>
    %164 = arith.negf %163 : vector<2x48xf32>
    %165 = math.exp %164 : vector<2x48xf32>
    %cst_89 = arith.constant 1.000000e+00 : f32
    %166 = vector.broadcast %cst_89 : f32 to vector<2x48xf32>
    %167 = arith.addf %166, %165 : vector<2x48xf32>
    %168 = arith.divf %166, %167 : vector<2x48xf32>
    %169 = vector.extract_strided_slice %162 {offsets = [0, 48], sizes = [2, 16], strides = [1, 1]} : vector<2x64xf32> to vector<2x16xf32>
    %170 = math.tanh %169 : vector<2x16xf32>
    %171 = vector.extract_strided_slice %168 {offsets = [0, 16], sizes = [2, 16], strides = [1, 1]} : vector<2x48xf32> to vector<2x16xf32>
    %c0_90 = arith.constant 0 : index
    %c0_91 = arith.constant 0 : index
    %172 = vector.load %arg10[%c0_90, %c0_91] : memref<2x16xf32, #tpu.memory_space<vmem>>, vector<2x16xf32>
    %173 = arith.mulf %171, %172 : vector<2x16xf32>
    %174 = vector.extract_strided_slice %168 {offsets = [0, 0], sizes = [2, 16], strides = [1, 1]} : vector<2x48xf32> to vector<2x16xf32>
    %175 = arith.mulf %174, %170 : vector<2x16xf32>
    %176 = arith.addf %173, %175 : vector<2x16xf32>
    %177 = vector.extract_strided_slice %168 {offsets = [0, 32], sizes = [2, 16], strides = [1, 1]} : vector<2x48xf32> to vector<2x16xf32>
    %178 = math.tanh %176 : vector<2x16xf32>
    %179 = arith.mulf %177, %178 : vector<2x16xf32>
    %c0_92 = arith.constant 0 : index
    %c0_93 = arith.constant 0 : index
    %180 = vector.load %arg8[%c0_92, %c0_93] : memref<2x16xf32, #tpu.memory_space<vmem>>, vector<2x16xf32>
    tpu.vector_store %arg8[%c0_92, %c0_93], %179 {strides = array<i32>} : memref<2x16xf32, #tpu.memory_space<vmem>>, vector<2x16xf32>,
    %c0_94 = arith.constant 0 : index
    %c0_95 = arith.constant 0 : index
    %181 = vector.load %arg10[%c0_94, %c0_95] : memref<2x16xf32, #tpu.memory_space<vmem>>, vector<2x16xf32>
    tpu.vector_store %arg10[%c0_94, %c0_95], %176 {strides = array<i32>} : memref<2x16xf32, #tpu.memory_space<vmem>>, vector<2x16xf32>,
    %182 = arith.index_cast %155 : i32 to index
    %c0_96 = arith.constant 0 : index
    %c0_97 = arith.constant 0 : index
    %183 = vector.load %arg6[%182, %c0_96, %c0_97] : memref<8x2x16xf32, #tpu.memory_space<vmem>>, vector<1x2x16xf32>
    %184 = vector.shape_cast %183 : vector<1x2x16xf32> to vector<2x16xf32>
    %185 = vector.shape_cast %179 : vector<2x16xf32> to vector<1x2x16xf32>
    tpu.vector_store %arg6[%182, %c0_96, %c0_97], %185 {strides = array<i32>} : memref<8x2x16xf32, #tpu.memory_space<vmem>>, vector<1x2x16xf32>,
    %c3_i32 = arith.constant 3 : i32
    %186 = arith.index_cast %c3_i32 : i32 to index
    %c0_98 = arith.constant 0 : index
    %c0_99 = arith.constant 0 : index
    %187 = vector.load %arg1[%186, %c0_98, %c0_99] : memref<8x2x64xf32, #tpu.memory_space<vmem>>, vector<1x2x64xf32>
    %188 = vector.shape_cast %187 : vector<1x2x64xf32> to vector<2x64xf32>
    %c0_100 = arith.constant 0 : index
    %c0_101 = arith.constant 0 : index
    %189 = vector.load %arg7[%c0_100, %c0_101] : memref<2x16xf32, #tpu.memory_space<vmem>>, vector<2x16xf32>
    %c0_102 = arith.constant 0 : index
    %c0_103 = arith.constant 0 : index
    %190 = vector.load %arg3[%c0_102, %c0_103] : memref<16x64xf32, #tpu.memory_space<vmem>>, vector<16x64xf32>
    %cst_104 = arith.constant dense<0.000000e+00> : vector<2x64xf32>
    %191 = tpu.matmul %189, %190, %cst_104 {dimension_numbers = #tpu.dot_dimension_numbers<[1], [0], [0], [1], [0, 0, 1, 1], [], []>} : vector<2x16xf32>, vector<16x64xf32>, vector<2x64xf32> -> vector<2x64xf32>
    %192 = arith.addf %188, %191 : vector<2x64xf32>
    %193 = vector.extract_strided_slice %192 {offsets = [0, 0], sizes = [2, 48], strides = [1, 1]} : vector<2x64xf32> to vector<2x48xf32>
    %194 = arith.negf %193 : vector<2x48xf32>
    %195 = math.exp %194 : vector<2x48xf32>
    %cst_105 = arith.constant 1.000000e+00 : f32
    %196 = vector.broadcast %cst_105 : f32 to vector<2x48xf32>
    %197 = arith.addf %196, %195 : vector<2x48xf32>
    %198 = arith.divf %196, %197 : vector<2x48xf32>
    %199 = vector.extract_strided_slice %192 {offsets = [0, 48], sizes = [2, 16], strides = [1, 1]} : vector<2x64xf32> to vector<2x16xf32>
    %200 = math.tanh %199 : vector<2x16xf32>
    %201 = vector.extract_strided_slice %198 {offsets = [0, 16], sizes = [2, 16], strides = [1, 1]} : vector<2x48xf32> to vector<2x16xf32>
    %c0_106 = arith.constant 0 : index
    %c0_107 = arith.constant 0 : index
    %202 = vector.load %arg9[%c0_106, %c0_107] : memref<2x16xf32, #tpu.memory_space<vmem>>, vector<2x16xf32>
    %203 = arith.mulf %201, %202 : vector<2x16xf32>
    %204 = vector.extract_strided_slice %198 {offsets = [0, 0], sizes = [2, 16], strides = [1, 1]} : vector<2x48xf32> to vector<2x16xf32>
    %205 = arith.mulf %204, %200 : vector<2x16xf32>
    %206 = arith.addf %203, %205 : vector<2x16xf32>
    %207 = vector.extract_strided_slice %198 {offsets = [0, 32], sizes = [2, 16], strides = [1, 1]} : vector<2x48xf32> to vector<2x16xf32>
    %208 = math.tanh %206 : vector<2x16xf32>
    %209 = arith.mulf %207, %208 : vector<2x16xf32>
    %c0_108 = arith.constant 0 : index
    %c0_109 = arith.constant 0 : index
    %210 = vector.load %arg7[%c0_108, %c0_109] : memref<2x16xf32, #tpu.memory_space<vmem>>, vector<2x16xf32>
    tpu.vector_store %arg7[%c0_108, %c0_109], %209 {strides = array<i32>} : memref<2x16xf32, #tpu.memory_space<vmem>>, vector<2x16xf32>,
    %c0_110 = arith.constant 0 : index
    %c0_111 = arith.constant 0 : index
    %211 = vector.load %arg9[%c0_110, %c0_111] : memref<2x16xf32, #tpu.memory_space<vmem>>, vector<2x16xf32>
    tpu.vector_store %arg9[%c0_110, %c0_111], %206 {strides = array<i32>} : memref<2x16xf32, #tpu.memory_space<vmem>>, vector<2x16xf32>,
    %212 = arith.index_cast %c3_i32 : i32 to index
    %c0_112 = arith.constant 0 : index
    %c0_113 = arith.constant 0 : index
    %213 = vector.load %arg5[%212, %c0_112, %c0_113] : memref<8x2x16xf32, #tpu.memory_space<vmem>>, vector<1x2x16xf32>
    %214 = vector.shape_cast %213 : vector<1x2x16xf32> to vector<2x16xf32>
    %215 = vector.shape_cast %209 : vector<2x16xf32> to vector<1x2x16xf32>
    tpu.vector_store %arg5[%212, %c0_112, %c0_113], %215 {strides = array<i32>} : memref<8x2x16xf32, #tpu.memory_space<vmem>>, vector<1x2x16xf32>,
    %c7_i32_114 = arith.constant 7 : i32
    %216 = arith.subi %c7_i32_114, %c3_i32 : i32
    %217 = arith.index_cast %216 : i32 to index
    %c0_115 = arith.constant 0 : index
    %c0_116 = arith.constant 0 : index
    %218 = vector.load %arg2[%217, %c0_115, %c0_116] : memref<8x2x64xf32, #tpu.memory_space<vmem>>, vector<1x2x64xf32>
    %219 = vector.shape_cast %218 : vector<1x2x64xf32> to vector<2x64xf32>
    %c0_117 = arith.constant 0 : index
    %c0_118 = arith.constant 0 : index
    %220 = vector.load %arg8[%c0_117, %c0_118] : memref<2x16xf32, #tpu.memory_space<vmem>>, vector<2x16xf32>
    %c0_119 = arith.constant 0 : index
    %c0_120 = arith.constant 0 : index
    %221 = vector.load %arg4[%c0_119, %c0_120] : memref<16x64xf32, #tpu.memory_space<vmem>>, vector<16x64xf32>
    %cst_121 = arith.constant dense<0.000000e+00> : vector<2x64xf32>
    %222 = tpu.matmul %220, %221, %cst_121 {dimension_numbers = #tpu.dot_dimension_numbers<[1], [0], [0], [1], [0, 0, 1, 1], [], []>} : vector<2x16xf32>, vector<16x64xf32>, vector<2x64xf32> -> vector<2x64xf32>
    %223 = arith.addf %219, %222 : vector<2x64xf32>
    %224 = vector.extract_strided_slice %223 {offsets = [0, 0], sizes = [2, 48], strides = [1, 1]} : vector<2x64xf32> to vector<2x48xf32>
    %225 = arith.negf %224 : vector<2x48xf32>
    %226 = math.exp %225 : vector<2x48xf32>
    %cst_122 = arith.constant 1.000000e+00 : f32
    %227 = vector.broadcast %cst_122 : f32 to vector<2x48xf32>
    %228 = arith.addf %227, %226 : vector<2x48xf32>
    %229 = arith.divf %227, %228 : vector<2x48xf32>
    %230 = vector.extract_strided_slice %223 {offsets = [0, 48], sizes = [2, 16], strides = [1, 1]} : vector<2x64xf32> to vector<2x16xf32>
    %231 = math.tanh %230 : vector<2x16xf32>
    %232 = vector.extract_strided_slice %229 {offsets = [0, 16], sizes = [2, 16], strides = [1, 1]} : vector<2x48xf32> to vector<2x16xf32>
    %c0_123 = arith.constant 0 : index
    %c0_124 = arith.constant 0 : index
    %233 = vector.load %arg10[%c0_123, %c0_124] : memref<2x16xf32, #tpu.memory_space<vmem>>, vector<2x16xf32>
    %234 = arith.mulf %232, %233 : vector<2x16xf32>
    %235 = vector.extract_strided_slice %229 {offsets = [0, 0], sizes = [2, 16], strides = [1, 1]} : vector<2x48xf32> to vector<2x16xf32>
    %236 = arith.mulf %235, %231 : vector<2x16xf32>
    %237 = arith.addf %234, %236 : vector<2x16xf32>
    %238 = vector.extract_strided_slice %229 {offsets = [0, 32], sizes = [2, 16], strides = [1, 1]} : vector<2x48xf32> to vector<2x16xf32>
    %239 = math.tanh %237 : vector<2x16xf32>
    %240 = arith.mulf %238, %239 : vector<2x16xf32>
    %c0_125 = arith.constant 0 : index
    %c0_126 = arith.constant 0 : index
    %241 = vector.load %arg8[%c0_125, %c0_126] : memref<2x16xf32, #tpu.memory_space<vmem>>, vector<2x16xf32>
    tpu.vector_store %arg8[%c0_125, %c0_126], %240 {strides = array<i32>} : memref<2x16xf32, #tpu.memory_space<vmem>>, vector<2x16xf32>,
    %c0_127 = arith.constant 0 : index
    %c0_128 = arith.constant 0 : index
    %242 = vector.load %arg10[%c0_127, %c0_128] : memref<2x16xf32, #tpu.memory_space<vmem>>, vector<2x16xf32>
    tpu.vector_store %arg10[%c0_127, %c0_128], %237 {strides = array<i32>} : memref<2x16xf32, #tpu.memory_space<vmem>>, vector<2x16xf32>,
    %243 = arith.index_cast %216 : i32 to index
    %c0_129 = arith.constant 0 : index
    %c0_130 = arith.constant 0 : index
    %244 = vector.load %arg6[%243, %c0_129, %c0_130] : memref<8x2x16xf32, #tpu.memory_space<vmem>>, vector<1x2x16xf32>
    %245 = vector.shape_cast %244 : vector<1x2x16xf32> to vector<2x16xf32>
    %246 = vector.shape_cast %240 : vector<2x16xf32> to vector<1x2x16xf32>
    tpu.vector_store %arg6[%243, %c0_129, %c0_130], %246 {strides = array<i32>} : memref<8x2x16xf32, #tpu.memory_space<vmem>>, vector<1x2x16xf32>,
    %c4_i32 = arith.constant 4 : i32
    %247 = arith.index_cast %c4_i32 : i32 to index
    %c0_131 = arith.constant 0 : index
    %c0_132 = arith.constant 0 : index
    %248 = vector.load %arg1[%247, %c0_131, %c0_132] : memref<8x2x64xf32, #tpu.memory_space<vmem>>, vector<1x2x64xf32>
    %249 = vector.shape_cast %248 : vector<1x2x64xf32> to vector<2x64xf32>
    %c0_133 = arith.constant 0 : index
    %c0_134 = arith.constant 0 : index
    %250 = vector.load %arg7[%c0_133, %c0_134] : memref<2x16xf32, #tpu.memory_space<vmem>>, vector<2x16xf32>
    %c0_135 = arith.constant 0 : index
    %c0_136 = arith.constant 0 : index
    %251 = vector.load %arg3[%c0_135, %c0_136] : memref<16x64xf32, #tpu.memory_space<vmem>>, vector<16x64xf32>
    %cst_137 = arith.constant dense<0.000000e+00> : vector<2x64xf32>
    %252 = tpu.matmul %250, %251, %cst_137 {dimension_numbers = #tpu.dot_dimension_numbers<[1], [0], [0], [1], [0, 0, 1, 1], [], []>} : vector<2x16xf32>, vector<16x64xf32>, vector<2x64xf32> -> vector<2x64xf32>
    %253 = arith.addf %249, %252 : vector<2x64xf32>
    %254 = vector.extract_strided_slice %253 {offsets = [0, 0], sizes = [2, 48], strides = [1, 1]} : vector<2x64xf32> to vector<2x48xf32>
    %255 = arith.negf %254 : vector<2x48xf32>
    %256 = math.exp %255 : vector<2x48xf32>
    %cst_138 = arith.constant 1.000000e+00 : f32
    %257 = vector.broadcast %cst_138 : f32 to vector<2x48xf32>
    %258 = arith.addf %257, %256 : vector<2x48xf32>
    %259 = arith.divf %257, %258 : vector<2x48xf32>
    %260 = vector.extract_strided_slice %253 {offsets = [0, 48], sizes = [2, 16], strides = [1, 1]} : vector<2x64xf32> to vector<2x16xf32>
    %261 = math.tanh %260 : vector<2x16xf32>
    %262 = vector.extract_strided_slice %259 {offsets = [0, 16], sizes = [2, 16], strides = [1, 1]} : vector<2x48xf32> to vector<2x16xf32>
    %c0_139 = arith.constant 0 : index
    %c0_140 = arith.constant 0 : index
    %263 = vector.load %arg9[%c0_139, %c0_140] : memref<2x16xf32, #tpu.memory_space<vmem>>, vector<2x16xf32>
    %264 = arith.mulf %262, %263 : vector<2x16xf32>
    %265 = vector.extract_strided_slice %259 {offsets = [0, 0], sizes = [2, 16], strides = [1, 1]} : vector<2x48xf32> to vector<2x16xf32>
    %266 = arith.mulf %265, %261 : vector<2x16xf32>
    %267 = arith.addf %264, %266 : vector<2x16xf32>
    %268 = vector.extract_strided_slice %259 {offsets = [0, 32], sizes = [2, 16], strides = [1, 1]} : vector<2x48xf32> to vector<2x16xf32>
    %269 = math.tanh %267 : vector<2x16xf32>
    %270 = arith.mulf %268, %269 : vector<2x16xf32>
    %c0_141 = arith.constant 0 : index
    %c0_142 = arith.constant 0 : index
    %271 = vector.load %arg7[%c0_141, %c0_142] : memref<2x16xf32, #tpu.memory_space<vmem>>, vector<2x16xf32>
    tpu.vector_store %arg7[%c0_141, %c0_142], %270 {strides = array<i32>} : memref<2x16xf32, #tpu.memory_space<vmem>>, vector<2x16xf32>,
    %c0_143 = arith.constant 0 : index
    %c0_144 = arith.constant 0 : index
    %272 = vector.load %arg9[%c0_143, %c0_144] : memref<2x16xf32, #tpu.memory_space<vmem>>, vector<2x16xf32>
    tpu.vector_store %arg9[%c0_143, %c0_144], %267 {strides = array<i32>} : memref<2x16xf32, #tpu.memory_space<vmem>>, vector<2x16xf32>,
    %273 = arith.index_cast %c4_i32 : i32 to index
    %c0_145 = arith.constant 0 : index
    %c0_146 = arith.constant 0 : index
    %274 = vector.load %arg5[%273, %c0_145, %c0_146] : memref<8x2x16xf32, #tpu.memory_space<vmem>>, vector<1x2x16xf32>
    %275 = vector.shape_cast %274 : vector<1x2x16xf32> to vector<2x16xf32>
    %276 = vector.shape_cast %270 : vector<2x16xf32> to vector<1x2x16xf32>
    tpu.vector_store %arg5[%273, %c0_145, %c0_146], %276 {strides = array<i32>} : memref<8x2x16xf32, #tpu.memory_space<vmem>>, vector<1x2x16xf32>,
    %c7_i32_147 = arith.constant 7 : i32
    %277 = arith.subi %c7_i32_147, %c4_i32 : i32
    %278 = arith.index_cast %277 : i32 to index
    %c0_148 = arith.constant 0 : index
    %c0_149 = arith.constant 0 : index
    %279 = vector.load %arg2[%278, %c0_148, %c0_149] : memref<8x2x64xf32, #tpu.memory_space<vmem>>, vector<1x2x64xf32>
    %280 = vector.shape_cast %279 : vector<1x2x64xf32> to vector<2x64xf32>
    %c0_150 = arith.constant 0 : index
    %c0_151 = arith.constant 0 : index
    %281 = vector.load %arg8[%c0_150, %c0_151] : memref<2x16xf32, #tpu.memory_space<vmem>>, vector<2x16xf32>
    %c0_152 = arith.constant 0 : index
    %c0_153 = arith.constant 0 : index
    %282 = vector.load %arg4[%c0_152, %c0_153] : memref<16x64xf32, #tpu.memory_space<vmem>>, vector<16x64xf32>
    %cst_154 = arith.constant dense<0.000000e+00> : vector<2x64xf32>
    %283 = tpu.matmul %281, %282, %cst_154 {dimension_numbers = #tpu.dot_dimension_numbers<[1], [0], [0], [1], [0, 0, 1, 1], [], []>} : vector<2x16xf32>, vector<16x64xf32>, vector<2x64xf32> -> vector<2x64xf32>
    %284 = arith.addf %280, %283 : vector<2x64xf32>
    %285 = vector.extract_strided_slice %284 {offsets = [0, 0], sizes = [2, 48], strides = [1, 1]} : vector<2x64xf32> to vector<2x48xf32>
    %286 = arith.negf %285 : vector<2x48xf32>
    %287 = math.exp %286 : vector<2x48xf32>
    %cst_155 = arith.constant 1.000000e+00 : f32
    %288 = vector.broadcast %cst_155 : f32 to vector<2x48xf32>
    %289 = arith.addf %288, %287 : vector<2x48xf32>
    %290 = arith.divf %288, %289 : vector<2x48xf32>
    %291 = vector.extract_strided_slice %284 {offsets = [0, 48], sizes = [2, 16], strides = [1, 1]} : vector<2x64xf32> to vector<2x16xf32>
    %292 = math.tanh %291 : vector<2x16xf32>
    %293 = vector.extract_strided_slice %290 {offsets = [0, 16], sizes = [2, 16], strides = [1, 1]} : vector<2x48xf32> to vector<2x16xf32>
    %c0_156 = arith.constant 0 : index
    %c0_157 = arith.constant 0 : index
    %294 = vector.load %arg10[%c0_156, %c0_157] : memref<2x16xf32, #tpu.memory_space<vmem>>, vector<2x16xf32>
    %295 = arith.mulf %293, %294 : vector<2x16xf32>
    %296 = vector.extract_strided_slice %290 {offsets = [0, 0], sizes = [2, 16], strides = [1, 1]} : vector<2x48xf32> to vector<2x16xf32>
    %297 = arith.mulf %296, %292 : vector<2x16xf32>
    %298 = arith.addf %295, %297 : vector<2x16xf32>
    %299 = vector.extract_strided_slice %290 {offsets = [0, 32], sizes = [2, 16], strides = [1, 1]} : vector<2x48xf32> to vector<2x16xf32>
    %300 = math.tanh %298 : vector<2x16xf32>
    %301 = arith.mulf %299, %300 : vector<2x16xf32>
    %c0_158 = arith.constant 0 : index
    %c0_159 = arith.constant 0 : index
    %302 = vector.load %arg8[%c0_158, %c0_159] : memref<2x16xf32, #tpu.memory_space<vmem>>, vector<2x16xf32>
    tpu.vector_store %arg8[%c0_158, %c0_159], %301 {strides = array<i32>} : memref<2x16xf32, #tpu.memory_space<vmem>>, vector<2x16xf32>,
    %c0_160 = arith.constant 0 : index
    %c0_161 = arith.constant 0 : index
    %303 = vector.load %arg10[%c0_160, %c0_161] : memref<2x16xf32, #tpu.memory_space<vmem>>, vector<2x16xf32>
    tpu.vector_store %arg10[%c0_160, %c0_161], %298 {strides = array<i32>} : memref<2x16xf32, #tpu.memory_space<vmem>>, vector<2x16xf32>,
    %304 = arith.index_cast %277 : i32 to index
    %c0_162 = arith.constant 0 : index
    %c0_163 = arith.constant 0 : index
    %305 = vector.load %arg6[%304, %c0_162, %c0_163] : memref<8x2x16xf32, #tpu.memory_space<vmem>>, vector<1x2x16xf32>
    %306 = vector.shape_cast %305 : vector<1x2x16xf32> to vector<2x16xf32>
    %307 = vector.shape_cast %301 : vector<2x16xf32> to vector<1x2x16xf32>
    tpu.vector_store %arg6[%304, %c0_162, %c0_163], %307 {strides = array<i32>} : memref<8x2x16xf32, #tpu.memory_space<vmem>>, vector<1x2x16xf32>,
    %c5_i32 = arith.constant 5 : i32
    %308 = arith.index_cast %c5_i32 : i32 to index
    %c0_164 = arith.constant 0 : index
    %c0_165 = arith.constant 0 : index
    %309 = vector.load %arg1[%308, %c0_164, %c0_165] : memref<8x2x64xf32, #tpu.memory_space<vmem>>, vector<1x2x64xf32>
    %310 = vector.shape_cast %309 : vector<1x2x64xf32> to vector<2x64xf32>
    %c0_166 = arith.constant 0 : index
    %c0_167 = arith.constant 0 : index
    %311 = vector.load %arg7[%c0_166, %c0_167] : memref<2x16xf32, #tpu.memory_space<vmem>>, vector<2x16xf32>
    %c0_168 = arith.constant 0 : index
    %c0_169 = arith.constant 0 : index
    %312 = vector.load %arg3[%c0_168, %c0_169] : memref<16x64xf32, #tpu.memory_space<vmem>>, vector<16x64xf32>
    %cst_170 = arith.constant dense<0.000000e+00> : vector<2x64xf32>
    %313 = tpu.matmul %311, %312, %cst_170 {dimension_numbers = #tpu.dot_dimension_numbers<[1], [0], [0], [1], [0, 0, 1, 1], [], []>} : vector<2x16xf32>, vector<16x64xf32>, vector<2x64xf32> -> vector<2x64xf32>
    %314 = arith.addf %310, %313 : vector<2x64xf32>
    %315 = vector.extract_strided_slice %314 {offsets = [0, 0], sizes = [2, 48], strides = [1, 1]} : vector<2x64xf32> to vector<2x48xf32>
    %316 = arith.negf %315 : vector<2x48xf32>
    %317 = math.exp %316 : vector<2x48xf32>
    %cst_171 = arith.constant 1.000000e+00 : f32
    %318 = vector.broadcast %cst_171 : f32 to vector<2x48xf32>
    %319 = arith.addf %318, %317 : vector<2x48xf32>
    %320 = arith.divf %318, %319 : vector<2x48xf32>
    %321 = vector.extract_strided_slice %314 {offsets = [0, 48], sizes = [2, 16], strides = [1, 1]} : vector<2x64xf32> to vector<2x16xf32>
    %322 = math.tanh %321 : vector<2x16xf32>
    %323 = vector.extract_strided_slice %320 {offsets = [0, 16], sizes = [2, 16], strides = [1, 1]} : vector<2x48xf32> to vector<2x16xf32>
    %c0_172 = arith.constant 0 : index
    %c0_173 = arith.constant 0 : index
    %324 = vector.load %arg9[%c0_172, %c0_173] : memref<2x16xf32, #tpu.memory_space<vmem>>, vector<2x16xf32>
    %325 = arith.mulf %323, %324 : vector<2x16xf32>
    %326 = vector.extract_strided_slice %320 {offsets = [0, 0], sizes = [2, 16], strides = [1, 1]} : vector<2x48xf32> to vector<2x16xf32>
    %327 = arith.mulf %326, %322 : vector<2x16xf32>
    %328 = arith.addf %325, %327 : vector<2x16xf32>
    %329 = vector.extract_strided_slice %320 {offsets = [0, 32], sizes = [2, 16], strides = [1, 1]} : vector<2x48xf32> to vector<2x16xf32>
    %330 = math.tanh %328 : vector<2x16xf32>
    %331 = arith.mulf %329, %330 : vector<2x16xf32>
    %c0_174 = arith.constant 0 : index
    %c0_175 = arith.constant 0 : index
    %332 = vector.load %arg7[%c0_174, %c0_175] : memref<2x16xf32, #tpu.memory_space<vmem>>, vector<2x16xf32>
    tpu.vector_store %arg7[%c0_174, %c0_175], %331 {strides = array<i32>} : memref<2x16xf32, #tpu.memory_space<vmem>>, vector<2x16xf32>,
    %c0_176 = arith.constant 0 : index
    %c0_177 = arith.constant 0 : index
    %333 = vector.load %arg9[%c0_176, %c0_177] : memref<2x16xf32, #tpu.memory_space<vmem>>, vector<2x16xf32>
    tpu.vector_store %arg9[%c0_176, %c0_177], %328 {strides = array<i32>} : memref<2x16xf32, #tpu.memory_space<vmem>>, vector<2x16xf32>,
    %334 = arith.index_cast %c5_i32 : i32 to index
    %c0_178 = arith.constant 0 : index
    %c0_179 = arith.constant 0 : index
    %335 = vector.load %arg5[%334, %c0_178, %c0_179] : memref<8x2x16xf32, #tpu.memory_space<vmem>>, vector<1x2x16xf32>
    %336 = vector.shape_cast %335 : vector<1x2x16xf32> to vector<2x16xf32>
    %337 = vector.shape_cast %331 : vector<2x16xf32> to vector<1x2x16xf32>
    tpu.vector_store %arg5[%334, %c0_178, %c0_179], %337 {strides = array<i32>} : memref<8x2x16xf32, #tpu.memory_space<vmem>>, vector<1x2x16xf32>,
    %c7_i32_180 = arith.constant 7 : i32
    %338 = arith.subi %c7_i32_180, %c5_i32 : i32
    %339 = arith.index_cast %338 : i32 to index
    %c0_181 = arith.constant 0 : index
    %c0_182 = arith.constant 0 : index
    %340 = vector.load %arg2[%339, %c0_181, %c0_182] : memref<8x2x64xf32, #tpu.memory_space<vmem>>, vector<1x2x64xf32>
    %341 = vector.shape_cast %340 : vector<1x2x64xf32> to vector<2x64xf32>
    %c0_183 = arith.constant 0 : index
    %c0_184 = arith.constant 0 : index
    %342 = vector.load %arg8[%c0_183, %c0_184] : memref<2x16xf32, #tpu.memory_space<vmem>>, vector<2x16xf32>
    %c0_185 = arith.constant 0 : index
    %c0_186 = arith.constant 0 : index
    %343 = vector.load %arg4[%c0_185, %c0_186] : memref<16x64xf32, #tpu.memory_space<vmem>>, vector<16x64xf32>
    %cst_187 = arith.constant dense<0.000000e+00> : vector<2x64xf32>
    %344 = tpu.matmul %342, %343, %cst_187 {dimension_numbers = #tpu.dot_dimension_numbers<[1], [0], [0], [1], [0, 0, 1, 1], [], []>} : vector<2x16xf32>, vector<16x64xf32>, vector<2x64xf32> -> vector<2x64xf32>
    %345 = arith.addf %341, %344 : vector<2x64xf32>
    %346 = vector.extract_strided_slice %345 {offsets = [0, 0], sizes = [2, 48], strides = [1, 1]} : vector<2x64xf32> to vector<2x48xf32>
    %347 = arith.negf %346 : vector<2x48xf32>
    %348 = math.exp %347 : vector<2x48xf32>
    %cst_188 = arith.constant 1.000000e+00 : f32
    %349 = vector.broadcast %cst_188 : f32 to vector<2x48xf32>
    %350 = arith.addf %349, %348 : vector<2x48xf32>
    %351 = arith.divf %349, %350 : vector<2x48xf32>
    %352 = vector.extract_strided_slice %345 {offsets = [0, 48], sizes = [2, 16], strides = [1, 1]} : vector<2x64xf32> to vector<2x16xf32>
    %353 = math.tanh %352 : vector<2x16xf32>
    %354 = vector.extract_strided_slice %351 {offsets = [0, 16], sizes = [2, 16], strides = [1, 1]} : vector<2x48xf32> to vector<2x16xf32>
    %c0_189 = arith.constant 0 : index
    %c0_190 = arith.constant 0 : index
    %355 = vector.load %arg10[%c0_189, %c0_190] : memref<2x16xf32, #tpu.memory_space<vmem>>, vector<2x16xf32>
    %356 = arith.mulf %354, %355 : vector<2x16xf32>
    %357 = vector.extract_strided_slice %351 {offsets = [0, 0], sizes = [2, 16], strides = [1, 1]} : vector<2x48xf32> to vector<2x16xf32>
    %358 = arith.mulf %357, %353 : vector<2x16xf32>
    %359 = arith.addf %356, %358 : vector<2x16xf32>
    %360 = vector.extract_strided_slice %351 {offsets = [0, 32], sizes = [2, 16], strides = [1, 1]} : vector<2x48xf32> to vector<2x16xf32>
    %361 = math.tanh %359 : vector<2x16xf32>
    %362 = arith.mulf %360, %361 : vector<2x16xf32>
    %c0_191 = arith.constant 0 : index
    %c0_192 = arith.constant 0 : index
    %363 = vector.load %arg8[%c0_191, %c0_192] : memref<2x16xf32, #tpu.memory_space<vmem>>, vector<2x16xf32>
    tpu.vector_store %arg8[%c0_191, %c0_192], %362 {strides = array<i32>} : memref<2x16xf32, #tpu.memory_space<vmem>>, vector<2x16xf32>,
    %c0_193 = arith.constant 0 : index
    %c0_194 = arith.constant 0 : index
    %364 = vector.load %arg10[%c0_193, %c0_194] : memref<2x16xf32, #tpu.memory_space<vmem>>, vector<2x16xf32>
    tpu.vector_store %arg10[%c0_193, %c0_194], %359 {strides = array<i32>} : memref<2x16xf32, #tpu.memory_space<vmem>>, vector<2x16xf32>,
    %365 = arith.index_cast %338 : i32 to index
    %c0_195 = arith.constant 0 : index
    %c0_196 = arith.constant 0 : index
    %366 = vector.load %arg6[%365, %c0_195, %c0_196] : memref<8x2x16xf32, #tpu.memory_space<vmem>>, vector<1x2x16xf32>
    %367 = vector.shape_cast %366 : vector<1x2x16xf32> to vector<2x16xf32>
    %368 = vector.shape_cast %362 : vector<2x16xf32> to vector<1x2x16xf32>
    tpu.vector_store %arg6[%365, %c0_195, %c0_196], %368 {strides = array<i32>} : memref<8x2x16xf32, #tpu.memory_space<vmem>>, vector<1x2x16xf32>,
    %c6_i32 = arith.constant 6 : i32
    %369 = arith.index_cast %c6_i32 : i32 to index
    %c0_197 = arith.constant 0 : index
    %c0_198 = arith.constant 0 : index
    %370 = vector.load %arg1[%369, %c0_197, %c0_198] : memref<8x2x64xf32, #tpu.memory_space<vmem>>, vector<1x2x64xf32>
    %371 = vector.shape_cast %370 : vector<1x2x64xf32> to vector<2x64xf32>
    %c0_199 = arith.constant 0 : index
    %c0_200 = arith.constant 0 : index
    %372 = vector.load %arg7[%c0_199, %c0_200] : memref<2x16xf32, #tpu.memory_space<vmem>>, vector<2x16xf32>
    %c0_201 = arith.constant 0 : index
    %c0_202 = arith.constant 0 : index
    %373 = vector.load %arg3[%c0_201, %c0_202] : memref<16x64xf32, #tpu.memory_space<vmem>>, vector<16x64xf32>
    %cst_203 = arith.constant dense<0.000000e+00> : vector<2x64xf32>
    %374 = tpu.matmul %372, %373, %cst_203 {dimension_numbers = #tpu.dot_dimension_numbers<[1], [0], [0], [1], [0, 0, 1, 1], [], []>} : vector<2x16xf32>, vector<16x64xf32>, vector<2x64xf32> -> vector<2x64xf32>
    %375 = arith.addf %371, %374 : vector<2x64xf32>
    %376 = vector.extract_strided_slice %375 {offsets = [0, 0], sizes = [2, 48], strides = [1, 1]} : vector<2x64xf32> to vector<2x48xf32>
    %377 = arith.negf %376 : vector<2x48xf32>
    %378 = math.exp %377 : vector<2x48xf32>
    %cst_204 = arith.constant 1.000000e+00 : f32
    %379 = vector.broadcast %cst_204 : f32 to vector<2x48xf32>
    %380 = arith.addf %379, %378 : vector<2x48xf32>
    %381 = arith.divf %379, %380 : vector<2x48xf32>
    %382 = vector.extract_strided_slice %375 {offsets = [0, 48], sizes = [2, 16], strides = [1, 1]} : vector<2x64xf32> to vector<2x16xf32>
    %383 = math.tanh %382 : vector<2x16xf32>
    %384 = vector.extract_strided_slice %381 {offsets = [0, 16], sizes = [2, 16], strides = [1, 1]} : vector<2x48xf32> to vector<2x16xf32>
    %c0_205 = arith.constant 0 : index
    %c0_206 = arith.constant 0 : index
    %385 = vector.load %arg9[%c0_205, %c0_206] : memref<2x16xf32, #tpu.memory_space<vmem>>, vector<2x16xf32>
    %386 = arith.mulf %384, %385 : vector<2x16xf32>
    %387 = vector.extract_strided_slice %381 {offsets = [0, 0], sizes = [2, 16], strides = [1, 1]} : vector<2x48xf32> to vector<2x16xf32>
    %388 = arith.mulf %387, %383 : vector<2x16xf32>
    %389 = arith.addf %386, %388 : vector<2x16xf32>
    %390 = vector.extract_strided_slice %381 {offsets = [0, 32], sizes = [2, 16], strides = [1, 1]} : vector<2x48xf32> to vector<2x16xf32>
    %391 = math.tanh %389 : vector<2x16xf32>
    %392 = arith.mulf %390, %391 : vector<2x16xf32>
    %c0_207 = arith.constant 0 : index
    %c0_208 = arith.constant 0 : index
    %393 = vector.load %arg7[%c0_207, %c0_208] : memref<2x16xf32, #tpu.memory_space<vmem>>, vector<2x16xf32>
    tpu.vector_store %arg7[%c0_207, %c0_208], %392 {strides = array<i32>} : memref<2x16xf32, #tpu.memory_space<vmem>>, vector<2x16xf32>,
    %c0_209 = arith.constant 0 : index
    %c0_210 = arith.constant 0 : index
    %394 = vector.load %arg9[%c0_209, %c0_210] : memref<2x16xf32, #tpu.memory_space<vmem>>, vector<2x16xf32>
    tpu.vector_store %arg9[%c0_209, %c0_210], %389 {strides = array<i32>} : memref<2x16xf32, #tpu.memory_space<vmem>>, vector<2x16xf32>,
    %395 = arith.index_cast %c6_i32 : i32 to index
    %c0_211 = arith.constant 0 : index
    %c0_212 = arith.constant 0 : index
    %396 = vector.load %arg5[%395, %c0_211, %c0_212] : memref<8x2x16xf32, #tpu.memory_space<vmem>>, vector<1x2x16xf32>
    %397 = vector.shape_cast %396 : vector<1x2x16xf32> to vector<2x16xf32>
    %398 = vector.shape_cast %392 : vector<2x16xf32> to vector<1x2x16xf32>
    tpu.vector_store %arg5[%395, %c0_211, %c0_212], %398 {strides = array<i32>} : memref<8x2x16xf32, #tpu.memory_space<vmem>>, vector<1x2x16xf32>,
    %c7_i32_213 = arith.constant 7 : i32
    %399 = arith.subi %c7_i32_213, %c6_i32 : i32
    %400 = arith.index_cast %399 : i32 to index
    %c0_214 = arith.constant 0 : index
    %c0_215 = arith.constant 0 : index
    %401 = vector.load %arg2[%400, %c0_214, %c0_215] : memref<8x2x64xf32, #tpu.memory_space<vmem>>, vector<1x2x64xf32>
    %402 = vector.shape_cast %401 : vector<1x2x64xf32> to vector<2x64xf32>
    %c0_216 = arith.constant 0 : index
    %c0_217 = arith.constant 0 : index
    %403 = vector.load %arg8[%c0_216, %c0_217] : memref<2x16xf32, #tpu.memory_space<vmem>>, vector<2x16xf32>
    %c0_218 = arith.constant 0 : index
    %c0_219 = arith.constant 0 : index
    %404 = vector.load %arg4[%c0_218, %c0_219] : memref<16x64xf32, #tpu.memory_space<vmem>>, vector<16x64xf32>
    %cst_220 = arith.constant dense<0.000000e+00> : vector<2x64xf32>
    %405 = tpu.matmul %403, %404, %cst_220 {dimension_numbers = #tpu.dot_dimension_numbers<[1], [0], [0], [1], [0, 0, 1, 1], [], []>} : vector<2x16xf32>, vector<16x64xf32>, vector<2x64xf32> -> vector<2x64xf32>
    %406 = arith.addf %402, %405 : vector<2x64xf32>
    %407 = vector.extract_strided_slice %406 {offsets = [0, 0], sizes = [2, 48], strides = [1, 1]} : vector<2x64xf32> to vector<2x48xf32>
    %408 = arith.negf %407 : vector<2x48xf32>
    %409 = math.exp %408 : vector<2x48xf32>
    %cst_221 = arith.constant 1.000000e+00 : f32
    %410 = vector.broadcast %cst_221 : f32 to vector<2x48xf32>
    %411 = arith.addf %410, %409 : vector<2x48xf32>
    %412 = arith.divf %410, %411 : vector<2x48xf32>
    %413 = vector.extract_strided_slice %406 {offsets = [0, 48], sizes = [2, 16], strides = [1, 1]} : vector<2x64xf32> to vector<2x16xf32>
    %414 = math.tanh %413 : vector<2x16xf32>
    %415 = vector.extract_strided_slice %412 {offsets = [0, 16], sizes = [2, 16], strides = [1, 1]} : vector<2x48xf32> to vector<2x16xf32>
    %c0_222 = arith.constant 0 : index
    %c0_223 = arith.constant 0 : index
    %416 = vector.load %arg10[%c0_222, %c0_223] : memref<2x16xf32, #tpu.memory_space<vmem>>, vector<2x16xf32>
    %417 = arith.mulf %415, %416 : vector<2x16xf32>
    %418 = vector.extract_strided_slice %412 {offsets = [0, 0], sizes = [2, 16], strides = [1, 1]} : vector<2x48xf32> to vector<2x16xf32>
    %419 = arith.mulf %418, %414 : vector<2x16xf32>
    %420 = arith.addf %417, %419 : vector<2x16xf32>
    %421 = vector.extract_strided_slice %412 {offsets = [0, 32], sizes = [2, 16], strides = [1, 1]} : vector<2x48xf32> to vector<2x16xf32>
    %422 = math.tanh %420 : vector<2x16xf32>
    %423 = arith.mulf %421, %422 : vector<2x16xf32>
    %c0_224 = arith.constant 0 : index
    %c0_225 = arith.constant 0 : index
    %424 = vector.load %arg8[%c0_224, %c0_225] : memref<2x16xf32, #tpu.memory_space<vmem>>, vector<2x16xf32>
    tpu.vector_store %arg8[%c0_224, %c0_225], %423 {strides = array<i32>} : memref<2x16xf32, #tpu.memory_space<vmem>>, vector<2x16xf32>,
    %c0_226 = arith.constant 0 : index
    %c0_227 = arith.constant 0 : index
    %425 = vector.load %arg10[%c0_226, %c0_227] : memref<2x16xf32, #tpu.memory_space<vmem>>, vector<2x16xf32>
    tpu.vector_store %arg10[%c0_226, %c0_227], %420 {strides = array<i32>} : memref<2x16xf32, #tpu.memory_space<vmem>>, vector<2x16xf32>,
    %426 = arith.index_cast %399 : i32 to index
    %c0_228 = arith.constant 0 : index
    %c0_229 = arith.constant 0 : index
    %427 = vector.load %arg6[%426, %c0_228, %c0_229] : memref<8x2x16xf32, #tpu.memory_space<vmem>>, vector<1x2x16xf32>
    %428 = vector.shape_cast %427 : vector<1x2x16xf32> to vector<2x16xf32>
    %429 = vector.shape_cast %423 : vector<2x16xf32> to vector<1x2x16xf32>
    tpu.vector_store %arg6[%426, %c0_228, %c0_229], %429 {strides = array<i32>} : memref<8x2x16xf32, #tpu.memory_space<vmem>>, vector<1x2x16xf32>,
    %c7_i32_230 = arith.constant 7 : i32
    %430 = arith.index_cast %c7_i32_230 : i32 to index
    %c0_231 = arith.constant 0 : index
    %c0_232 = arith.constant 0 : index
    %431 = vector.load %arg1[%430, %c0_231, %c0_232] : memref<8x2x64xf32, #tpu.memory_space<vmem>>, vector<1x2x64xf32>
    %432 = vector.shape_cast %431 : vector<1x2x64xf32> to vector<2x64xf32>
    %c0_233 = arith.constant 0 : index
    %c0_234 = arith.constant 0 : index
    %433 = vector.load %arg7[%c0_233, %c0_234] : memref<2x16xf32, #tpu.memory_space<vmem>>, vector<2x16xf32>
    %c0_235 = arith.constant 0 : index
    %c0_236 = arith.constant 0 : index
    %434 = vector.load %arg3[%c0_235, %c0_236] : memref<16x64xf32, #tpu.memory_space<vmem>>, vector<16x64xf32>
    %cst_237 = arith.constant dense<0.000000e+00> : vector<2x64xf32>
    %435 = tpu.matmul %433, %434, %cst_237 {dimension_numbers = #tpu.dot_dimension_numbers<[1], [0], [0], [1], [0, 0, 1, 1], [], []>} : vector<2x16xf32>, vector<16x64xf32>, vector<2x64xf32> -> vector<2x64xf32>
    %436 = arith.addf %432, %435 : vector<2x64xf32>
    %437 = vector.extract_strided_slice %436 {offsets = [0, 0], sizes = [2, 48], strides = [1, 1]} : vector<2x64xf32> to vector<2x48xf32>
    %438 = arith.negf %437 : vector<2x48xf32>
    %439 = math.exp %438 : vector<2x48xf32>
    %cst_238 = arith.constant 1.000000e+00 : f32
    %440 = vector.broadcast %cst_238 : f32 to vector<2x48xf32>
    %441 = arith.addf %440, %439 : vector<2x48xf32>
    %442 = arith.divf %440, %441 : vector<2x48xf32>
    %443 = vector.extract_strided_slice %436 {offsets = [0, 48], sizes = [2, 16], strides = [1, 1]} : vector<2x64xf32> to vector<2x16xf32>
    %444 = math.tanh %443 : vector<2x16xf32>
    %445 = vector.extract_strided_slice %442 {offsets = [0, 16], sizes = [2, 16], strides = [1, 1]} : vector<2x48xf32> to vector<2x16xf32>
    %c0_239 = arith.constant 0 : index
    %c0_240 = arith.constant 0 : index
    %446 = vector.load %arg9[%c0_239, %c0_240] : memref<2x16xf32, #tpu.memory_space<vmem>>, vector<2x16xf32>
    %447 = arith.mulf %445, %446 : vector<2x16xf32>
    %448 = vector.extract_strided_slice %442 {offsets = [0, 0], sizes = [2, 16], strides = [1, 1]} : vector<2x48xf32> to vector<2x16xf32>
    %449 = arith.mulf %448, %444 : vector<2x16xf32>
    %450 = arith.addf %447, %449 : vector<2x16xf32>
    %451 = vector.extract_strided_slice %442 {offsets = [0, 32], sizes = [2, 16], strides = [1, 1]} : vector<2x48xf32> to vector<2x16xf32>
    %452 = math.tanh %450 : vector<2x16xf32>
    %453 = arith.mulf %451, %452 : vector<2x16xf32>
    %c0_241 = arith.constant 0 : index
    %c0_242 = arith.constant 0 : index
    %454 = vector.load %arg7[%c0_241, %c0_242] : memref<2x16xf32, #tpu.memory_space<vmem>>, vector<2x16xf32>
    tpu.vector_store %arg7[%c0_241, %c0_242], %453 {strides = array<i32>} : memref<2x16xf32, #tpu.memory_space<vmem>>, vector<2x16xf32>,
    %c0_243 = arith.constant 0 : index
    %c0_244 = arith.constant 0 : index
    %455 = vector.load %arg9[%c0_243, %c0_244] : memref<2x16xf32, #tpu.memory_space<vmem>>, vector<2x16xf32>
    tpu.vector_store %arg9[%c0_243, %c0_244], %450 {strides = array<i32>} : memref<2x16xf32, #tpu.memory_space<vmem>>, vector<2x16xf32>,
    %456 = arith.index_cast %c7_i32_230 : i32 to index
    %c0_245 = arith.constant 0 : index
    %c0_246 = arith.constant 0 : index
    %457 = vector.load %arg5[%456, %c0_245, %c0_246] : memref<8x2x16xf32, #tpu.memory_space<vmem>>, vector<1x2x16xf32>
    %458 = vector.shape_cast %457 : vector<1x2x16xf32> to vector<2x16xf32>
    %459 = vector.shape_cast %453 : vector<2x16xf32> to vector<1x2x16xf32>
    tpu.vector_store %arg5[%456, %c0_245, %c0_246], %459 {strides = array<i32>} : memref<8x2x16xf32, #tpu.memory_space<vmem>>, vector<1x2x16xf32>,
    %c7_i32_247 = arith.constant 7 : i32
    %460 = arith.subi %c7_i32_247, %c7_i32_230 : i32
    %461 = arith.index_cast %460 : i32 to index
    %c0_248 = arith.constant 0 : index
    %c0_249 = arith.constant 0 : index
    %462 = vector.load %arg2[%461, %c0_248, %c0_249] : memref<8x2x64xf32, #tpu.memory_space<vmem>>, vector<1x2x64xf32>
    %463 = vector.shape_cast %462 : vector<1x2x64xf32> to vector<2x64xf32>
    %c0_250 = arith.constant 0 : index
    %c0_251 = arith.constant 0 : index
    %464 = vector.load %arg8[%c0_250, %c0_251] : memref<2x16xf32, #tpu.memory_space<vmem>>, vector<2x16xf32>
    %c0_252 = arith.constant 0 : index
    %c0_253 = arith.constant 0 : index
    %465 = vector.load %arg4[%c0_252, %c0_253] : memref<16x64xf32, #tpu.memory_space<vmem>>, vector<16x64xf32>
    %cst_254 = arith.constant dense<0.000000e+00> : vector<2x64xf32>
    %466 = tpu.matmul %464, %465, %cst_254 {dimension_numbers = #tpu.dot_dimension_numbers<[1], [0], [0], [1], [0, 0, 1, 1], [], []>} : vector<2x16xf32>, vector<16x64xf32>, vector<2x64xf32> -> vector<2x64xf32>
    %467 = arith.addf %463, %466 : vector<2x64xf32>
    %468 = vector.extract_strided_slice %467 {offsets = [0, 0], sizes = [2, 48], strides = [1, 1]} : vector<2x64xf32> to vector<2x48xf32>
    %469 = arith.negf %468 : vector<2x48xf32>
    %470 = math.exp %469 : vector<2x48xf32>
    %cst_255 = arith.constant 1.000000e+00 : f32
    %471 = vector.broadcast %cst_255 : f32 to vector<2x48xf32>
    %472 = arith.addf %471, %470 : vector<2x48xf32>
    %473 = arith.divf %471, %472 : vector<2x48xf32>
    %474 = vector.extract_strided_slice %467 {offsets = [0, 48], sizes = [2, 16], strides = [1, 1]} : vector<2x64xf32> to vector<2x16xf32>
    %475 = math.tanh %474 : vector<2x16xf32>
    %476 = vector.extract_strided_slice %473 {offsets = [0, 16], sizes = [2, 16], strides = [1, 1]} : vector<2x48xf32> to vector<2x16xf32>
    %c0_256 = arith.constant 0 : index
    %c0_257 = arith.constant 0 : index
    %477 = vector.load %arg10[%c0_256, %c0_257] : memref<2x16xf32, #tpu.memory_space<vmem>>, vector<2x16xf32>
    %478 = arith.mulf %476, %477 : vector<2x16xf32>
    %479 = vector.extract_strided_slice %473 {offsets = [0, 0], sizes = [2, 16], strides = [1, 1]} : vector<2x48xf32> to vector<2x16xf32>
    %480 = arith.mulf %479, %475 : vector<2x16xf32>
    %481 = arith.addf %478, %480 : vector<2x16xf32>
    %482 = vector.extract_strided_slice %473 {offsets = [0, 32], sizes = [2, 16], strides = [1, 1]} : vector<2x48xf32> to vector<2x16xf32>
    %483 = math.tanh %481 : vector<2x16xf32>
    %484 = arith.mulf %482, %483 : vector<2x16xf32>
    %c0_258 = arith.constant 0 : index
    %c0_259 = arith.constant 0 : index
    %485 = vector.load %arg8[%c0_258, %c0_259] : memref<2x16xf32, #tpu.memory_space<vmem>>, vector<2x16xf32>
    tpu.vector_store %arg8[%c0_258, %c0_259], %484 {strides = array<i32>} : memref<2x16xf32, #tpu.memory_space<vmem>>, vector<2x16xf32>,
    %c0_260 = arith.constant 0 : index
    %c0_261 = arith.constant 0 : index
    %486 = vector.load %arg10[%c0_260, %c0_261] : memref<2x16xf32, #tpu.memory_space<vmem>>, vector<2x16xf32>
    tpu.vector_store %arg10[%c0_260, %c0_261], %481 {strides = array<i32>} : memref<2x16xf32, #tpu.memory_space<vmem>>, vector<2x16xf32>,
    %487 = arith.index_cast %460 : i32 to index
    %c0_262 = arith.constant 0 : index
    %c0_263 = arith.constant 0 : index
    %488 = vector.load %arg6[%487, %c0_262, %c0_263] : memref<8x2x16xf32, #tpu.memory_space<vmem>>, vector<1x2x16xf32>
    %489 = vector.shape_cast %488 : vector<1x2x16xf32> to vector<2x16xf32>
    %490 = vector.shape_cast %484 : vector<2x16xf32> to vector<1x2x16xf32>
    tpu.vector_store %arg6[%487, %c0_262, %c0_263], %490 {strides = array<i32>} : memref<8x2x16xf32, #tpu.memory_space<vmem>>, vector<1x2x16xf32>,
    %c8_i32 = arith.constant 8 : i32
    return
  }
  func.func @transform_0(%arg0: i32) -> (i32, i32, i32) {
    %c0_i32 = arith.constant 0 : i32
    %c0_i32_0 = arith.constant 0 : i32
    %c0_i32_1 = arith.constant 0 : i32
    return %arg0, %c0_i32, %c0_i32_0 : i32, i32, i32
  }
  func.func @transform_1(%arg0: i32) -> (i32, i32, i32) {
    %c0_i32 = arith.constant 0 : i32
    %0 = arith.subi %c0_i32, %arg0 : i32
    %c0_i32_0 = arith.constant 0 : i32
    %c0_i32_1 = arith.constant 0 : i32
    %c0_i32_2 = arith.constant 0 : i32
    return %0, %c0_i32_0, %c0_i32_1 : i32, i32, i32
  }
  func.func @transform_2(%arg0: i32) -> (i32, i32) {
    %c0_i32 = arith.constant 0 : i32
    %c0_i32_0 = arith.constant 0 : i32
    %c0_i32_1 = arith.constant 0 : i32
    return %c0_i32, %c0_i32_0 : i32, i32
  }
  func.func @transform_3(%arg0: i32) -> (i32, i32) {
    %c0_i32 = arith.constant 0 : i32
    %c0_i32_0 = arith.constant 0 : i32
    %c0_i32_1 = arith.constant 0 : i32
    return %c0_i32, %c0_i32_0 : i32, i32
  }
  func.func @transform_4(%arg0: i32) -> (i32, i32, i32) {
    %c0_i32 = arith.constant 0 : i32
    %c0_i32_0 = arith.constant 0 : i32
    %c0_i32_1 = arith.constant 0 : i32
    return %arg0, %c0_i32, %c0_i32_0 : i32, i32, i32
  }
  func.func @transform_5(%arg0: i32) -> (i32, i32, i32) {
    %c0_i32 = arith.constant 0 : i32
    %0 = arith.subi %c0_i32, %arg0 : i32
    %c0_i32_0 = arith.constant 0 : i32
    %c0_i32_1 = arith.constant 0 : i32
    %c0_i32_2 = arith.constant 0 : i32
    return %0, %c0_i32_0, %c0_i32_1 : i32, i32, i32
  }
}

</mosaic_0001>

<llo_original>
// kernel: custom_model_forward.4
$region0: #{custom_model_forward.4}
  #allocation0 [shape = 'u32[]', space=smem, size = 0x4, offset = 0x4, fixed_abs, tag = 'smem constant byte address 0x4 - core index']
  #allocation1 [shape = 'u32[144,128]{1,0:T(1,128)}', space=vmem, size = 0x12000, scoped, tag = 'internal scratch']
  %s0 = inlined_call_operand.vmem [shape: f32[16,32], index: 0, kind: input, shape index: {}]
  %s1 = inlined_call_operand.vmem [shape: f32[32,128], index: 1, kind: input, shape index: {}]
  %s2 = inlined_call_operand.vmem [shape: f32[1,128], index: 2, kind: input, shape index: {}]
  %s3 = inlined_call_operand.vmem [shape: f32[16,64], index: 3, kind: output, shape index: {0}]
  %s4 = inlined_call_operand.vmem [shape: f32[16,64], index: 4, kind: output, shape index: {1}]
  %5 = xla_tuple %s3, %s4
  %s6 = sld [smem:[#allocation0]]
  $region30: #{custom_model_forward.4} parent=0
    _
  %s8 = ssub.s32 1, %s6
  %s9 = scalar_select 0, %s8, %s6
  // Predicated region
  $region2: #{custom_model_forward.4} parent=0 // pred_check
    _
  $region3: #{custom_model_forward.4} parent=0 // pred_check_branch
    %11 = sbr.rel (0) target = $region5
  $region4: #{custom_model_forward.4} parent=0 // pred_region
    _
  $region5: #{custom_model_forward.4} parent=0 // pred_fallthru
    _
  // Predicated region
  $region6: #{custom_model_forward.4} parent=0 // pred_check
    _
  $region7: #{custom_model_forward.4} parent=0 // pred_check_branch
    %13 = sbr.rel (0) target = $region9
  $region8: #{custom_model_forward.4} parent=0 // pred_region
    _
  $region9: #{custom_model_forward.4} parent=0 // pred_fallthru
    _
  // Predicated region
  $region10: #{custom_model_forward.4} parent=0 // pred_check
    _
  $region11: #{custom_model_forward.4} parent=0 // pred_check_branch
    %15 = sbr.rel (0) target = $region13
  $region12: #{custom_model_forward.4} parent=0 // pred_region
    _
  $region13: #{custom_model_forward.4} parent=0 // pred_fallthru
    _
  %v16 = vld [vmem:[%s2] sm:$0x1]
  %v17 = vld [vmem:[%s0] sm:$0xff]
  %v18 = vld [vmem:[%s0 + $0x8] sm:$0xff]
  %v19 = vld [vmem:[%s1] sm:$0xff]
  %v20 = vld [vmem:[%s1 + $0x8] sm:$0xff]
  %v21 = vld [vmem:[%s1 + $0x10] sm:$0xff]
  %v22 = vld [vmem:[%s1 + $0x18] sm:$0xff]
  %vm23 = vcmask 261120
  %v25 = vsel %vm23, %v17, 0
  %v28 = vsel %vm23, %v18, 0
  %30 = vmatprep.subr.mxu0 0.0
  %31 = vmatpush1.msra.mxu0 %v19
  %32 = vmatprep.subr.mxu0 0.0
  %33 = vmatpush1.msra.mxu0 %v20
  %34 = vmatprep.subr.mxu0 0.0
  %35 = vmatpush1.msra.mxu0 %v21
  %36 = vmatprep.subr.mxu0 0.0
  %37 = vmatpush1.msra.mxu0 %v22
  %38 = vmatprep.subr.mxu0 0.0
  %39 = vmatpush1.msra.mxu0 0.0
  %40 = vmatprep.subr.mxu0 0.0
  %41 = vmatpush1.msra.mxu0 0.0
  %42 = vmatprep.subr.mxu0 0.0
  %43 = vmatpush1.msra.mxu0 0.0
  %44 = vmatprep.subr.mxu0 0.0
  %45 = vmatpush1.msra.mxu0 0.0
  %46 = vmatprep.subr.mxu0 0.0
  %47 = vmatpush1.msra.mxu0 0.0
  %48 = vmatprep.subr.mxu0 0.0
  %49 = vmatpush1.msra.mxu0 0.0
  %50 = vmatprep.subr.mxu0 0.0
  %51 = vmatpush1.msra.mxu0 0.0
  %52 = vmatprep.subr.mxu0 0.0
  %53 = vmatpush1.msra.mxu0 0.0
  %54 = vmatprep.subr.mxu0 0.0
  %55 = vmatpush1.msra.mxu0 0.0
  %56 = vmatprep.subr.mxu0 0.0
  %57 = vmatpush1.msra.mxu0 0.0
  %58 = vmatprep.subr.mxu0 0.0
  %59 = vmatpush1.msra.mxu0 0.0
  %60 = vmatprep.subr.mxu0 0.0
  %61 = vmatpush1.msra.mxu0 0.0
  %62 = vmatprep.subr.mxu0 0.0
  %63 = vmatpush1.msra.mxu0 0.0
  %64 = vmatprep.subr.mxu0 0.0
  %65 = vmatpush1.msra.mxu0 0.0
  %66 = vmatprep.subr.mxu0 0.0
  %67 = vmatpush1.msra.mxu0 0.0
  %68 = vmatprep.subr.mxu0 0.0
  %69 = vmatpush1.msra.mxu0 0.0
  %70 = vmatprep.subr.mxu0 0.0
  %71 = vmatpush1.msra.mxu0 0.0
  %72 = vmatprep.subr.mxu0 0.0
  %73 = vmatpush1.msra.mxu0 0.0
  %74 = vmatprep.subr.mxu0 0.0
  %75 = vmatpush1.msra.mxu0 0.0
  %76 = vmatprep.subr.mxu0 0.0
  %77 = vmatpush1.msra.mxu0 0.0
  %78 = vmatprep.subr.mxu0 0.0
  %79 = vmatpush1.msra.mxu0 0.0
  %80 = vmatprep.subr.mxu0 0.0
  %81 = vmatpush1.msra.mxu0 0.0
  %82 = vmatprep.subr.mxu0 0.0
  %83 = vmatpush1.msra.mxu0 0.0
  %84 = vmatprep.subr.mxu0 0.0
  %85 = vmatpush1.msra.mxu0 0.0
  %86 = vmatprep.subr.mxu0 0.0
  %87 = vmatpush1.msra.mxu0 0.0
  %88 = vmatprep.subr.mxu0 0.0
  %89 = vmatpush1.msra.mxu0 0.0
  %90 = vmatprep.subr.mxu0 0.0
  %91 = vmatpush1.msra.mxu0 0.0
  %92 = vmatprep.subr.mxu0 0.0
  %93 = vmatpush1.msra.mxu0 0.0
  %94 = vmatprep.mubr.f32.mxu0 0.0
  %95 = vmatmul.mubr.f32.gmra.mrb[0].mxu0 %v25
  %v96 = vpop.f32.mrb[0].mxu0
  %v97 = vadd.f32 0.0, %v96
  %v98 = vpop.f32.mrb[0].mxu0
  %99 = vmatprep.mubr.f32.mxu0 0.0
  %100 = vmatmul.mubr.f32.gmra.mrb[0].mxu0 %v28
  %v101 = vpop.f32.mrb[0].mxu0
  %v102 = vadd.f32 0.0, %v101
  %v103 = vpop.f32.mrb[0].mxu0
  %104 = vdwg.mxu0
  %v106 = vlaneseq
  %v107 = vshrl.u32 %v106, 7
  %v108 = vsub.s32 0, %v107
  %v109 = vrot.slane %v16, %v108
  %v111 = vadd.f32 %v109, %v97
  %v112 = vadd.f32 %v109, %v102
  %vm113 = vcmask 523264
  %114 = vst.msk [vmem:[%s3] sm:$0xff] %vm113, %v111
  %115 = vst.msk [vmem:[%s3 + $0x8] sm:$0xff] %vm113, %v112
  %118 = vrot.lane.b32.xlu0 %v111, 64
  %v119 = vpop.permute.xlu0 %118
  %120 = vrot.lane.b32.xlu0 %v112, 64
  %v121 = vpop.permute.xlu0 %120
  %124 = vst.msk [vmem:[%s4] sm:$0xff] %vm113, %v119
  %125 = vst.msk [vmem:[%s4 + $0x8] sm:$0xff] %vm113, %v121
  // Predicated region
  $region14: #{custom_model_forward.4} parent=0 // pred_check
    _
  $region15: #{custom_model_forward.4} parent=0 // pred_check_branch
    %127 = sbr.rel (0) target = $region17
  $region16: #{custom_model_forward.4} parent=0 // pred_region
    _
  $region17: #{custom_model_forward.4} parent=0 // pred_fallthru
    _
  // Predicated region
  $region18: #{custom_model_forward.4} parent=0 // pred_check
    _
  $region19: #{custom_model_forward.4} parent=0 // pred_check_branch
    %129 = sbr.rel (0) target = $region21
  $region20: #{custom_model_forward.4} parent=0 // pred_region
    _
  $region21: #{custom_model_forward.4} parent=0 // pred_fallthru
    _
  // Predicated region
  $region22: #{custom_model_forward.4} parent=0 // pred_check
    _
  $region23: #{custom_model_forward.4} parent=0 // pred_check_branch
    %131 = sbr.rel (0) target = $region25
  $region24: #{custom_model_forward.4} parent=0 // pred_region
    _
  $region25: #{custom_model_forward.4} parent=0 // pred_fallthru
    _
  // Predicated region
  $region26: #{custom_model_forward.4} parent=0 // pred_check
    _
  $region27: #{custom_model_forward.4} parent=0 // pred_check_branch
    %133 = sbr.rel (0) target = $region29
  $region28: #{custom_model_forward.4} parent=0 // pred_region
    _
  $region29: #{custom_model_forward.4} parent=0 // pred_fallthru
    _

// kernel: custom_model_forward.6
$region0: #{custom_model_forward.6}
  #allocation0 [shape = 'u32[]', space=smem, size = 0x4, offset = 0x4, fixed_abs, tag = 'smem constant byte address 0x4 - core index']
  #allocation1 [shape = 'u32[144,128]{1,0:T(1,128)}', space=vmem, size = 0x12000, scoped, tag = 'internal scratch']
  %s0 = inlined_call_operand.vmem [shape: f32[16,16], index: 0, kind: input, shape index: {}]
  %s1 = inlined_call_operand.vmem [shape: f32[16,16], index: 1, kind: input, shape index: {}]
  %s2 = inlined_call_operand.vmem [shape: f32[16,128], index: 2, kind: input, shape index: {}]
  %s3 = inlined_call_operand.vmem [shape: f32[16,128], index: 3, kind: input, shape index: {}]
  %s4 = inlined_call_operand.vmem [shape: f32[1,128], index: 4, kind: input, shape index: {}]
  %s5 = inlined_call_operand.vmem [shape: f32[16,64], index: 5, kind: output, shape index: {0}]
  %s6 = inlined_call_operand.vmem [shape: f32[16,64], index: 6, kind: output, shape index: {1}]
  %7 = xla_tuple %s5, %s6
  %s8 = sld [smem:[#allocation0]]
  $region38: #{custom_model_forward.6} parent=0
    _
  %s10 = ssub.s32 1, %s8
  %s11 = scalar_select 0, %s10, %s8
  // Predicated region
  $region2: #{custom_model_forward.6} parent=0 // pred_check
    _
  $region3: #{custom_model_forward.6} parent=0 // pred_check_branch
    %13 = sbr.rel (0) target = $region5
  $region4: #{custom_model_forward.6} parent=0 // pred_region
    _
  $region5: #{custom_model_forward.6} parent=0 // pred_fallthru
    _
  // Predicated region
  $region6: #{custom_model_forward.6} parent=0 // pred_check
    _
  $region7: #{custom_model_forward.6} parent=0 // pred_check_branch
    %15 = sbr.rel (0) target = $region9
  $region8: #{custom_model_forward.6} parent=0 // pred_region
    _
  $region9: #{custom_model_forward.6} parent=0 // pred_fallthru
    _
  // Predicated region
  $region10: #{custom_model_forward.6} parent=0 // pred_check
    _
  $region11: #{custom_model_forward.6} parent=0 // pred_check_branch
    %17 = sbr.rel (0) target = $region13
  $region12: #{custom_model_forward.6} parent=0 // pred_region
    _
  $region13: #{custom_model_forward.6} parent=0 // pred_fallthru
    _
  // Predicated region
  $region14: #{custom_model_forward.6} parent=0 // pred_check
    _
  $region15: #{custom_model_forward.6} parent=0 // pred_check_branch
    %19 = sbr.rel (0) target = $region17
  $region16: #{custom_model_forward.6} parent=0 // pred_region
    _
  $region17: #{custom_model_forward.6} parent=0 // pred_fallthru
    _
  // Predicated region
  $region18: #{custom_model_forward.6} parent=0 // pred_check
    _
  $region19: #{custom_model_forward.6} parent=0 // pred_check_branch
    %21 = sbr.rel (0) target = $region21
  $region20: #{custom_model_forward.6} parent=0 // pred_region
    _
  $region21: #{custom_model_forward.6} parent=0 // pred_fallthru
    _
  %v22 = vld [vmem:[%s4] sm:$0x1]
  %v23 = vld [vmem:[%s0] sm:$0xff]
  %v24 = vld [vmem:[%s0 + $0x8] sm:$0xff]
  %v25 = vld [vmem:[%s2] sm:$0xff]
  %v26 = vld [vmem:[%s2 + $0x8] sm:$0xff]
  %vm27 = vcmask 130048
  %v29 = vsel %vm27, %v23, 0
  %v32 = vsel %vm27, %v24, 0
  %34 = vmatprep.subr.mxu0 0.0
  %35 = vmatpush1.msra.mxu0 %v25
  %36 = vmatprep.subr.mxu0 0.0
  %37 = vmatpush1.msra.mxu0 %v26
  %38 = vmatprep.subr.mxu0 0.0
  %39 = vmatpush1.msra.mxu0 0.0
  %40 = vmatprep.subr.mxu0 0.0
  %41 = vmatpush1.msra.mxu0 0.0
  %42 = vmatprep.subr.mxu0 0.0
  %43 = vmatpush1.msra.mxu0 0.0
  %44 = vmatprep.subr.mxu0 0.0
  %45 = vmatpush1.msra.mxu0 0.0
  %46 = vmatprep.subr.mxu0 0.0
  %47 = vmatpush1.msra.mxu0 0.0
  %48 = vmatprep.subr.mxu0 0.0
  %49 = vmatpush1.msra.mxu0 0.0
  %50 = vmatprep.subr.mxu0 0.0
  %51 = vmatpush1.msra.mxu0 0.0
  %52 = vmatprep.subr.mxu0 0.0
  %53 = vmatpush1.msra.mxu0 0.0
  %54 = vmatprep.subr.mxu0 0.0
  %55 = vmatpush1.msra.mxu0 0.0
  %56 = vmatprep.subr.mxu0 0.0
  %57 = vmatpush1.msra.mxu0 0.0
  %58 = vmatprep.subr.mxu0 0.0
  %59 = vmatpush1.msra.mxu0 0.0
  %60 = vmatprep.subr.mxu0 0.0
  %61 = vmatpush1.msra.mxu0 0.0
  %62 = vmatprep.subr.mxu0 0.0
  %63 = vmatpush1.msra.mxu0 0.0
  %64 = vmatprep.subr.mxu0 0.0
  %65 = vmatpush1.msra.mxu0 0.0
  %66 = vmatprep.subr.mxu0 0.0
  %67 = vmatpush1.msra.mxu0 0.0
  %68 = vmatprep.subr.mxu0 0.0
  %69 = vmatpush1.msra.mxu0 0.0
  %70 = vmatprep.subr.mxu0 0.0
  %71 = vmatpush1.msra.mxu0 0.0
  %72 = vmatprep.subr.mxu0 0.0
  %73 = vmatpush1.msra.mxu0 0.0
  %74 = vmatprep.subr.mxu0 0.0
  %75 = vmatpush1.msra.mxu0 0.0
  %76 = vmatprep.subr.mxu0 0.0
  %77 = vmatpush1.msra.mxu0 0.0
  %78 = vmatprep.subr.mxu0 0.0
  %79 = vmatpush1.msra.mxu0 0.0
  %80 = vmatprep.subr.mxu0 0.0
  %81 = vmatpush1.msra.mxu0 0.0
  %82 = vmatprep.subr.mxu0 0.0
  %83 = vmatpush1.msra.mxu0 0.0
  %84 = vmatprep.subr.mxu0 0.0
  %85 = vmatpush1.msra.mxu0 0.0
  %86 = vmatprep.subr.mxu0 0.0
  %87 = vmatpush1.msra.mxu0 0.0
  %88 = vmatprep.subr.mxu0 0.0
  %89 = vmatpush1.msra.mxu0 0.0
  %90 = vmatprep.subr.mxu0 0.0
  %91 = vmatpush1.msra.mxu0 0.0
  %92 = vmatprep.subr.mxu0 0.0
  %93 = vmatpush1.msra.mxu0 0.0
  %94 = vmatprep.subr.mxu0 0.0
  %95 = vmatpush1.msra.mxu0 0.0
  %96 = vmatprep.subr.mxu0 0.0
  %97 = vmatpush1.msra.mxu0 0.0
  %98 = vmatprep.mubr.f32.mxu0 0.0
  %99 = vmatmul.mubr.f32.gmra.mrb[0].mxu0 %v29
  %v100 = vpop.f32.mrb[0].mxu0
  %v101 = vadd.f32 0.0, %v100
  %v102 = vpop.f32.mrb[0].mxu0
  %103 = vmatprep.mubr.f32.mxu0 0.0
  %104 = vmatmul.mubr.f32.gmra.mrb[0].mxu0 %v32
  %v105 = vpop.f32.mrb[0].mxu0
  %v106 = vadd.f32 0.0, %v105
  %v107 = vpop.f32.mrb[0].mxu0
  %108 = vdwg.mxu0
  %v110 = vlaneseq
  %v111 = vshrl.u32 %v110, 7
  %v112 = vsub.s32 0, %v111
  %v113 = vrot.slane %v22, %v112
  %v115 = vadd.f32 %v113, %v101
  %v116 = vadd.f32 %v113, %v106
  %v117 = vld [vmem:[%s1] sm:$0xff]
  %v118 = vld [vmem:[%s1 + $0x8] sm:$0xff]
  %v119 = vld [vmem:[%s3] sm:$0xff]
  %v120 = vld [vmem:[%s3 + $0x8] sm:$0xff]
  %v122 = vsel %vm27, %v117, 0
  %v125 = vsel %vm27, %v118, 0
  %127 = vmatprep.subr.mxu0 0.0
  %128 = vmatpush1.msra.mxu0 %v119
  %129 = vmatprep.subr.mxu0 0.0
  %130 = vmatpush1.msra.mxu0 %v120
  %131 = vmatprep.subr.mxu0 0.0
  %132 = vmatpush1.msra.mxu0 0.0
  %133 = vmatprep.subr.mxu0 0.0
  %134 = vmatpush1.msra.mxu0 0.0
  %135 = vmatprep.subr.mxu0 0.0
  %136 = vmatpush1.msra.mxu0 0.0
  %137 = vmatprep.subr.mxu0 0.0
  %138 = vmatpush1.msra.mxu0 0.0
  %139 = vmatprep.subr.mxu0 0.0
  %140 = vmatpush1.msra.mxu0 0.0
  %141 = vmatprep.subr.mxu0 0.0
  %142 = vmatpush1.msra.mxu0 0.0
  %143 = vmatprep.subr.mxu0 0.0
  %144 = vmatpush1.msra.mxu0 0.0
  %145 = vmatprep.subr.mxu0 0.0
  %146 = vmatpush1.msra.mxu0 0.0
  %147 = vmatprep.subr.mxu0 0.0
  %148 = vmatpush1.msra.mxu0 0.0
  %149 = vmatprep.subr.mxu0 0.0
  %150 = vmatpush1.msra.mxu0 0.0
  %151 = vmatprep.subr.mxu0 0.0
  %152 = vmatpush1.msra.mxu0 0.0
  %153 = vmatprep.subr.mxu0 0.0
  %154 = vmatpush1.msra.mxu0 0.0
  %155 = vmatprep.subr.mxu0 0.0
  %156 = vmatpush1.msra.mxu0 0.0
  %157 = vmatprep.subr.mxu0 0.0
  %158 = vmatpush1.msra.mxu0 0.0
  %159 = vmatprep.subr.mxu0 0.0
  %160 = vmatpush1.msra.mxu0 0.0
  %161 = vmatprep.subr.mxu0 0.0
  %162 = vmatpush1.msra.mxu0 0.0
  %163 = vmatprep.subr.mxu0 0.0
  %164 = vmatpush1.msra.mxu0 0.0
  %165 = vmatprep.subr.mxu0 0.0
  %166 = vmatpush1.msra.mxu0 0.0
  %167 = vmatprep.subr.mxu0 0.0
  %168 = vmatpush1.msra.mxu0 0.0
  %169 = vmatprep.subr.mxu0 0.0
  %170 = vmatpush1.msra.mxu0 0.0
  %171 = vmatprep.subr.mxu0 0.0
  %172 = vmatpush1.msra.mxu0 0.0
  %173 = vmatprep.subr.mxu0 0.0
  %174 = vmatpush1.msra.mxu0 0.0
  %175 = vmatprep.subr.mxu0 0.0
  %176 = vmatpush1.msra.mxu0 0.0
  %177 = vmatprep.subr.mxu0 0.0
  %178 = vmatpush1.msra.mxu0 0.0
  %179 = vmatprep.subr.mxu0 0.0
  %180 = vmatpush1.msra.mxu0 0.0
  %181 = vmatprep.subr.mxu0 0.0
  %182 = vmatpush1.msra.mxu0 0.0
  %183 = vmatprep.subr.mxu0 0.0
  %184 = vmatpush1.msra.mxu0 0.0
  %185 = vmatprep.subr.mxu0 0.0
  %186 = vmatpush1.msra.mxu0 0.0
  %187 = vmatprep.subr.mxu0 0.0
  %188 = vmatpush1.msra.mxu0 0.0
  %189 = vmatprep.subr.mxu0 0.0
  %190 = vmatpush1.msra.mxu0 0.0
  %191 = vmatprep.mubr.f32.mxu0 0.0
  %192 = vmatmul.mubr.f32.gmra.mrb[0].mxu0 %v122
  %v193 = vpop.f32.mrb[0].mxu0
  %v194 = vadd.f32 0.0, %v193
  %v195 = vpop.f32.mrb[0].mxu0
  %196 = vmatprep.mubr.f32.mxu0 0.0
  %197 = vmatmul.mubr.f32.gmra.mrb[0].mxu0 %v125
  %v198 = vpop.f32.mrb[0].mxu0
  %v199 = vadd.f32 0.0, %v198
  %v200 = vpop.f32.mrb[0].mxu0
  %201 = vdwg.mxu0
  %v202 = vadd.f32 %v115, %v194
  %v203 = vadd.f32 %v116, %v199
  %vm204 = vcmask 523264
  %205 = vst.msk [vmem:[%s5] sm:$0xff] %vm204, %v202
  %206 = vst.msk [vmem:[%s5 + $0x8] sm:$0xff] %vm204, %v203
  %209 = vrot.lane.b32.xlu0 %v202, 64
  %v210 = vpop.permute.xlu0 %209
  %211 = vrot.lane.b32.xlu0 %v203, 64
  %v212 = vpop.permute.xlu0 %211
  %215 = vst.msk [vmem:[%s6] sm:$0xff] %vm204, %v210
  %216 = vst.msk [vmem:[%s6 + $0x8] sm:$0xff] %vm204, %v212
  // Predicated region
  $region22: #{custom_model_forward.6} parent=0 // pred_check
    _
  $region23: #{custom_model_forward.6} parent=0 // pred_check_branch
    %218 = sbr.rel (0) target = $region25
  $region24: #{custom_model_forward.6} parent=0 // pred_region
    _
  $region25: #{custom_model_forward.6} parent=0 // pred_fallthru
    _
  // Predicated region
  $region26: #{custom_model_forward.6} parent=0 // pred_check
    _
  $region27: #{custom_model_forward.6} parent=0 // pred_check_branch
    %220 = sbr.rel (0) target = $region29
  $region28: #{custom_model_forward.6} parent=0 // pred_region
    _
  $region29: #{custom_model_forward.6} parent=0 // pred_fallthru
    _
  // Predicated region
  $region30: #{custom_model_forward.6} parent=0 // pred_check
    _
  $region31: #{custom_model_forward.6} parent=0 // pred_check_branch
    %222 = sbr.rel (0) target = $region33
  $region32: #{custom_model_forward.6} parent=0 // pred_region
    _
  $region33: #{custom_model_forward.6} parent=0 // pred_fallthru
    _
  // Predicated region
  $region34: #{custom_model_forward.6} parent=0 // pred_check
    _
  $region35: #{custom_model_forward.6} parent=0 // pred_check_branch
    %224 = sbr.rel (0) target = $region37
  $region36: #{custom_model_forward.6} parent=0 // pred_region
    _
  $region37: #{custom_model_forward.6} parent=0 // pred_fallthru
    _

// kernel: custom_model_forward.5
$region0: #{custom_model_forward.5}
  #allocation0 [shape = 'u32[]', space=smem, size = 0x4, offset = 0x4, fixed_abs, tag = 'smem constant byte address 0x4 - core index']
  #allocation1 [shape = 'u32[144,128]{1,0:T(1,128)}', space=vmem, size = 0x12000, scoped, tag = 'internal scratch']
  #allocation2 [shape = 'f32[2,16]{1,0:T(2,128)}', space=vmem, size = 0x400, scoped, tag = 'scratch operand']
  #allocation3 [shape = 'f32[2,16]{1,0:T(2,128)}', space=vmem, size = 0x400, scoped, tag = 'scratch operand']
  #allocation4 [shape = 'f32[2,16]{1,0:T(2,128)}', space=vmem, size = 0x400, scoped, tag = 'scratch operand']
  #allocation5 [shape = 'f32[2,16]{1,0:T(2,128)}', space=vmem, size = 0x400, scoped, tag = 'scratch operand']
  %s0 = inlined_call_operand.vmem [shape: f32[8,2,64], index: 0, kind: input, shape index: {}]
  %s1 = inlined_call_operand.vmem [shape: f32[8,2,64], index: 1, kind: input, shape index: {}]
  %s2 = inlined_call_operand.vmem [shape: f32[16,64], index: 2, kind: input, shape index: {}]
  %s3 = inlined_call_operand.vmem [shape: f32[16,64], index: 3, kind: input, shape index: {}]
  %s4 = inlined_call_operand.vmem [shape: f32[8,2,16], index: 4, kind: output, shape index: {0}]
  %s5 = inlined_call_operand.vmem [shape: f32[8,2,16], index: 5, kind: output, shape index: {1}]
  %6 = xla_tuple %s4, %s5
  %s7 = sld [smem:[#allocation0]]
  $region38: #{custom_model_forward.5} parent=0
    _
  %s9 = ssub.s32 1, %s7
  %s10 = scalar_select 0, %s9, %s7
  // Predicated region
  $region2: #{custom_model_forward.5} parent=0 // pred_check
    _
  $region3: #{custom_model_forward.5} parent=0 // pred_check_branch
    %12 = sbr.rel (0) target = $region5
  $region4: #{custom_model_forward.5} parent=0 // pred_region
    _
  $region5: #{custom_model_forward.5} parent=0 // pred_fallthru
    _
  // Predicated region
  $region6: #{custom_model_forward.5} parent=0 // pred_check
    _
  $region7: #{custom_model_forward.5} parent=0 // pred_check_branch
    %14 = sbr.rel (0) target = $region9
  $region8: #{custom_model_forward.5} parent=0 // pred_region
    %s15 = ssub.s32 0, 0
    %s16 = smul.u32 8, %s15
    %p17 = scmp.lt.s32.totalorder %s16, 7
    %s18 = scalar_select %p17, %s16, 7
    %s19 = smul.addr %s18, 2
    %s20 = scalar_lea.vmem %s1, %s19
    %s21 = ssub.s32 0, 0
    %s22 = smul.u32 8, %s21
  $region9: #{custom_model_forward.5} parent=0 // pred_fallthru
    _
  // Predicated region
  $region10: #{custom_model_forward.5} parent=0 // pred_check
    _
  $region11: #{custom_model_forward.5} parent=0 // pred_check_branch
    %24 = sbr.rel (0) target = $region13
  $region12: #{custom_model_forward.5} parent=0 // pred_region
    _
  $region13: #{custom_model_forward.5} parent=0 // pred_fallthru
    _
  // Predicated region
  $region14: #{custom_model_forward.5} parent=0 // pred_check
    _
  $region15: #{custom_model_forward.5} parent=0 // pred_check_branch
    %26 = sbr.rel (0) target = $region17
  $region16: #{custom_model_forward.5} parent=0 // pred_region
    _
  $region17: #{custom_model_forward.5} parent=0 // pred_fallthru
    _
  %s27 = ssub.s32 0, 0
  %s28 = smul.u32 8, %s27
  %p29 = scmp.lt.s32.totalorder %s28, 7
  %s30 = scalar_select %p29, %s28, 7
  %s31 = smul.addr %s30, 2
  %s32 = scalar_lea.vmem %s1, %s31
  %s33 = ssub.s32 0, 0
  %s34 = smul.u32 8, %s33
  %p35 = scmp.lt.s32.totalorder %s34, 7
  %s36 = scalar_select %p35, %s34, 7
  %s37 = smul.addr %s36, 2
  %s38 = scalar_lea.vmem %s5, %s37
  %s39 = ssub.s32 0, 0
  %s40 = smul.u32 8, %s39
  %p41 = scmp.lt.s32.totalorder %s40, 7
  %s42 = scalar_select %p41, %s40, 7
  %s43 = smul.addr %s42, 2
  %s44 = scalar_lea.vmem %s1, %s43
  %s45 = ssub.s32 0, 0
  %s46 = smul.u32 8, %s45
  %s47 = ssub.s32 0, 0
  %s48 = smul.u32 8, %s47
  %p49 = scmp.lt.s32.totalorder %s48, 7
  %s50 = scalar_select %p49, %s48, 7
  %s51 = smul.addr %s50, 2
  %s52 = scalar_lea.vmem %s5, %s51
  %s53 = ssub.s32 0, 0
  %s54 = smul.u32 8, %s53
  %p55 = scmp.eq.s32.totalorder 0, 0
  // Predicated region
  $region18: #{custom_model_forward.5} parent=0 // pred_check
    %p56 = pneg %p55
  $region19: #{custom_model_forward.5} parent=0 // pred_check_branch
    %58 = sbr.rel (%p56) target = $region21
  $region20: #{custom_model_forward.5} parent=0 // pred_region
    %vm59 = vcmask 123904
    %60 = vst.msk [vmem:[#allocation2] sm:$0x3] %vm59, 0.0
    %61 = vst.msk [vmem:[#allocation4] sm:$0x3] %vm59, 0.0
    %62 = vst.msk [vmem:[#allocation3] sm:$0x3] %vm59, 0.0
    %63 = vst.msk [vmem:[#allocation5] sm:$0x3] %vm59, 0.0
  $region21: #{custom_model_forward.5} parent=0 // pred_fallthru
    _
  %v64 = vld [vmem:[%s0] sm:$0x3]
  %v65 = vld [vmem:[#allocation2] sm:$0x3]
  %v66 = vld [vmem:[%s2] sm:$0xff]
  %v67 = vld [vmem:[%s2 + $0x8] sm:$0xff]
  %vm68 = vcmask 130048
  %v70 = vsel %vm68, %v65, 0
  %72 = vmatprep.subr.mxu0 0.0
  %73 = vmatpush1.msra.mxu0 %v66
  %74 = vmatprep.subr.mxu0 0.0
  %75 = vmatpush1.msra.mxu0 %v67
  %76 = vmatprep.subr.mxu0 0.0
  %77 = vmatpush1.msra.mxu0 0.0
  %78 = vmatprep.subr.mxu0 0.0
  %79 = vmatpush1.msra.mxu0 0.0
  %80 = vmatprep.subr.mxu0 0.0
  %81 = vmatpush1.msra.mxu0 0.0
  %82 = vmatprep.subr.mxu0 0.0
  %83 = vmatpush1.msra.mxu0 0.0
  %84 = vmatprep.subr.mxu0 0.0
  %85 = vmatpush1.msra.mxu0 0.0
  %86 = vmatprep.subr.mxu0 0.0
  %87 = vmatpush1.msra.mxu0 0.0
  %88 = vmatprep.subr.mxu0 0.0
  %89 = vmatpush1.msra.mxu0 0.0
  %90 = vmatprep.subr.mxu0 0.0
  %91 = vmatpush1.msra.mxu0 0.0
  %92 = vmatprep.subr.mxu0 0.0
  %93 = vmatpush1.msra.mxu0 0.0
  %94 = vmatprep.subr.mxu0 0.0
  %95 = vmatpush1.msra.mxu0 0.0
  %96 = vmatprep.subr.mxu0 0.0
  %97 = vmatpush1.msra.mxu0 0.0
  %98 = vmatprep.subr.mxu0 0.0
  %99 = vmatpush1.msra.mxu0 0.0
  %100 = vmatprep.subr.mxu0 0.0
  %101 = vmatpush1.msra.mxu0 0.0
  %102 = vmatprep.subr.mxu0 0.0
  %103 = vmatpush1.msra.mxu0 0.0
  %104 = vmatprep.subr.mxu0 0.0
  %105 = vmatpush1.msra.mxu0 0.0
  %106 = vmatprep.subr.mxu0 0.0
  %107 = vmatpush1.msra.mxu0 0.0
  %108 = vmatprep.subr.mxu0 0.0
  %109 = vmatpush1.msra.mxu0 0.0
  %110 = vmatprep.subr.mxu0 0.0
  %111 = vmatpush1.msra.mxu0 0.0
  %112 = vmatprep.subr.mxu0 0.0
  %113 = vmatpush1.msra.mxu0 0.0
  %114 = vmatprep.subr.mxu0 0.0
  %115 = vmatpush1.msra.mxu0 0.0
  %116 = vmatprep.subr.mxu0 0.0
  %117 = vmatpush1.msra.mxu0 0.0
  %118 = vmatprep.subr.mxu0 0.0
  %119 = vmatpush1.msra.mxu0 0.0
  %120 = vmatprep.subr.mxu0 0.0
  %121 = vmatpush1.msra.mxu0 0.0
  %122 = vmatprep.subr.mxu0 0.0
  %123 = vmatpush1.msra.mxu0 0.0
  %124 = vmatprep.subr.mxu0 0.0
  %125 = vmatpush1.msra.mxu0 0.0
  %126 = vmatprep.subr.mxu0 0.0
  %127 = vmatpush1.msra.mxu0 0.0
  %128 = vmatprep.subr.mxu0 0.0
  %129 = vmatpush1.msra.mxu0 0.0
  %130 = vmatprep.subr.mxu0 0.0
  %131 = vmatpush1.msra.mxu0 0.0
  %132 = vmatprep.subr.mxu0 0.0
  %133 = vmatpush1.msra.mxu0 0.0
  %134 = vmatprep.subr.mxu0 0.0
  %135 = vmatpush1.msra.mxu0 0.0
  %136 = vmatprep.mubr.f32.mxu0 0.0
  %137 = vmatmul.mubr.f32.gmra.mrb[0].mxu0 %v70
  %v138 = vpop.f32.mrb[0].mxu0
  %v139 = vadd.f32 0.0, %v138
  %v140 = vpop.f32.mrb[0].mxu0
  %141 = vdwg.mxu0
  %v142 = vadd.f32 %v64, %v139
  %v143 = vxor.u32 %v142, 2147483648
  %v144 = vmul.f32 %v143, 1.442695
  %v145 = vpow.pop %v144
  %v146 = vadd.f32 %v145, 1.0
  %v147 = vrcp.pop %v146
  %v148 = vmul.f32 1.0, %v147
  %v149 = vtanh.pop %v142
  %v150 = vld [vmem:[#allocation4] sm:$0x3]
  %152 = vrot.lane.b32.xlu0 %v150, 16
  %v153 = vpop.permute.xlu0 %152
  %v155 = vmul.f32 %v148, %v153
  %157 = vrot.lane.b32.xlu0 %v149, 80
  %v158 = vpop.permute.xlu0 %157
  %v160 = vmul.f32 %v148, %v158
  %162 = vrot.lane.b32.xlu0 %v160, 16
  %v163 = vpop.permute.xlu0 %162
  %v165 = vadd.f32 %v155, %v163
  %v166 = vtanh.pop %v165
  %168 = vrot.lane.b32.xlu0 %v166, 16
  %v169 = vpop.permute.xlu0 %168
  %v171 = vmul.f32 %v148, %v169
  %173 = vrot.lane.b32.xlu0 %v171, 96
  %v174 = vpop.permute.xlu0 %173
  %vm176 = vcmask 123904
  %177 = vst.msk [vmem:[#allocation2] sm:$0x3] %vm176, %v174
  %179 = vrot.lane.b32.xlu0 %v165, 112
  %v180 = vpop.permute.xlu0 %179
  %182 = vst.msk [vmem:[#allocation4] sm:$0x3] %vm176, %v180
  %183 = vst.msk [vmem:[%s4] sm:$0x3] %vm176, %v174
  %s184 = scalar_lea.vmem %s44, 14
  %v185 = vld [vmem:[%s184] sm:$0x3]
  %v186 = vld [vmem:[#allocation3] sm:$0x3]
  %v187 = vld [vmem:[%s3] sm:$0xff]
  %v188 = vld [vmem:[%s3 + $0x8] sm:$0xff]
  %v190 = vsel %vm68, %v186, 0
  %192 = vmatprep.subr.mxu0 0.0
  %193 = vmatpush1.msra.mxu0 %v187
  %194 = vmatprep.subr.mxu0 0.0
  %195 = vmatpush1.msra.mxu0 %v188
  %196 = vmatprep.subr.mxu0 0.0
  %197 = vmatpush1.msra.mxu0 0.0
  %198 = vmatprep.subr.mxu0 0.0
  %199 = vmatpush1.msra.mxu0 0.0
  %200 = vmatprep.subr.mxu0 0.0
  %201 = vmatpush1.msra.mxu0 0.0
  %202 = vmatprep.subr.mxu0 0.0
  %203 = vmatpush1.msra.mxu0 0.0
  %204 = vmatprep.subr.mxu0 0.0
  %205 = vmatpush1.msra.mxu0 0.0
  %206 = vmatprep.subr.mxu0 0.0
  %207 = vmatpush1.msra.mxu0 0.0
  %208 = vmatprep.subr.mxu0 0.0
  %209 = vmatpush1.msra.mxu0 0.0
  %210 = vmatprep.subr.mxu0 0.0
  %211 = vmatpush1.msra.mxu0 0.0
  %212 = vmatprep.subr.mxu0 0.0
  %213 = vmatpush1.msra.mxu0 0.0
  %214 = vmatprep.subr.mxu0 0.0
  %215 = vmatpush1.msra.mxu0 0.0
  %216 = vmatprep.subr.mxu0 0.0
  %217 = vmatpush1.msra.mxu0 0.0
  %218 = vmatprep.subr.mxu0 0.0
  %219 = vmatpush1.msra.mxu0 0.0
  %220 = vmatprep.subr.mxu0 0.0
  %221 = vmatpush1.msra.mxu0 0.0
  %222 = vmatprep.subr.mxu0 0.0
  %223 = vmatpush1.msra.mxu0 0.0
  %224 = vmatprep.subr.mxu0 0.0
  %225 = vmatpush1.msra.mxu0 0.0
  %226 = vmatprep.subr.mxu0 0.0
  %227 = vmatpush1.msra.mxu0 0.0
  %228 = vmatprep.subr.mxu0 0.0
  %229 = vmatpush1.msra.mxu0 0.0
  %230 = vmatprep.subr.mxu0 0.0
  %231 = vmatpush1.msra.mxu0 0.0
  %232 = vmatprep.subr.mxu0 0.0
  %233 = vmatpush1.msra.mxu0 0.0
  %234 = vmatprep.subr.mxu0 0.0
  %235 = vmatpush1.msra.mxu0 0.0
  %236 = vmatprep.subr.mxu0 0.0
  %237 = vmatpush1.msra.mxu0 0.0
  %238 = vmatprep.subr.mxu0 0.0
  %239 = vmatpush1.msra.mxu0 0.0
  %240 = vmatprep.subr.mxu0 0.0
  %241 = vmatpush1.msra.mxu0 0.0
  %242 = vmatprep.subr.mxu0 0.0
  %243 = vmatpush1.msra.mxu0 0.0
  %244 = vmatprep.subr.mxu0 0.0
  %245 = vmatpush1.msra.mxu0 0.0
  %246 = vmatprep.subr.mxu0 0.0
  %247 = vmatpush1.msra.mxu0 0.0
  %248 = vmatprep.subr.mxu0 0.0
  %249 = vmatpush1.msra.mxu0 0.0
  %250 = vmatprep.subr.mxu0 0.0
  %251 = vmatpush1.msra.mxu0 0.0
  %252 = vmatprep.subr.mxu0 0.0
  %253 = vmatpush1.msra.mxu0 0.0
  %254 = vmatprep.subr.mxu0 0.0
  %255 = vmatpush1.msra.mxu0 0.0
  %256 = vmatprep.mubr.f32.mxu0 0.0
  %257 = vmatmul.mubr.f32.gmra.mrb[0].mxu0 %v190
  %v258 = vpop.f32.mrb[0].mxu0
  %v259 = vadd.f32 0.0, %v258
  %v260 = vpop.f32.mrb[0].mxu0
  %261 = vdwg.mxu0
  %v262 = vadd.f32 %v185, %v259
  %v263 = vxor.u32 %v262, 2147483648
  %v264 = vmul.f32 %v263, 1.442695
  %v265 = vpow.pop %v264
  %v266 = vadd.f32 %v265, 1.0
  %v267 = vrcp.pop %v266
  %v268 = vmul.f32 1.0, %v267
  %v269 = vtanh.pop %v262
  %v270 = vld [vmem:[#allocation5] sm:$0x3]
  %272 = vrot.lane.b32.xlu0 %v270, 16
  %v273 = vpop.permute.xlu0 %272
  %v275 = vmul.f32 %v268, %v273
  %277 = vrot.lane.b32.xlu0 %v269, 80
  %v278 = vpop.permute.xlu0 %277
  %v280 = vmul.f32 %v268, %v278
  %282 = vrot.lane.b32.xlu0 %v280, 16
  %v283 = vpop.permute.xlu0 %282
  %v285 = vadd.f32 %v275, %v283
  %v286 = vtanh.pop %v285
  %288 = vrot.lane.b32.xlu0 %v286, 16
  %v289 = vpop.permute.xlu0 %288
  %v291 = vmul.f32 %v268, %v289
  %293 = vrot.lane.b32.xlu0 %v291, 96
  %v294 = vpop.permute.xlu0 %293
  %296 = vst.msk [vmem:[#allocation3] sm:$0x3] %vm176, %v294
  %298 = vrot.lane.b32.xlu0 %v285, 112
  %v299 = vpop.permute.xlu0 %298
  %301 = vst.msk [vmem:[#allocation5] sm:$0x3] %vm176, %v299
  %s302 = scalar_lea.vmem %s52, 14
  %303 = vst.msk [vmem:[%s302] sm:$0x3] %vm176, %v294
  %s304 = scalar_lea.vmem %s0, 2
  %v305 = vld [vmem:[%s304] sm:$0x3]
  %v306 = vld [vmem:[#allocation2] sm:$0x3]
  %v307 = vld [vmem:[%s2] sm:$0xff]
  %v308 = vld [vmem:[%s2 + $0x8] sm:$0xff]
  %v310 = vsel %vm68, %v306, 0
  %312 = vmatprep.subr.mxu0 0.0
  %313 = vmatpush1.msra.mxu0 %v307
  %314 = vmatprep.subr.mxu0 0.0
  %315 = vmatpush1.msra.mxu0 %v308
  %316 = vmatprep.subr.mxu0 0.0
  %317 = vmatpush1.msra.mxu0 0.0
  %318 = vmatprep.subr.mxu0 0.0
  %319 = vmatpush1.msra.mxu0 0.0
  %320 = vmatprep.subr.mxu0 0.0
  %321 = vmatpush1.msra.mxu0 0.0
  %322 = vmatprep.subr.mxu0 0.0
  %323 = vmatpush1.msra.mxu0 0.0
  %324 = vmatprep.subr.mxu0 0.0
  %325 = vmatpush1.msra.mxu0 0.0
  %326 = vmatprep.subr.mxu0 0.0
  %327 = vmatpush1.msra.mxu0 0.0
  %328 = vmatprep.subr.mxu0 0.0
  %329 = vmatpush1.msra.mxu0 0.0
  %330 = vmatprep.subr.mxu0 0.0
  %331 = vmatpush1.msra.mxu0 0.0
  %332 = vmatprep.subr.mxu0 0.0
  %333 = vmatpush1.msra.mxu0 0.0
  %334 = vmatprep.subr.mxu0 0.0
  %335 = vmatpush1.msra.mxu0 0.0
  %336 = vmatprep.subr.mxu0 0.0
  %337 = vmatpush1.msra.mxu0 0.0
  %338 = vmatprep.subr.mxu0 0.0
  %339 = vmatpush1.msra.mxu0 0.0
  %340 = vmatprep.subr.mxu0 0.0
  %341 = vmatpush1.msra.mxu0 0.0
  %342 = vmatprep.subr.mxu0 0.0
  %343 = vmatpush1.msra.mxu0 0.0
  %344 = vmatprep.subr.mxu0 0.0
  %345 = vmatpush1.msra.mxu0 0.0
  %346 = vmatprep.subr.mxu0 0.0
  %347 = vmatpush1.msra.mxu0 0.0
  %348 = vmatprep.subr.mxu0 0.0
  %349 = vmatpush1.msra.mxu0 0.0
  %350 = vmatprep.subr.mxu0 0.0
  %351 = vmatpush1.msra.mxu0 0.0
  %352 = vmatprep.subr.mxu0 0.0
  %353 = vmatpush1.msra.mxu0 0.0
  %354 = vmatprep.subr.mxu0 0.0
  %355 = vmatpush1.msra.mxu0 0.0
  %356 = vmatprep.subr.mxu0 0.0
  %357 = vmatpush1.msra.mxu0 0.0
  %358 = vmatprep.subr.mxu0 0.0
  %359 = vmatpush1.msra.mxu0 0.0
  %360 = vmatprep.subr.mxu0 0.0
  %361 = vmatpush1.msra.mxu0 0.0
  %362 = vmatprep.subr.mxu0 0.0
  %363 = vmatpush1.msra.mxu0 0.0
  %364 = vmatprep.subr.mxu0 0.0
  %365 = vmatpush1.msra.mxu0 0.0
  %366 = vmatprep.subr.mxu0 0.0
  %367 = vmatpush1.msra.mxu0 0.0
  %368 = vmatprep.subr.mxu0 0.0
  %369 = vmatpush1.msra.mxu0 0.0
  %370 = vmatprep.subr.mxu0 0.0
  %371 = vmatpush1.msra.mxu0 0.0
  %372 = vmatprep.subr.mxu0 0.0
  %373 = vmatpush1.msra.mxu0 0.0
  %374 = vmatprep.subr.mxu0 0.0
  %375 = vmatpush1.msra.mxu0 0.0
  %376 = vmatprep.mubr.f32.mxu0 0.0
  %377 = vmatmul.mubr.f32.gmra.mrb[0].mxu0 %v310
  %v378 = vpop.f32.mrb[0].mxu0
  %v379 = vadd.f32 0.0, %v378
  %v380 = vpop.f32.mrb[0].mxu0
  %381 = vdwg.mxu0
  %v382 = vadd.f32 %v305, %v379
  %v383 = vxor.u32 %v382, 2147483648
  %v384 = vmul.f32 %v383, 1.442695
  %v385 = vpow.pop %v384
  %v386 = vadd.f32 %v385, 1.0
  %v387 = vrcp.pop %v386
  %v388 = vmul.f32 1.0, %v387
  %v389 = vtanh.pop %v382
  %v390 = vld [vmem:[#allocation4] sm:$0x3]
  %392 = vrot.lane.b32.xlu0 %v390, 16
  %v393 = vpop.permute.xlu0 %392
  %v395 = vmul.f32 %v388, %v393
  %397 = vrot.lane.b32.xlu0 %v389, 80
  %v398 = vpop.permute.xlu0 %397
  %v400 = vmul.f32 %v388, %v398
  %402 = vrot.lane.b32.xlu0 %v400, 16
  %v403 = vpop.permute.xlu0 %402
  %v405 = vadd.f32 %v395, %v403
  %v406 = vtanh.pop %v405
  %408 = vrot.lane.b32.xlu0 %v406, 16
  %v409 = vpop.permute.xlu0 %408
  %v411 = vmul.f32 %v388, %v409
  %413 = vrot.lane.b32.xlu0 %v411, 96
  %v414 = vpop.permute.xlu0 %413
  %416 = vst.msk [vmem:[#allocation2] sm:$0x3] %vm176, %v414
  %418 = vrot.lane.b32.xlu0 %v405, 112
  %v419 = vpop.permute.xlu0 %418
  %421 = vst.msk [vmem:[#allocation4] sm:$0x3] %vm176, %v419
  %s422 = scalar_lea.vmem %s4, 2
  %423 = vst.msk [vmem:[%s422] sm:$0x3] %vm176, %v414
  %s424 = scalar_lea.vmem %s44, 12
  %v425 = vld [vmem:[%s424] sm:$0x3]
  %v426 = vld [vmem:[#allocation3] sm:$0x3]
  %v427 = vld [vmem:[%s3] sm:$0xff]
  %v428 = vld [vmem:[%s3 + $0x8] sm:$0xff]
  %v430 = vsel %vm68, %v426, 0
  %432 = vmatprep.subr.mxu0 0.0
  %433 = vmatpush1.msra.mxu0 %v427
  %434 = vmatprep.subr.mxu0 0.0
  %435 = vmatpush1.msra.mxu0 %v428
  %436 = vmatprep.subr.mxu0 0.0
  %437 = vmatpush1.msra.mxu0 0.0
  %438 = vmatprep.subr.mxu0 0.0
  %439 = vmatpush1.msra.mxu0 0.0
  %440 = vmatprep.subr.mxu0 0.0
  %441 = vmatpush1.msra.mxu0 0.0
  %442 = vmatprep.subr.mxu0 0.0
  %443 = vmatpush1.msra.mxu0 0.0
  %444 = vmatprep.subr.mxu0 0.0
  %445 = vmatpush1.msra.mxu0 0.0
  %446 = vmatprep.subr.mxu0 0.0
  %447 = vmatpush1.msra.mxu0 0.0
  %448 = vmatprep.subr.mxu0 0.0
  %449 = vmatpush1.msra.mxu0 0.0
  %450 = vmatprep.subr.mxu0 0.0
  %451 = vmatpush1.msra.mxu0 0.0
  %452 = vmatprep.subr.mxu0 0.0
  %453 = vmatpush1.msra.mxu0 0.0
  %454 = vmatprep.subr.mxu0 0.0
  %455 = vmatpush1.msra.mxu0 0.0
  %456 = vmatprep.subr.mxu0 0.0
  %457 = vmatpush1.msra.mxu0 0.0
  %458 = vmatprep.subr.mxu0 0.0
  %459 = vmatpush1.msra.mxu0 0.0
  %460 = vmatprep.subr.mxu0 0.0
  %461 = vmatpush1.msra.mxu0 0.0
  %462 = vmatprep.subr.mxu0 0.0
  %463 = vmatpush1.msra.mxu0 0.0
  %464 = vmatprep.subr.mxu0 0.0
  %465 = vmatpush1.msra.mxu0 0.0
  %466 = vmatprep.subr.mxu0 0.0
  %467 = vmatpush1.msra.mxu0 0.0
  %468 = vmatprep.subr.mxu0 0.0
  %469 = vmatpush1.msra.mxu0 0.0
  %470 = vmatprep.subr.mxu0 0.0
  %471 = vmatpush1.msra.mxu0 0.0
  %472 = vmatprep.subr.mxu0 0.0
  %473 = vmatpush1.msra.mxu0 0.0
  %474 = vmatprep.subr.mxu0 0.0
  %475 = vmatpush1.msra.mxu0 0.0
  %476 = vmatprep.subr.mxu0 0.0
  %477 = vmatpush1.msra.mxu0 0.0
  %478 = vmatprep.subr.mxu0 0.0
  %479 = vmatpush1.msra.mxu0 0.0
  %480 = vmatprep.subr.mxu0 0.0
  %481 = vmatpush1.msra.mxu0 0.0
  %482 = vmatprep.subr.mxu0 0.0
  %483 = vmatpush1.msra.mxu0 0.0
  %484 = vmatprep.subr.mxu0 0.0
  %485 = vmatpush1.msra.mxu0 0.0
  %486 = vmatprep.subr.mxu0 0.0
  %487 = vmatpush1.msra.mxu0 0.0
  %488 = vmatprep.subr.mxu0 0.0
  %489 = vmatpush1.msra.mxu0 0.0
  %490 = vmatprep.subr.mxu0 0.0
  %491 = vmatpush1.msra.mxu0 0.0
  %492 = vmatprep.subr.mxu0 0.0
  %493 = vmatpush1.msra.mxu0 0.0
  %494 = vmatprep.subr.mxu0 0.0
  %495 = vmatpush1.msra.mxu0 0.0
  %496 = vmatprep.mubr.f32.mxu0 0.0
  %497 = vmatmul.mubr.f32.gmra.mrb[0].mxu0 %v430
  %v498 = vpop.f32.mrb[0].mxu0
  %v499 = vadd.f32 0.0, %v498
  %v500 = vpop.f32.mrb[0].mxu0
  %501 = vdwg.mxu0
  %v502 = vadd.f32 %v425, %v499
  %v503 = vxor.u32 %v502, 2147483648
  %v504 = vmul.f32 %v503, 1.442695
  %v505 = vpow.pop %v504
  %v506 = vadd.f32 %v505, 1.0
  %v507 = vrcp.pop %v506
  %v508 = vmul.f32 1.0, %v507
  %v509 = vtanh.pop %v502
  %v510 = vld [vmem:[#allocation5] sm:$0x3]
  %512 = vrot.lane.b32.xlu0 %v510, 16
  %v513 = vpop.permute.xlu0 %512
  %v515 = vmul.f32 %v508, %v513
  %517 = vrot.lane.b32.xlu0 %v509, 80
  %v518 = vpop.permute.xlu0 %517
  %v520 = vmul.f32 %v508, %v518
  %522 = vrot.lane.b32.xlu0 %v520, 16
  %v523 = vpop.permute.xlu0 %522
  %v525 = vadd.f32 %v515, %v523
  %v526 = vtanh.pop %v525
  %528 = vrot.lane.b32.xlu0 %v526, 16
  %v529 = vpop.permute.xlu0 %528
  %v531 = vmul.f32 %v508, %v529
  %533 = vrot.lane.b32.xlu0 %v531, 96
  %v534 = vpop.permute.xlu0 %533
  %536 = vst.msk [vmem:[#allocation3] sm:$0x3] %vm176, %v534
  %538 = vrot.lane.b32.xlu0 %v525, 112
  %v539 = vpop.permute.xlu0 %538
  %541 = vst.msk [vmem:[#allocation5] sm:$0x3] %vm176, %v539
  %s542 = scalar_lea.vmem %s52, 12
  %543 = vst.msk [vmem:[%s542] sm:$0x3] %vm176, %v534
  %s544 = scalar_lea.vmem %s0, 4
  %v545 = vld [vmem:[%s544] sm:$0x3]
  %v546 = vld [vmem:[#allocation2] sm:$0x3]
  %v547 = vld [vmem:[%s2] sm:$0xff]
  %v548 = vld [vmem:[%s2 + $0x8] sm:$0xff]
  %v550 = vsel %vm68, %v546, 0
  %552 = vmatprep.subr.mxu0 0.0
  %553 = vmatpush1.msra.mxu0 %v547
  %554 = vmatprep.subr.mxu0 0.0
  %555 = vmatpush1.msra.mxu0 %v548
  %556 = vmatprep.subr.mxu0 0.0
  %557 = vmatpush1.msra.mxu0 0.0
  %558 = vmatprep.subr.mxu0 0.0
  %559 = vmatpush1.msra.mxu0 0.0
  %560 = vmatprep.subr.mxu0 0.0
  %561 = vmatpush1.msra.mxu0 0.0
  %562 = vmatprep.subr.mxu0 0.0
  %563 = vmatpush1.msra.mxu0 0.0
  %564 = vmatprep.subr.mxu0 0.0
  %565 = vmatpush1.msra.mxu0 0.0
  %566 = vmatprep.subr.mxu0 0.0
  %567 = vmatpush1.msra.mxu0 0.0
  %568 = vmatprep.subr.mxu0 0.0
  %569 = vmatpush1.msra.mxu0 0.0
  %570 = vmatprep.subr.mxu0 0.0
  %571 = vmatpush1.msra.mxu0 0.0
  %572 = vmatprep.subr.mxu0 0.0
  %573 = vmatpush1.msra.mxu0 0.0
  %574 = vmatprep.subr.mxu0 0.0
  %575 = vmatpush1.msra.mxu0 0.0
  %576 = vmatprep.subr.mxu0 0.0
  %577 = vmatpush1.msra.mxu0 0.0
  %578 = vmatprep.subr.mxu0 0.0
  %579 = vmatpush1.msra.mxu0 0.0
  %580 = vmatprep.subr.mxu0 0.0
  %581 = vmatpush1.msra.mxu0 0.0
  %582 = vmatprep.subr.mxu0 0.0
  %583 = vmatpush1.msra.mxu0 0.0
  %584 = vmatprep.subr.mxu0 0.0
  %585 = vmatpush1.msra.mxu0 0.0
  %586 = vmatprep.subr.mxu0 0.0
  %587 = vmatpush1.msra.mxu0 0.0
  %588 = vmatprep.subr.mxu0 0.0
  %589 = vmatpush1.msra.mxu0 0.0
  %590 = vmatprep.subr.mxu0 0.0
  %591 = vmatpush1.msra.mxu0 0.0
  %592 = vmatprep.subr.mxu0 0.0
  %593 = vmatpush1.msra.mxu0 0.0
  %594 = vmatprep.subr.mxu0 0.0
  %595 = vmatpush1.msra.mxu0 0.0
  %596 = vmatprep.subr.mxu0 0.0
  %597 = vmatpush1.msra.mxu0 0.0
  %598 = vmatprep.subr.mxu0 0.0
  %599 = vmatpush1.msra.mxu0 0.0
  %600 = vmatprep.subr.mxu0 0.0
  %601 = vmatpush1.msra.mxu0 0.0
  %602 = vmatprep.subr.mxu0 0.0
  %603 = vmatpush1.msra.mxu0 0.0
  %604 = vmatprep.subr.mxu0 0.0
  %605 = vmatpush1.msra.mxu0 0.0
  %606 = vmatprep.subr.mxu0 0.0
  %607 = vmatpush1.msra.mxu0 0.0
  %608 = vmatprep.subr.mxu0 0.0
  %609 = vmatpush1.msra.mxu0 0.0
  %610 = vmatprep.subr.mxu0 0.0
  %611 = vmatpush1.msra.mxu0 0.0
  %612 = vmatprep.subr.mxu0 0.0
  %613 = vmatpush1.msra.mxu0 0.0
  %614 = vmatprep.subr.mxu0 0.0
  %615 = vmatpush1.msra.mxu0 0.0
  %616 = vmatprep.mubr.f32.mxu0 0.0
  %617 = vmatmul.mubr.f32.gmra.mrb[0].mxu0 %v550
  %v618 = vpop.f32.mrb[0].mxu0
  %v619 = vadd.f32 0.0, %v618
  %v620 = vpop.f32.mrb[0].mxu0
  %621 = vdwg.mxu0
  %v622 = vadd.f32 %v545, %v619
  %v623 = vxor.u32 %v622, 2147483648
  %v624 = vmul.f32 %v623, 1.442695
  %v625 = vpow.pop %v624
  %v626 = vadd.f32 %v625, 1.0
  %v627 = vrcp.pop %v626
  %v628 = vmul.f32 1.0, %v627
  %v629 = vtanh.pop %v622
  %v630 = vld [vmem:[#allocation4] sm:$0x3]
  %632 = vrot.lane.b32.xlu0 %v630, 16
  %v633 = vpop.permute.xlu0 %632
  %v635 = vmul.f32 %v628, %v633
  %637 = vrot.lane.b32.xlu0 %v629, 80
  %v638 = vpop.permute.xlu0 %637
  %v640 = vmul.f32 %v628, %v638
  %642 = vrot.lane.b32.xlu0 %v640, 16
  %v643 = vpop.permute.xlu0 %642
  %v645 = vadd.f32 %v635, %v643
  %v646 = vtanh.pop %v645
  %648 = vrot.lane.b32.xlu0 %v646, 16
  %v649 = vpop.permute.xlu0 %648
  %v651 = vmul.f32 %v628, %v649
  %653 = vrot.lane.b32.xlu0 %v651, 96
  %v654 = vpop.permute.xlu0 %653
  %656 = vst.msk [vmem:[#allocation2] sm:$0x3] %vm176, %v654
  %658 = vrot.lane.b32.xlu0 %v645, 112
  %v659 = vpop.permute.xlu0 %658
  %661 = vst.msk [vmem:[#allocation4] sm:$0x3] %vm176, %v659
  %s662 = scalar_lea.vmem %s4, 4
  %663 = vst.msk [vmem:[%s662] sm:$0x3] %vm176, %v654
  %s664 = scalar_lea.vmem %s44, 10
  %v665 = vld [vmem:[%s664] sm:$0x3]
  %v666 = vld [vmem:[#allocation3] sm:$0x3]
  %v667 = vld [vmem:[%s3] sm:$0xff]
  %v668 = vld [vmem:[%s3 + $0x8] sm:$0xff]
  %v670 = vsel %vm68, %v666, 0
  %672 = vmatprep.subr.mxu0 0.0
  %673 = vmatpush1.msra.mxu0 %v667
  %674 = vmatprep.subr.mxu0 0.0
  %675 = vmatpush1.msra.mxu0 %v668
  %676 = vmatprep.subr.mxu0 0.0
  %677 = vmatpush1.msra.mxu0 0.0
  %678 = vmatprep.subr.mxu0 0.0
  %679 = vmatpush1.msra.mxu0 0.0
  %680 = vmatprep.subr.mxu0 0.0
  %681 = vmatpush1.msra.mxu0 0.0
  %682 = vmatprep.subr.mxu0 0.0
  %683 = vmatpush1.msra.mxu0 0.0
  %684 = vmatprep.subr.mxu0 0.0
  %685 = vmatpush1.msra.mxu0 0.0
  %686 = vmatprep.subr.mxu0 0.0
  %687 = vmatpush1.msra.mxu0 0.0
  %688 = vmatprep.subr.mxu0 0.0
  %689 = vmatpush1.msra.mxu0 0.0
  %690 = vmatprep.subr.mxu0 0.0
  %691 = vmatpush1.msra.mxu0 0.0
  %692 = vmatprep.subr.mxu0 0.0
  %693 = vmatpush1.msra.mxu0 0.0
  %694 = vmatprep.subr.mxu0 0.0
  %695 = vmatpush1.msra.mxu0 0.0
  %696 = vmatprep.subr.mxu0 0.0
  %697 = vmatpush1.msra.mxu0 0.0
  %698 = vmatprep.subr.mxu0 0.0
  %699 = vmatpush1.msra.mxu0 0.0
  %700 = vmatprep.subr.mxu0 0.0
  %701 = vmatpush1.msra.mxu0 0.0
  %702 = vmatprep.subr.mxu0 0.0
  %703 = vmatpush1.msra.mxu0 0.0
  %704 = vmatprep.subr.mxu0 0.0
  %705 = vmatpush1.msra.mxu0 0.0
  %706 = vmatprep.subr.mxu0 0.0
  %707 = vmatpush1.msra.mxu0 0.0
  %708 = vmatprep.subr.mxu0 0.0
  %709 = vmatpush1.msra.mxu0 0.0
  %710 = vmatprep.subr.mxu0 0.0
  %711 = vmatpush1.msra.mxu0 0.0
  %712 = vmatprep.subr.mxu0 0.0
  %713 = vmatpush1.msra.mxu0 0.0
  %714 = vmatprep.subr.mxu0 0.0
  %715 = vmatpush1.msra.mxu0 0.0
  %716 = vmatprep.subr.mxu0 0.0
  %717 = vmatpush1.msra.mxu0 0.0
  %718 = vmatprep.subr.mxu0 0.0
  %719 = vmatpush1.msra.mxu0 0.0
  %720 = vmatprep.subr.mxu0 0.0
  %721 = vmatpush1.msra.mxu0 0.0
  %722 = vmatprep.subr.mxu0 0.0
  %723 = vmatpush1.msra.mxu0 0.0
  %724 = vmatprep.subr.mxu0 0.0
  %725 = vmatpush1.msra.mxu0 0.0
  %726 = vmatprep.subr.mxu0 0.0
  %727 = vmatpush1.msra.mxu0 0.0
  %728 = vmatprep.subr.mxu0 0.0
  %729 = vmatpush1.msra.mxu0 0.0
  %730 = vmatprep.subr.mxu0 0.0
  %731 = vmatpush1.msra.mxu0 0.0
  %732 = vmatprep.subr.mxu0 0.0
  %733 = vmatpush1.msra.mxu0 0.0
  %734 = vmatprep.subr.mxu0 0.0
  %735 = vmatpush1.msra.mxu0 0.0
  %736 = vmatprep.mubr.f32.mxu0 0.0
  %737 = vmatmul.mubr.f32.gmra.mrb[0].mxu0 %v670
  %v738 = vpop.f32.mrb[0].mxu0
  %v739 = vadd.f32 0.0, %v738
  %v740 = vpop.f32.mrb[0].mxu0
  %741 = vdwg.mxu0
  %v742 = vadd.f32 %v665, %v739
  %v743 = vxor.u32 %v742, 2147483648
  %v744 = vmul.f32 %v743, 1.442695
  %v745 = vpow.pop %v744
  %v746 = vadd.f32 %v745, 1.0
  %v747 = vrcp.pop %v746
  %v748 = vmul.f32 1.0, %v747
  %v749 = vtanh.pop %v742
  %v750 = vld [vmem:[#allocation5] sm:$0x3]
  %752 = vrot.lane.b32.xlu0 %v750, 16
  %v753 = vpop.permute.xlu0 %752
  %v755 = vmul.f32 %v748, %v753
  %757 = vrot.lane.b32.xlu0 %v749, 80
  %v758 = vpop.permute.xlu0 %757
  %v760 = vmul.f32 %v748, %v758
  %762 = vrot.lane.b32.xlu0 %v760, 16
  %v763 = vpop.permute.xlu0 %762
  %v765 = vadd.f32 %v755, %v763
  %v766 = vtanh.pop %v765
  %768 = vrot.lane.b32.xlu0 %v766, 16
  %v769 = vpop.permute.xlu0 %768
  %v771 = vmul.f32 %v748, %v769
  %773 = vrot.lane.b32.xlu0 %v771, 96
  %v774 = vpop.permute.xlu0 %773
  %776 = vst.msk [vmem:[#allocation3] sm:$0x3] %vm176, %v774
  %778 = vrot.lane.b32.xlu0 %v765, 112
  %v779 = vpop.permute.xlu0 %778
  %781 = vst.msk [vmem:[#allocation5] sm:$0x3] %vm176, %v779
  %s782 = scalar_lea.vmem %s52, 10
  %783 = vst.msk [vmem:[%s782] sm:$0x3] %vm176, %v774
  %s784 = scalar_lea.vmem %s0, 6
  %v785 = vld [vmem:[%s784] sm:$0x3]
  %v786 = vld [vmem:[#allocation2] sm:$0x3]
  %v787 = vld [vmem:[%s2] sm:$0xff]
  %v788 = vld [vmem:[%s2 + $0x8] sm:$0xff]
  %v790 = vsel %vm68, %v786, 0
  %792 = vmatprep.subr.mxu0 0.0
  %793 = vmatpush1.msra.mxu0 %v787
  %794 = vmatprep.subr.mxu0 0.0
  %795 = vmatpush1.msra.mxu0 %v788
  %796 = vmatprep.subr.mxu0 0.0
  %797 = vmatpush1.msra.mxu0 0.0
  %798 = vmatprep.subr.mxu0 0.0
  %799 = vmatpush1.msra.mxu0 0.0
  %800 = vmatprep.subr.mxu0 0.0
  %801 = vmatpush1.msra.mxu0 0.0
  %802 = vmatprep.subr.mxu0 0.0
  %803 = vmatpush1.msra.mxu0 0.0
  %804 = vmatprep.subr.mxu0 0.0
  %805 = vmatpush1.msra.mxu0 0.0
  %806 = vmatprep.subr.mxu0 0.0
  %807 = vmatpush1.msra.mxu0 0.0
  %808 = vmatprep.subr.mxu0 0.0
  %809 = vmatpush1.msra.mxu0 0.0
  %810 = vmatprep.subr.mxu0 0.0
  %811 = vmatpush1.msra.mxu0 0.0
  %812 = vmatprep.subr.mxu0 0.0
  %813 = vmatpush1.msra.mxu0 0.0
  %814 = vmatprep.subr.mxu0 0.0
  %815 = vmatpush1.msra.mxu0 0.0
  %816 = vmatprep.subr.mxu0 0.0
  %817 = vmatpush1.msra.mxu0 0.0
  %818 = vmatprep.subr.mxu0 0.0
  %819 = vmatpush1.msra.mxu0 0.0
  %820 = vmatprep.subr.mxu0 0.0
  %821 = vmatpush1.msra.mxu0 0.0
  %822 = vmatprep.subr.mxu0 0.0
  %823 = vmatpush1.msra.mxu0 0.0
  %824 = vmatprep.subr.mxu0 0.0
  %825 = vmatpush1.msra.mxu0 0.0
  %826 = vmatprep.subr.mxu0 0.0
  %827 = vmatpush1.msra.mxu0 0.0
  %828 = vmatprep.subr.mxu0 0.0
  %829 = vmatpush1.msra.mxu0 0.0
  %830 = vmatprep.subr.mxu0 0.0
  %831 = vmatpush1.msra.mxu0 0.0
  %832 = vmatprep.subr.mxu0 0.0
  %833 = vmatpush1.msra.mxu0 0.0
  %834 = vmatprep.subr.mxu0 0.0
  %835 = vmatpush1.msra.mxu0 0.0
  %836 = vmatprep.subr.mxu0 0.0
  %837 = vmatpush1.msra.mxu0 0.0
  %838 = vmatprep.subr.mxu0 0.0
  %839 = vmatpush1.msra.mxu0 0.0
  %840 = vmatprep.subr.mxu0 0.0
  %841 = vmatpush1.msra.mxu0 0.0
  %842 = vmatprep.subr.mxu0 0.0
  %843 = vmatpush1.msra.mxu0 0.0
  %844 = vmatprep.subr.mxu0 0.0
  %845 = vmatpush1.msra.mxu0 0.0
  %846 = vmatprep.subr.mxu0 0.0
  %847 = vmatpush1.msra.mxu0 0.0
  %848 = vmatprep.subr.mxu0 0.0
  %849 = vmatpush1.msra.mxu0 0.0
  %850 = vmatprep.subr.mxu0 0.0
  %851 = vmatpush1.msra.mxu0 0.0
  %852 = vmatprep.subr.mxu0 0.0
  %853 = vmatpush1.msra.mxu0 0.0
  %854 = vmatprep.subr.mxu0 0.0
  %855 = vmatpush1.msra.mxu0 0.0
  %856 = vmatprep.mubr.f32.mxu0 0.0
  %857 = vmatmul.mubr.f32.gmra.mrb[0].mxu0 %v790
  %v858 = vpop.f32.mrb[0].mxu0
  %v859 = vadd.f32 0.0, %v858
  %v860 = vpop.f32.mrb[0].mxu0
  %861 = vdwg.mxu0
  %v862 = vadd.f32 %v785, %v859
  %v863 = vxor.u32 %v862, 2147483648
  %v864 = vmul.f32 %v863, 1.442695
  %v865 = vpow.pop %v864
  %v866 = vadd.f32 %v865, 1.0
  %v867 = vrcp.pop %v866
  %v868 = vmul.f32 1.0, %v867
  %v869 = vtanh.pop %v862
  %v870 = vld [vmem:[#allocation4] sm:$0x3]
  %872 = vrot.lane.b32.xlu0 %v870, 16
  %v873 = vpop.permute.xlu0 %872
  %v875 = vmul.f32 %v868, %v873
  %877 = vrot.lane.b32.xlu0 %v869, 80
  %v878 = vpop.permute.xlu0 %877
  %v880 = vmul.f32 %v868, %v878
  %882 = vrot.lane.b32.xlu0 %v880, 16
  %v883 = vpop.permute.xlu0 %882
  %v885 = vadd.f32 %v875, %v883
  %v886 = vtanh.pop %v885
  %888 = vrot.lane.b32.xlu0 %v886, 16
  %v889 = vpop.permute.xlu0 %888
  %v891 = vmul.f32 %v868, %v889
  %893 = vrot.lane.b32.xlu0 %v891, 96
  %v894 = vpop.permute.xlu0 %893
  %896 = vst.msk [vmem:[#allocation2] sm:$0x3] %vm176, %v894
  %898 = vrot.lane.b32.xlu0 %v885, 112
  %v899 = vpop.permute.xlu0 %898
  %901 = vst.msk [vmem:[#allocation4] sm:$0x3] %vm176, %v899
  %s902 = scalar_lea.vmem %s4, 6
  %903 = vst.msk [vmem:[%s902] sm:$0x3] %vm176, %v894
  %s904 = scalar_lea.vmem %s44, 8
  %v905 = vld [vmem:[%s904] sm:$0x3]
  %v906 = vld [vmem:[#allocation3] sm:$0x3]
  %v907 = vld [vmem:[%s3] sm:$0xff]
  %v908 = vld [vmem:[%s3 + $0x8] sm:$0xff]
  %v910 = vsel %vm68, %v906, 0
  %912 = vmatprep.subr.mxu0 0.0
  %913 = vmatpush1.msra.mxu0 %v907
  %914 = vmatprep.subr.mxu0 0.0
  %915 = vmatpush1.msra.mxu0 %v908
  %916 = vmatprep.subr.mxu0 0.0
  %917 = vmatpush1.msra.mxu0 0.0
  %918 = vmatprep.subr.mxu0 0.0
  %919 = vmatpush1.msra.mxu0 0.0
  %920 = vmatprep.subr.mxu0 0.0
  %921 = vmatpush1.msra.mxu0 0.0
  %922 = vmatprep.subr.mxu0 0.0
  %923 = vmatpush1.msra.mxu0 0.0
  %924 = vmatprep.subr.mxu0 0.0
  %925 = vmatpush1.msra.mxu0 0.0
  %926 = vmatprep.subr.mxu0 0.0
  %927 = vmatpush1.msra.mxu0 0.0
  %928 = vmatprep.subr.mxu0 0.0
  %929 = vmatpush1.msra.mxu0 0.0
  %930 = vmatprep.subr.mxu0 0.0
  %931 = vmatpush1.msra.mxu0 0.0
  %932 = vmatprep.subr.mxu0 0.0
  %933 = vmatpush1.msra.mxu0 0.0
  %934 = vmatprep.subr.mxu0 0.0
  %935 = vmatpush1.msra.mxu0 0.0
  %936 = vmatprep.subr.mxu0 0.0
  %937 = vmatpush1.msra.mxu0 0.0
  %938 = vmatprep.subr.mxu0 0.0
  %939 = vmatpush1.msra.mxu0 0.0
  %940 = vmatprep.subr.mxu0 0.0
  %941 = vmatpush1.msra.mxu0 0.0
  %942 = vmatprep.subr.mxu0 0.0
  %943 = vmatpush1.msra.mxu0 0.0
  %944 = vmatprep.subr.mxu0 0.0
  %945 = vmatpush1.msra.mxu0 0.0
  %946 = vmatprep.subr.mxu0 0.0
  %947 = vmatpush1.msra.mxu0 0.0
  %948 = vmatprep.subr.mxu0 0.0
  %949 = vmatpush1.msra.mxu0 0.0
  %950 = vmatprep.subr.mxu0 0.0
  %951 = vmatpush1.msra.mxu0 0.0
  %952 = vmatprep.subr.mxu0 0.0
  %953 = vmatpush1.msra.mxu0 0.0
  %954 = vmatprep.subr.mxu0 0.0
  %955 = vmatpush1.msra.mxu0 0.0
  %956 = vmatprep.subr.mxu0 0.0
  %957 = vmatpush1.msra.mxu0 0.0
  %958 = vmatprep.subr.mxu0 0.0
  %959 = vmatpush1.msra.mxu0 0.0
  %960 = vmatprep.subr.mxu0 0.0
  %961 = vmatpush1.msra.mxu0 0.0
  %962 = vmatprep.subr.mxu0 0.0
  %963 = vmatpush1.msra.mxu0 0.0
  %964 = vmatprep.subr.mxu0 0.0
  %965 = vmatpush1.msra.mxu0 0.0
  %966 = vmatprep.subr.mxu0 0.0
  %967 = vmatpush1.msra.mxu0 0.0
  %968 = vmatprep.subr.mxu0 0.0
  %969 = vmatpush1.msra.mxu0 0.0
  %970 = vmatprep.subr.mxu0 0.0
  %971 = vmatpush1.msra.mxu0 0.0
  %972 = vmatprep.subr.mxu0 0.0
  %973 = vmatpush1.msra.mxu0 0.0
  %974 = vmatprep.subr.mxu0 0.0
  %975 = vmatpush1.msra.mxu0 0.0
  %976 = vmatprep.mubr.f32.mxu0 0.0
  %977 = vmatmul.mubr.f32.gmra.mrb[0].mxu0 %v910
  %v978 = vpop.f32.mrb[0].mxu0
  %v979 = vadd.f32 0.0, %v978
  %v980 = vpop.f32.mrb[0].mxu0
  %981 = vdwg.mxu0
  %v982 = vadd.f32 %v905, %v979
  %v983 = vxor.u32 %v982, 2147483648
  %v984 = vmul.f32 %v983, 1.442695
  %v985 = vpow.pop %v984
  %v986 = vadd.f32 %v985, 1.0
  %v987 = vrcp.pop %v986
  %v988 = vmul.f32 1.0, %v987
  %v989 = vtanh.pop %v982
  %v990 = vld [vmem:[#allocation5] sm:$0x3]
  %992 = vrot.lane.b32.xlu0 %v990, 16
  %v993 = vpop.permute.xlu0 %992
  %v995 = vmul.f32 %v988, %v993
  %997 = vrot.lane.b32.xlu0 %v989, 80
  %v998 = vpop.permute.xlu0 %997
  %v1000 = vmul.f32 %v988, %v998
  %1002 = vrot.lane.b32.xlu0 %v1000, 16
  %v1003 = vpop.permute.xlu0 %1002
  %v1005 = vadd.f32 %v995, %v1003
  %v1006 = vtanh.pop %v1005
  %1008 = vrot.lane.b32.xlu0 %v1006, 16
  %v1009 = vpop.permute.xlu0 %1008
  %v1011 = vmul.f32 %v988, %v1009
  %1013 = vrot.lane.b32.xlu0 %v1011, 96
  %v1014 = vpop.permute.xlu0 %1013
  %1016 = vst.msk [vmem:[#allocation3] sm:$0x3] %vm176, %v1014
  %1018 = vrot.lane.b32.xlu0 %v1005, 112
  %v1019 = vpop.permute.xlu0 %1018
  %1021 = vst.msk [vmem:[#allocation5] sm:$0x3] %vm176, %v1019
  %s1022 = scalar_lea.vmem %s52, 8
  %1023 = vst.msk [vmem:[%s1022] sm:$0x3] %vm176, %v1014
  %s1024 = scalar_lea.vmem %s0, 8
  %v1025 = vld [vmem:[%s1024] sm:$0x3]
  %v1026 = vld [vmem:[#allocation2] sm:$0x3]
  %v1027 = vld [vmem:[%s2] sm:$0xff]
  %v1028 = vld [vmem:[%s2 + $0x8] sm:$0xff]
  %v1030 = vsel %vm68, %v1026, 0
  %1032 = vmatprep.subr.mxu0 0.0
  %1033 = vmatpush1.msra.mxu0 %v1027
  %1034 = vmatprep.subr.mxu0 0.0
  %1035 = vmatpush1.msra.mxu0 %v1028
  %1036 = vmatprep.subr.mxu0 0.0
  %1037 = vmatpush1.msra.mxu0 0.0
  %1038 = vmatprep.subr.mxu0 0.0
  %1039 = vmatpush1.msra.mxu0 0.0
  %1040 = vmatprep.subr.mxu0 0.0
  %1041 = vmatpush1.msra.mxu0 0.0
  %1042 = vmatprep.subr.mxu0 0.0
  %1043 = vmatpush1.msra.mxu0 0.0
  %1044 = vmatprep.subr.mxu0 0.0
  %1045 = vmatpush1.msra.mxu0 0.0
  %1046 = vmatprep.subr.mxu0 0.0
  %1047 = vmatpush1.msra.mxu0 0.0
  %1048 = vmatprep.subr.mxu0 0.0
  %1049 = vmatpush1.msra.mxu0 0.0
  %1050 = vmatprep.subr.mxu0 0.0
  %1051 = vmatpush1.msra.mxu0 0.0
  %1052 = vmatprep.subr.mxu0 0.0
  %1053 = vmatpush1.msra.mxu0 0.0
  %1054 = vmatprep.subr.mxu0 0.0
  %1055 = vmatpush1.msra.mxu0 0.0
  %1056 = vmatprep.subr.mxu0 0.0
  %1057 = vmatpush1.msra.mxu0 0.0
  %1058 = vmatprep.subr.mxu0 0.0
  %1059 = vmatpush1.msra.mxu0 0.0
  %1060 = vmatprep.subr.mxu0 0.0
  %1061 = vmatpush1.msra.mxu0 0.0
  %1062 = vmatprep.subr.mxu0 0.0
  %1063 = vmatpush1.msra.mxu0 0.0
  %1064 = vmatprep.subr.mxu0 0.0
  %1065 = vmatpush1.msra.mxu0 0.0
  %1066 = vmatprep.subr.mxu0 0.0
  %1067 = vmatpush1.msra.mxu0 0.0
  %1068 = vmatprep.subr.mxu0 0.0
  %1069 = vmatpush1.msra.mxu0 0.0
  %1070 = vmatprep.subr.mxu0 0.0
  %1071 = vmatpush1.msra.mxu0 0.0
  %1072 = vmatprep.subr.mxu0 0.0
  %1073 = vmatpush1.msra.mxu0 0.0
  %1074 = vmatprep.subr.mxu0 0.0
  %1075 = vmatpush1.msra.mxu0 0.0
  %1076 = vmatprep.subr.mxu0 0.0
  %1077 = vmatpush1.msra.mxu0 0.0
  %1078 = vmatprep.subr.mxu0 0.0
  %1079 = vmatpush1.msra.mxu0 0.0
  %1080 = vmatprep.subr.mxu0 0.0
  %1081 = vmatpush1.msra.mxu0 0.0
  %1082 = vmatprep.subr.mxu0 0.0
  %1083 = vmatpush1.msra.mxu0 0.0
  %1084 = vmatprep.subr.mxu0 0.0
  %1085 = vmatpush1.msra.mxu0 0.0
  %1086 = vmatprep.subr.mxu0 0.0
  %1087 = vmatpush1.msra.mxu0 0.0
  %1088 = vmatprep.subr.mxu0 0.0
  %1089 = vmatpush1.msra.mxu0 0.0
  %1090 = vmatprep.subr.mxu0 0.0
  %1091 = vmatpush1.msra.mxu0 0.0
  %1092 = vmatprep.subr.mxu0 0.0
  %1093 = vmatpush1.msra.mxu0 0.0
  %1094 = vmatprep.subr.mxu0 0.0
  %1095 = vmatpush1.msra.mxu0 0.0
  %1096 = vmatprep.mubr.f32.mxu0 0.0
  %1097 = vmatmul.mubr.f32.gmra.mrb[0].mxu0 %v1030
  %v1098 = vpop.f32.mrb[0].mxu0
  %v1099 = vadd.f32 0.0, %v1098
  %v1100 = vpop.f32.mrb[0].mxu0
  %1101 = vdwg.mxu0
  %v1102 = vadd.f32 %v1025, %v1099
  %v1103 = vxor.u32 %v1102, 2147483648
  %v1104 = vmul.f32 %v1103, 1.442695
  %v1105 = vpow.pop %v1104
  %v1106 = vadd.f32 %v1105, 1.0
  %v1107 = vrcp.pop %v1106
  %v1108 = vmul.f32 1.0, %v1107
  %v1109 = vtanh.pop %v1102
  %v1110 = vld [vmem:[#allocation4] sm:$0x3]
  %1112 = vrot.lane.b32.xlu0 %v1110, 16
  %v1113 = vpop.permute.xlu0 %1112
  %v1115 = vmul.f32 %v1108, %v1113
  %1117 = vrot.lane.b32.xlu0 %v1109, 80
  %v1118 = vpop.permute.xlu0 %1117
  %v1120 = vmul.f32 %v1108, %v1118
  %1122 = vrot.lane.b32.xlu0 %v1120, 16
  %v1123 = vpop.permute.xlu0 %1122
  %v1125 = vadd.f32 %v1115, %v1123
  %v1126 = vtanh.pop %v1125
  %1128 = vrot.lane.b32.xlu0 %v1126, 16
  %v1129 = vpop.permute.xlu0 %1128
  %v1131 = vmul.f32 %v1108, %v1129
  %1133 = vrot.lane.b32.xlu0 %v1131, 96
  %v1134 = vpop.permute.xlu0 %1133
  %1136 = vst.msk [vmem:[#allocation2] sm:$0x3] %vm176, %v1134
  %1138 = vrot.lane.b32.xlu0 %v1125, 112
  %v1139 = vpop.permute.xlu0 %1138
  %1141 = vst.msk [vmem:[#allocation4] sm:$0x3] %vm176, %v1139
  %s1142 = scalar_lea.vmem %s4, 8
  %1143 = vst.msk [vmem:[%s1142] sm:$0x3] %vm176, %v1134
  %s1144 = scalar_lea.vmem %s44, 6
  %v1145 = vld [vmem:[%s1144] sm:$0x3]
  %v1146 = vld [vmem:[#allocation3] sm:$0x3]
  %v1147 = vld [vmem:[%s3] sm:$0xff]
  %v1148 = vld [vmem:[%s3 + $0x8] sm:$0xff]
  %v1150 = vsel %vm68, %v1146, 0
  %1152 = vmatprep.subr.mxu0 0.0
  %1153 = vmatpush1.msra.mxu0 %v1147
  %1154 = vmatprep.subr.mxu0 0.0
  %1155 = vmatpush1.msra.mxu0 %v1148
  %1156 = vmatprep.subr.mxu0 0.0
  %1157 = vmatpush1.msra.mxu0 0.0
  %1158 = vmatprep.subr.mxu0 0.0
  %1159 = vmatpush1.msra.mxu0 0.0
  %1160 = vmatprep.subr.mxu0 0.0
  %1161 = vmatpush1.msra.mxu0 0.0
  %1162 = vmatprep.subr.mxu0 0.0
  %1163 = vmatpush1.msra.mxu0 0.0
  %1164 = vmatprep.subr.mxu0 0.0
  %1165 = vmatpush1.msra.mxu0 0.0
  %1166 = vmatprep.subr.mxu0 0.0
  %1167 = vmatpush1.msra.mxu0 0.0
  %1168 = vmatprep.subr.mxu0 0.0
  %1169 = vmatpush1.msra.mxu0 0.0
  %1170 = vmatprep.subr.mxu0 0.0
  %1171 = vmatpush1.msra.mxu0 0.0
  %1172 = vmatprep.subr.mxu0 0.0
  %1173 = vmatpush1.msra.mxu0 0.0
  %1174 = vmatprep.subr.mxu0 0.0
  %1175 = vmatpush1.msra.mxu0 0.0
  %1176 = vmatprep.subr.mxu0 0.0
  %1177 = vmatpush1.msra.mxu0 0.0
  %1178 = vmatprep.subr.mxu0 0.0
  %1179 = vmatpush1.msra.mxu0 0.0
  %1180 = vmatprep.subr.mxu0 0.0
  %1181 = vmatpush1.msra.mxu0 0.0
  %1182 = vmatprep.subr.mxu0 0.0
  %1183 = vmatpush1.msra.mxu0 0.0
  %1184 = vmatprep.subr.mxu0 0.0
  %1185 = vmatpush1.msra.mxu0 0.0
  %1186 = vmatprep.subr.mxu0 0.0
  %1187 = vmatpush1.msra.mxu0 0.0
  %1188 = vmatprep.subr.mxu0 0.0
  %1189 = vmatpush1.msra.mxu0 0.0
  %1190 = vmatprep.subr.mxu0 0.0
  %1191 = vmatpush1.msra.mxu0 0.0
  %1192 = vmatprep.subr.mxu0 0.0
  %1193 = vmatpush1.msra.mxu0 0.0
  %1194 = vmatprep.subr.mxu0 0.0
  %1195 = vmatpush1.msra.mxu0 0.0
  %1196 = vmatprep.subr.mxu0 0.0
  %1197 = vmatpush1.msra.mxu0 0.0
  %1198 = vmatprep.subr.mxu0 0.0
  %1199 = vmatpush1.msra.mxu0 0.0
  %1200 = vmatprep.subr.mxu0 0.0
  %1201 = vmatpush1.msra.mxu0 0.0
  %1202 = vmatprep.subr.mxu0 0.0
  %1203 = vmatpush1.msra.mxu0 0.0
  %1204 = vmatprep.subr.mxu0 0.0
  %1205 = vmatpush1.msra.mxu0 0.0
  %1206 = vmatprep.subr.mxu0 0.0
  %1207 = vmatpush1.msra.mxu0 0.0
  %1208 = vmatprep.subr.mxu0 0.0
  %1209 = vmatpush1.msra.mxu0 0.0
  %1210 = vmatprep.subr.mxu0 0.0
  %1211 = vmatpush1.msra.mxu0 0.0
  %1212 = vmatprep.subr.mxu0 0.0
  %1213 = vmatpush1.msra.mxu0 0.0
  %1214 = vmatprep.subr.mxu0 0.0
  %1215 = vmatpush1.msra.mxu0 0.0
  %1216 = vmatprep.mubr.f32.mxu0 0.0
  %1217 = vmatmul.mubr.f32.gmra.mrb[0].mxu0 %v1150
  %v1218 = vpop.f32.mrb[0].mxu0
  %v1219 = vadd.f32 0.0, %v1218
  %v1220 = vpop.f32.mrb[0].mxu0
  %1221 = vdwg.mxu0
  %v1222 = vadd.f32 %v1145, %v1219
  %v1223 = vxor.u32 %v1222, 2147483648
  %v1224 = vmul.f32 %v1223, 1.442695
  %v1225 = vpow.pop %v1224
  %v1226 = vadd.f32 %v1225, 1.0
  %v1227 = vrcp.pop %v1226
  %v1228 = vmul.f32 1.0, %v1227
  %v1229 = vtanh.pop %v1222
  %v1230 = vld [vmem:[#allocation5] sm:$0x3]
  %1232 = vrot.lane.b32.xlu0 %v1230, 16
  %v1233 = vpop.permute.xlu0 %1232
  %v1235 = vmul.f32 %v1228, %v1233
  %1237 = vrot.lane.b32.xlu0 %v1229, 80
  %v1238 = vpop.permute.xlu0 %1237
  %v1240 = vmul.f32 %v1228, %v1238
  %1242 = vrot.lane.b32.xlu0 %v1240, 16
  %v1243 = vpop.permute.xlu0 %1242
  %v1245 = vadd.f32 %v1235, %v1243
  %v1246 = vtanh.pop %v1245
  %1248 = vrot.lane.b32.xlu0 %v1246, 16
  %v1249 = vpop.permute.xlu0 %1248
  %v1251 = vmul.f32 %v1228, %v1249
  %1253 = vrot.lane.b32.xlu0 %v1251, 96
  %v1254 = vpop.permute.xlu0 %1253
  %1256 = vst.msk [vmem:[#allocation3] sm:$0x3] %vm176, %v1254
  %1258 = vrot.lane.b32.xlu0 %v1245, 112
  %v1259 = vpop.permute.xlu0 %1258
  %1261 = vst.msk [vmem:[#allocation5] sm:$0x3] %vm176, %v1259
  %s1262 = scalar_lea.vmem %s52, 6
  %1263 = vst.msk [vmem:[%s1262] sm:$0x3] %vm176, %v1254
  %s1264 = scalar_lea.vmem %s0, 10
  %v1265 = vld [vmem:[%s1264] sm:$0x3]
  %v1266 = vld [vmem:[#allocation2] sm:$0x3]
  %v1267 = vld [vmem:[%s2] sm:$0xff]
  %v1268 = vld [vmem:[%s2 + $0x8] sm:$0xff]
  %v1270 = vsel %vm68, %v1266, 0
  %1272 = vmatprep.subr.mxu0 0.0
  %1273 = vmatpush1.msra.mxu0 %v1267
  %1274 = vmatprep.subr.mxu0 0.0
  %1275 = vmatpush1.msra.mxu0 %v1268
  %1276 = vmatprep.subr.mxu0 0.0
  %1277 = vmatpush1.msra.mxu0 0.0
  %1278 = vmatprep.subr.mxu0 0.0
  %1279 = vmatpush1.msra.mxu0 0.0
  %1280 = vmatprep.subr.mxu0 0.0
  %1281 = vmatpush1.msra.mxu0 0.0
  %1282 = vmatprep.subr.mxu0 0.0
  %1283 = vmatpush1.msra.mxu0 0.0
  %1284 = vmatprep.subr.mxu0 0.0
  %1285 = vmatpush1.msra.mxu0 0.0
  %1286 = vmatprep.subr.mxu0 0.0
  %1287 = vmatpush1.msra.mxu0 0.0
  %1288 = vmatprep.subr.mxu0 0.0
  %1289 = vmatpush1.msra.mxu0 0.0
  %1290 = vmatprep.subr.mxu0 0.0
  %1291 = vmatpush1.msra.mxu0 0.0
  %1292 = vmatprep.subr.mxu0 0.0
  %1293 = vmatpush1.msra.mxu0 0.0
  %1294 = vmatprep.subr.mxu0 0.0
  %1295 = vmatpush1.msra.mxu0 0.0
  %1296 = vmatprep.subr.mxu0 0.0
  %1297 = vmatpush1.msra.mxu0 0.0
  %1298 = vmatprep.subr.mxu0 0.0
  %1299 = vmatpush1.msra.mxu0 0.0
  %1300 = vmatprep.subr.mxu0 0.0
  %1301 = vmatpush1.msra.mxu0 0.0
  %1302 = vmatprep.subr.mxu0 0.0
  %1303 = vmatpush1.msra.mxu0 0.0
  %1304 = vmatprep.subr.mxu0 0.0
  %1305 = vmatpush1.msra.mxu0 0.0
  %1306 = vmatprep.subr.mxu0 0.0
  %1307 = vmatpush1.msra.mxu0 0.0
  %1308 = vmatprep.subr.mxu0 0.0
  %1309 = vmatpush1.msra.mxu0 0.0
  %1310 = vmatprep.subr.mxu0 0.0
  %1311 = vmatpush1.msra.mxu0 0.0
  %1312 = vmatprep.subr.mxu0 0.0
  %1313 = vmatpush1.msra.mxu0 0.0
  %1314 = vmatprep.subr.mxu0 0.0
  %1315 = vmatpush1.msra.mxu0 0.0
  %1316 = vmatprep.subr.mxu0 0.0
  %1317 = vmatpush1.msra.mxu0 0.0
  %1318 = vmatprep.subr.mxu0 0.0
  %1319 = vmatpush1.msra.mxu0 0.0
  %1320 = vmatprep.subr.mxu0 0.0
  %1321 = vmatpush1.msra.mxu0 0.0
  %1322 = vmatprep.subr.mxu0 0.0
  %1323 = vmatpush1.msra.mxu0 0.0
  %1324 = vmatprep.subr.mxu0 0.0
  %1325 = vmatpush1.msra.mxu0 0.0
  %1326 = vmatprep.subr.mxu0 0.0
  %1327 = vmatpush1.msra.mxu0 0.0
  %1328 = vmatprep.subr.mxu0 0.0
  %1329 = vmatpush1.msra.mxu0 0.0
  %1330 = vmatprep.subr.mxu0 0.0
  %1331 = vmatpush1.msra.mxu0 0.0
  %1332 = vmatprep.subr.mxu0 0.0
  %1333 = vmatpush1.msra.mxu0 0.0
  %1334 = vmatprep.subr.mxu0 0.0
  %1335 = vmatpush1.msra.mxu0 0.0
  %1336 = vmatprep.mubr.f32.mxu0 0.0
  %1337 = vmatmul.mubr.f32.gmra.mrb[0].mxu0 %v1270
  %v1338 = vpop.f32.mrb[0].mxu0
  %v1339 = vadd.f32 0.0, %v1338
  %v1340 = vpop.f32.mrb[0].mxu0
  %1341 = vdwg.mxu0
  %v1342 = vadd.f32 %v1265, %v1339
  %v1343 = vxor.u32 %v1342, 2147483648
  %v1344 = vmul.f32 %v1343, 1.442695
  %v1345 = vpow.pop %v1344
  %v1346 = vadd.f32 %v1345, 1.0
  %v1347 = vrcp.pop %v1346
  %v1348 = vmul.f32 1.0, %v1347
  %v1349 = vtanh.pop %v1342
  %v1350 = vld [vmem:[#allocation4] sm:$0x3]
  %1352 = vrot.lane.b32.xlu0 %v1350, 16
  %v1353 = vpop.permute.xlu0 %1352
  %v1355 = vmul.f32 %v1348, %v1353
  %1357 = vrot.lane.b32.xlu0 %v1349, 80
  %v1358 = vpop.permute.xlu0 %1357
  %v1360 = vmul.f32 %v1348, %v1358
  %1362 = vrot.lane.b32.xlu0 %v1360, 16
  %v1363 = vpop.permute.xlu0 %1362
  %v1365 = vadd.f32 %v1355, %v1363
  %v1366 = vtanh.pop %v1365
  %1368 = vrot.lane.b32.xlu0 %v1366, 16
  %v1369 = vpop.permute.xlu0 %1368
  %v1371 = vmul.f32 %v1348, %v1369
  %1373 = vrot.lane.b32.xlu0 %v1371, 96
  %v1374 = vpop.permute.xlu0 %1373
  %1376 = vst.msk [vmem:[#allocation2] sm:$0x3] %vm176, %v1374
  %1378 = vrot.lane.b32.xlu0 %v1365, 112
  %v1379 = vpop.permute.xlu0 %1378
  %1381 = vst.msk [vmem:[#allocation4] sm:$0x3] %vm176, %v1379
  %s1382 = scalar_lea.vmem %s4, 10
  %1383 = vst.msk [vmem:[%s1382] sm:$0x3] %vm176, %v1374
  %s1384 = scalar_lea.vmem %s44, 4
  %v1385 = vld [vmem:[%s1384] sm:$0x3]
  %v1386 = vld [vmem:[#allocation3] sm:$0x3]
  %v1387 = vld [vmem:[%s3] sm:$0xff]
  %v1388 = vld [vmem:[%s3 + $0x8] sm:$0xff]
  %v1390 = vsel %vm68, %v1386, 0
  %1392 = vmatprep.subr.mxu0 0.0
  %1393 = vmatpush1.msra.mxu0 %v1387
  %1394 = vmatprep.subr.mxu0 0.0
  %1395 = vmatpush1.msra.mxu0 %v1388
  %1396 = vmatprep.subr.mxu0 0.0
  %1397 = vmatpush1.msra.mxu0 0.0
  %1398 = vmatprep.subr.mxu0 0.0
  %1399 = vmatpush1.msra.mxu0 0.0
  %1400 = vmatprep.subr.mxu0 0.0
  %1401 = vmatpush1.msra.mxu0 0.0
  %1402 = vmatprep.subr.mxu0 0.0
  %1403 = vmatpush1.msra.mxu0 0.0
  %1404 = vmatprep.subr.mxu0 0.0
  %1405 = vmatpush1.msra.mxu0 0.0
  %1406 = vmatprep.subr.mxu0 0.0
  %1407 = vmatpush1.msra.mxu0 0.0
  %1408 = vmatprep.subr.mxu0 0.0
  %1409 = vmatpush1.msra.mxu0 0.0
  %1410 = vmatprep.subr.mxu0 0.0
  %1411 = vmatpush1.msra.mxu0 0.0
  %1412 = vmatprep.subr.mxu0 0.0
  %1413 = vmatpush1.msra.mxu0 0.0
  %1414 = vmatprep.subr.mxu0 0.0
  %1415 = vmatpush1.msra.mxu0 0.0
  %1416 = vmatprep.subr.mxu0 0.0
  %1417 = vmatpush1.msra.mxu0 0.0
  %1418 = vmatprep.subr.mxu0 0.0
  %1419 = vmatpush1.msra.mxu0 0.0
  %1420 = vmatprep.subr.mxu0 0.0
  %1421 = vmatpush1.msra.mxu0 0.0
  %1422 = vmatprep.subr.mxu0 0.0
  %1423 = vmatpush1.msra.mxu0 0.0
  %1424 = vmatprep.subr.mxu0 0.0
  %1425 = vmatpush1.msra.mxu0 0.0
  %1426 = vmatprep.subr.mxu0 0.0
  %1427 = vmatpush1.msra.mxu0 0.0
  %1428 = vmatprep.subr.mxu0 0.0
  %1429 = vmatpush1.msra.mxu0 0.0
  %1430 = vmatprep.subr.mxu0 0.0
  %1431 = vmatpush1.msra.mxu0 0.0
  %1432 = vmatprep.subr.mxu0 0.0
  %1433 = vmatpush1.msra.mxu0 0.0
  %1434 = vmatprep.subr.mxu0 0.0
  %1435 = vmatpush1.msra.mxu0 0.0
  %1436 = vmatprep.subr.mxu0 0.0
  %1437 = vmatpush1.msra.mxu0 0.0
  %1438 = vmatprep.subr.mxu0 0.0
  %1439 = vmatpush1.msra.mxu0 0.0
  %1440 = vmatprep.subr.mxu0 0.0
  %1441 = vmatpush1.msra.mxu0 0.0
  %1442 = vmatprep.subr.mxu0 0.0
  %1443 = vmatpush1.msra.mxu0 0.0
  %1444 = vmatprep.subr.mxu0 0.0
  %1445 = vmatpush1.msra.mxu0 0.0
  %1446 = vmatprep.subr.mxu0 0.0
  %1447 = vmatpush1.msra.mxu0 0.0
  %1448 = vmatprep.subr.mxu0 0.0
  %1449 = vmatpush1.msra.mxu0 0.0
  %1450 = vmatprep.subr.mxu0 0.0
  %1451 = vmatpush1.msra.mxu0 0.0
  %1452 = vmatprep.subr.mxu0 0.0
  %1453 = vmatpush1.msra.mxu0 0.0
  %1454 = vmatprep.subr.mxu0 0.0
  %1455 = vmatpush1.msra.mxu0 0.0
  %1456 = vmatprep.mubr.f32.mxu0 0.0
  %1457 = vmatmul.mubr.f32.gmra.mrb[0].mxu0 %v1390
  %v1458 = vpop.f32.mrb[0].mxu0
  %v1459 = vadd.f32 0.0, %v1458
  %v1460 = vpop.f32.mrb[0].mxu0
  %1461 = vdwg.mxu0
  %v1462 = vadd.f32 %v1385, %v1459
  %v1463 = vxor.u32 %v1462, 2147483648
  %v1464 = vmul.f32 %v1463, 1.442695
  %v1465 = vpow.pop %v1464
  %v1466 = vadd.f32 %v1465, 1.0
  %v1467 = vrcp.pop %v1466
  %v1468 = vmul.f32 1.0, %v1467
  %v1469 = vtanh.pop %v1462
  %v1470 = vld [vmem:[#allocation5] sm:$0x3]
  %1472 = vrot.lane.b32.xlu0 %v1470, 16
  %v1473 = vpop.permute.xlu0 %1472
  %v1475 = vmul.f32 %v1468, %v1473
  %1477 = vrot.lane.b32.xlu0 %v1469, 80
  %v1478 = vpop.permute.xlu0 %1477
  %v1480 = vmul.f32 %v1468, %v1478
  %1482 = vrot.lane.b32.xlu0 %v1480, 16
  %v1483 = vpop.permute.xlu0 %1482
  %v1485 = vadd.f32 %v1475, %v1483
  %v1486 = vtanh.pop %v1485
  %1488 = vrot.lane.b32.xlu0 %v1486, 16
  %v1489 = vpop.permute.xlu0 %1488
  %v1491 = vmul.f32 %v1468, %v1489
  %1493 = vrot.lane.b32.xlu0 %v1491, 96
  %v1494 = vpop.permute.xlu0 %1493
  %1496 = vst.msk [vmem:[#allocation3] sm:$0x3] %vm176, %v1494
  %1498 = vrot.lane.b32.xlu0 %v1485, 112
  %v1499 = vpop.permute.xlu0 %1498
  %1501 = vst.msk [vmem:[#allocation5] sm:$0x3] %vm176, %v1499
  %s1502 = scalar_lea.vmem %s52, 4
  %1503 = vst.msk [vmem:[%s1502] sm:$0x3] %vm176, %v1494
  %s1504 = scalar_lea.vmem %s0, 12
  %v1505 = vld [vmem:[%s1504] sm:$0x3]
  %v1506 = vld [vmem:[#allocation2] sm:$0x3]
  %v1507 = vld [vmem:[%s2] sm:$0xff]
  %v1508 = vld [vmem:[%s2 + $0x8] sm:$0xff]
  %v1510 = vsel %vm68, %v1506, 0
  %1512 = vmatprep.subr.mxu0 0.0
  %1513 = vmatpush1.msra.mxu0 %v1507
  %1514 = vmatprep.subr.mxu0 0.0
  %1515 = vmatpush1.msra.mxu0 %v1508
  %1516 = vmatprep.subr.mxu0 0.0
  %1517 = vmatpush1.msra.mxu0 0.0
  %1518 = vmatprep.subr.mxu0 0.0
  %1519 = vmatpush1.msra.mxu0 0.0
  %1520 = vmatprep.subr.mxu0 0.0
  %1521 = vmatpush1.msra.mxu0 0.0
  %1522 = vmatprep.subr.mxu0 0.0
  %1523 = vmatpush1.msra.mxu0 0.0
  %1524 = vmatprep.subr.mxu0 0.0
  %1525 = vmatpush1.msra.mxu0 0.0
  %1526 = vmatprep.subr.mxu0 0.0
  %1527 = vmatpush1.msra.mxu0 0.0
  %1528 = vmatprep.subr.mxu0 0.0
  %1529 = vmatpush1.msra.mxu0 0.0
  %1530 = vmatprep.subr.mxu0 0.0
  %1531 = vmatpush1.msra.mxu0 0.0
  %1532 = vmatprep.subr.mxu0 0.0
  %1533 = vmatpush1.msra.mxu0 0.0
  %1534 = vmatprep.subr.mxu0 0.0
  %1535 = vmatpush1.msra.mxu0 0.0
  %1536 = vmatprep.subr.mxu0 0.0
  %1537 = vmatpush1.msra.mxu0 0.0
  %1538 = vmatprep.subr.mxu0 0.0
  %1539 = vmatpush1.msra.mxu0 0.0
  %1540 = vmatprep.subr.mxu0 0.0
  %1541 = vmatpush1.msra.mxu0 0.0
  %1542 = vmatprep.subr.mxu0 0.0
  %1543 = vmatpush1.msra.mxu0 0.0
  %1544 = vmatprep.subr.mxu0 0.0
  %1545 = vmatpush1.msra.mxu0 0.0
  %1546 = vmatprep.subr.mxu0 0.0
  %1547 = vmatpush1.msra.mxu0 0.0
  %1548 = vmatprep.subr.mxu0 0.0
  %1549 = vmatpush1.msra.mxu0 0.0
  %1550 = vmatprep.subr.mxu0 0.0
  %1551 = vmatpush1.msra.mxu0 0.0
  %1552 = vmatprep.subr.mxu0 0.0
  %1553 = vmatpush1.msra.mxu0 0.0
  %1554 = vmatprep.subr.mxu0 0.0
  %1555 = vmatpush1.msra.mxu0 0.0
  %1556 = vmatprep.subr.mxu0 0.0
  %1557 = vmatpush1.msra.mxu0 0.0
  %1558 = vmatprep.subr.mxu0 0.0
  %1559 = vmatpush1.msra.mxu0 0.0
  %1560 = vmatprep.subr.mxu0 0.0
  %1561 = vmatpush1.msra.mxu0 0.0
  %1562 = vmatprep.subr.mxu0 0.0
  %1563 = vmatpush1.msra.mxu0 0.0
  %1564 = vmatprep.subr.mxu0 0.0
  %1565 = vmatpush1.msra.mxu0 0.0
  %1566 = vmatprep.subr.mxu0 0.0
  %1567 = vmatpush1.msra.mxu0 0.0
  %1568 = vmatprep.subr.mxu0 0.0
  %1569 = vmatpush1.msra.mxu0 0.0
  %1570 = vmatprep.subr.mxu0 0.0
  %1571 = vmatpush1.msra.mxu0 0.0
  %1572 = vmatprep.subr.mxu0 0.0
  %1573 = vmatpush1.msra.mxu0 0.0
  %1574 = vmatprep.subr.mxu0 0.0
  %1575 = vmatpush1.msra.mxu0 0.0
  %1576 = vmatprep.mubr.f32.mxu0 0.0
  %1577 = vmatmul.mubr.f32.gmra.mrb[0].mxu0 %v1510
  %v1578 = vpop.f32.mrb[0].mxu0
  %v1579 = vadd.f32 0.0, %v1578
  %v1580 = vpop.f32.mrb[0].mxu0
  %1581 = vdwg.mxu0
  %v1582 = vadd.f32 %v1505, %v1579
  %v1583 = vxor.u32 %v1582, 2147483648
  %v1584 = vmul.f32 %v1583, 1.442695
  %v1585 = vpow.pop %v1584
  %v1586 = vadd.f32 %v1585, 1.0
  %v1587 = vrcp.pop %v1586
  %v1588 = vmul.f32 1.0, %v1587
  %v1589 = vtanh.pop %v1582
  %v1590 = vld [vmem:[#allocation4] sm:$0x3]
  %1592 = vrot.lane.b32.xlu0 %v1590, 16
  %v1593 = vpop.permute.xlu0 %1592
  %v1595 = vmul.f32 %v1588, %v1593
  %1597 = vrot.lane.b32.xlu0 %v1589, 80
  %v1598 = vpop.permute.xlu0 %1597
  %v1600 = vmul.f32 %v1588, %v1598
  %1602 = vrot.lane.b32.xlu0 %v1600, 16
  %v1603 = vpop.permute.xlu0 %1602
  %v1605 = vadd.f32 %v1595, %v1603
  %v1606 = vtanh.pop %v1605
  %1608 = vrot.lane.b32.xlu0 %v1606, 16
  %v1609 = vpop.permute.xlu0 %1608
  %v1611 = vmul.f32 %v1588, %v1609
  %1613 = vrot.lane.b32.xlu0 %v1611, 96
  %v1614 = vpop.permute.xlu0 %1613
  %1616 = vst.msk [vmem:[#allocation2] sm:$0x3] %vm176, %v1614
  %1618 = vrot.lane.b32.xlu0 %v1605, 112
  %v1619 = vpop.permute.xlu0 %1618
  %1621 = vst.msk [vmem:[#allocation4] sm:$0x3] %vm176, %v1619
  %s1622 = scalar_lea.vmem %s4, 12
  %1623 = vst.msk [vmem:[%s1622] sm:$0x3] %vm176, %v1614
  %s1624 = scalar_lea.vmem %s44, 2
  %v1625 = vld [vmem:[%s1624] sm:$0x3]
  %v1626 = vld [vmem:[#allocation3] sm:$0x3]
  %v1627 = vld [vmem:[%s3] sm:$0xff]
  %v1628 = vld [vmem:[%s3 + $0x8] sm:$0xff]
  %v1630 = vsel %vm68, %v1626, 0
  %1632 = vmatprep.subr.mxu0 0.0
  %1633 = vmatpush1.msra.mxu0 %v1627
  %1634 = vmatprep.subr.mxu0 0.0
  %1635 = vmatpush1.msra.mxu0 %v1628
  %1636 = vmatprep.subr.mxu0 0.0
  %1637 = vmatpush1.msra.mxu0 0.0
  %1638 = vmatprep.subr.mxu0 0.0
  %1639 = vmatpush1.msra.mxu0 0.0
  %1640 = vmatprep.subr.mxu0 0.0
  %1641 = vmatpush1.msra.mxu0 0.0
  %1642 = vmatprep.subr.mxu0 0.0
  %1643 = vmatpush1.msra.mxu0 0.0
  %1644 = vmatprep.subr.mxu0 0.0
  %1645 = vmatpush1.msra.mxu0 0.0
  %1646 = vmatprep.subr.mxu0 0.0
  %1647 = vmatpush1.msra.mxu0 0.0
  %1648 = vmatprep.subr.mxu0 0.0
  %1649 = vmatpush1.msra.mxu0 0.0
  %1650 = vmatprep.subr.mxu0 0.0
  %1651 = vmatpush1.msra.mxu0 0.0
  %1652 = vmatprep.subr.mxu0 0.0
  %1653 = vmatpush1.msra.mxu0 0.0
  %1654 = vmatprep.subr.mxu0 0.0
  %1655 = vmatpush1.msra.mxu0 0.0
  %1656 = vmatprep.subr.mxu0 0.0
  %1657 = vmatpush1.msra.mxu0 0.0
  %1658 = vmatprep.subr.mxu0 0.0
  %1659 = vmatpush1.msra.mxu0 0.0
  %1660 = vmatprep.subr.mxu0 0.0
  %1661 = vmatpush1.msra.mxu0 0.0
  %1662 = vmatprep.subr.mxu0 0.0
  %1663 = vmatpush1.msra.mxu0 0.0
  %1664 = vmatprep.subr.mxu0 0.0
  %1665 = vmatpush1.msra.mxu0 0.0
  %1666 = vmatprep.subr.mxu0 0.0
  %1667 = vmatpush1.msra.mxu0 0.0
  %1668 = vmatprep.subr.mxu0 0.0
  %1669 = vmatpush1.msra.mxu0 0.0
  %1670 = vmatprep.subr.mxu0 0.0
  %1671 = vmatpush1.msra.mxu0 0.0
  %1672 = vmatprep.subr.mxu0 0.0
  %1673 = vmatpush1.msra.mxu0 0.0
  %1674 = vmatprep.subr.mxu0 0.0
  %1675 = vmatpush1.msra.mxu0 0.0
  %1676 = vmatprep.subr.mxu0 0.0
  %1677 = vmatpush1.msra.mxu0 0.0
  %1678 = vmatprep.subr.mxu0 0.0
  %1679 = vmatpush1.msra.mxu0 0.0
  %1680 = vmatprep.subr.mxu0 0.0
  %1681 = vmatpush1.msra.mxu0 0.0
  %1682 = vmatprep.subr.mxu0 0.0
  %1683 = vmatpush1.msra.mxu0 0.0
  %1684 = vmatprep.subr.mxu0 0.0
  %1685 = vmatpush1.msra.mxu0 0.0
  %1686 = vmatprep.subr.mxu0 0.0
  %1687 = vmatpush1.msra.mxu0 0.0
  %1688 = vmatprep.subr.mxu0 0.0
  %1689 = vmatpush1.msra.mxu0 0.0
  %1690 = vmatprep.subr.mxu0 0.0
  %1691 = vmatpush1.msra.mxu0 0.0
  %1692 = vmatprep.subr.mxu0 0.0
  %1693 = vmatpush1.msra.mxu0 0.0
  %1694 = vmatprep.subr.mxu0 0.0
  %1695 = vmatpush1.msra.mxu0 0.0
  %1696 = vmatprep.mubr.f32.mxu0 0.0
  %1697 = vmatmul.mubr.f32.gmra.mrb[0].mxu0 %v1630
  %v1698 = vpop.f32.mrb[0].mxu0
  %v1699 = vadd.f32 0.0, %v1698
  %v1700 = vpop.f32.mrb[0].mxu0
  %1701 = vdwg.mxu0
  %v1702 = vadd.f32 %v1625, %v1699
  %v1703 = vxor.u32 %v1702, 2147483648
  %v1704 = vmul.f32 %v1703, 1.442695
  %v1705 = vpow.pop %v1704
  %v1706 = vadd.f32 %v1705, 1.0
  %v1707 = vrcp.pop %v1706
  %v1708 = vmul.f32 1.0, %v1707
  %v1709 = vtanh.pop %v1702
  %v1710 = vld [vmem:[#allocation5] sm:$0x3]
  %1712 = vrot.lane.b32.xlu0 %v1710, 16
  %v1713 = vpop.permute.xlu0 %1712
  %v1715 = vmul.f32 %v1708, %v1713
  %1717 = vrot.lane.b32.xlu0 %v1709, 80
  %v1718 = vpop.permute.xlu0 %1717
  %v1720 = vmul.f32 %v1708, %v1718
  %1722 = vrot.lane.b32.xlu0 %v1720, 16
  %v1723 = vpop.permute.xlu0 %1722
  %v1725 = vadd.f32 %v1715, %v1723
  %v1726 = vtanh.pop %v1725
  %1728 = vrot.lane.b32.xlu0 %v1726, 16
  %v1729 = vpop.permute.xlu0 %1728
  %v1731 = vmul.f32 %v1708, %v1729
  %1733 = vrot.lane.b32.xlu0 %v1731, 96
  %v1734 = vpop.permute.xlu0 %1733
  %1736 = vst.msk [vmem:[#allocation3] sm:$0x3] %vm176, %v1734
  %1738 = vrot.lane.b32.xlu0 %v1725, 112
  %v1739 = vpop.permute.xlu0 %1738
  %1741 = vst.msk [vmem:[#allocation5] sm:$0x3] %vm176, %v1739
  %s1742 = scalar_lea.vmem %s52, 2
  %1743 = vst.msk [vmem:[%s1742] sm:$0x3] %vm176, %v1734
  %s1744 = scalar_lea.vmem %s0, 14
  %v1745 = vld [vmem:[%s1744] sm:$0x3]
  %v1746 = vld [vmem:[#allocation2] sm:$0x3]
  %v1747 = vld [vmem:[%s2] sm:$0xff]
  %v1748 = vld [vmem:[%s2 + $0x8] sm:$0xff]
  %v1750 = vsel %vm68, %v1746, 0
  %1752 = vmatprep.subr.mxu0 0.0
  %1753 = vmatpush1.msra.mxu0 %v1747
  %1754 = vmatprep.subr.mxu0 0.0
  %1755 = vmatpush1.msra.mxu0 %v1748
  %1756 = vmatprep.subr.mxu0 0.0
  %1757 = vmatpush1.msra.mxu0 0.0
  %1758 = vmatprep.subr.mxu0 0.0
  %1759 = vmatpush1.msra.mxu0 0.0
  %1760 = vmatprep.subr.mxu0 0.0
  %1761 = vmatpush1.msra.mxu0 0.0
  %1762 = vmatprep.subr.mxu0 0.0
  %1763 = vmatpush1.msra.mxu0 0.0
  %1764 = vmatprep.subr.mxu0 0.0
  %1765 = vmatpush1.msra.mxu0 0.0
  %1766 = vmatprep.subr.mxu0 0.0
  %1767 = vmatpush1.msra.mxu0 0.0
  %1768 = vmatprep.subr.mxu0 0.0
  %1769 = vmatpush1.msra.mxu0 0.0
  %1770 = vmatprep.subr.mxu0 0.0
  %1771 = vmatpush1.msra.mxu0 0.0
  %1772 = vmatprep.subr.mxu0 0.0
  %1773 = vmatpush1.msra.mxu0 0.0
  %1774 = vmatprep.subr.mxu0 0.0
  %1775 = vmatpush1.msra.mxu0 0.0
  %1776 = vmatprep.subr.mxu0 0.0
  %1777 = vmatpush1.msra.mxu0 0.0
  %1778 = vmatprep.subr.mxu0 0.0
  %1779 = vmatpush1.msra.mxu0 0.0
  %1780 = vmatprep.subr.mxu0 0.0
  %1781 = vmatpush1.msra.mxu0 0.0
  %1782 = vmatprep.subr.mxu0 0.0
  %1783 = vmatpush1.msra.mxu0 0.0
  %1784 = vmatprep.subr.mxu0 0.0
  %1785 = vmatpush1.msra.mxu0 0.0
  %1786 = vmatprep.subr.mxu0 0.0
  %1787 = vmatpush1.msra.mxu0 0.0
  %1788 = vmatprep.subr.mxu0 0.0
  %1789 = vmatpush1.msra.mxu0 0.0
  %1790 = vmatprep.subr.mxu0 0.0
  %1791 = vmatpush1.msra.mxu0 0.0
  %1792 = vmatprep.subr.mxu0 0.0
  %1793 = vmatpush1.msra.mxu0 0.0
  %1794 = vmatprep.subr.mxu0 0.0
  %1795 = vmatpush1.msra.mxu0 0.0
  %1796 = vmatprep.subr.mxu0 0.0
  %1797 = vmatpush1.msra.mxu0 0.0
  %1798 = vmatprep.subr.mxu0 0.0
  %1799 = vmatpush1.msra.mxu0 0.0
  %1800 = vmatprep.subr.mxu0 0.0
  %1801 = vmatpush1.msra.mxu0 0.0
  %1802 = vmatprep.subr.mxu0 0.0
  %1803 = vmatpush1.msra.mxu0 0.0
  %1804 = vmatprep.subr.mxu0 0.0
  %1805 = vmatpush1.msra.mxu0 0.0
  %1806 = vmatprep.subr.mxu0 0.0
  %1807 = vmatpush1.msra.mxu0 0.0
  %1808 = vmatprep.subr.mxu0 0.0
  %1809 = vmatpush1.msra.mxu0 0.0
  %1810 = vmatprep.subr.mxu0 0.0
  %1811 = vmatpush1.msra.mxu0 0.0
  %1812 = vmatprep.subr.mxu0 0.0
  %1813 = vmatpush1.msra.mxu0 0.0
  %1814 = vmatprep.subr.mxu0 0.0
  %1815 = vmatpush1.msra.mxu0 0.0
  %1816 = vmatprep.mubr.f32.mxu0 0.0
  %1817 = vmatmul.mubr.f32.gmra.mrb[0].mxu0 %v1750
  %v1818 = vpop.f32.mrb[0].mxu0
  %v1819 = vadd.f32 0.0, %v1818
  %v1820 = vpop.f32.mrb[0].mxu0
  %1821 = vdwg.mxu0
  %v1822 = vadd.f32 %v1745, %v1819
  %v1823 = vxor.u32 %v1822, 2147483648
  %v1824 = vmul.f32 %v1823, 1.442695
  %v1825 = vpow.pop %v1824
  %v1826 = vadd.f32 %v1825, 1.0
  %v1827 = vrcp.pop %v1826
  %v1828 = vmul.f32 1.0, %v1827
  %v1829 = vtanh.pop %v1822
  %v1830 = vld [vmem:[#allocation4] sm:$0x3]
  %1832 = vrot.lane.b32.xlu0 %v1830, 16
  %v1833 = vpop.permute.xlu0 %1832
  %v1835 = vmul.f32 %v1828, %v1833
  %1837 = vrot.lane.b32.xlu0 %v1829, 80
  %v1838 = vpop.permute.xlu0 %1837
  %v1840 = vmul.f32 %v1828, %v1838
  %1842 = vrot.lane.b32.xlu0 %v1840, 16
  %v1843 = vpop.permute.xlu0 %1842
  %v1845 = vadd.f32 %v1835, %v1843
  %v1846 = vtanh.pop %v1845
  %1848 = vrot.lane.b32.xlu0 %v1846, 16
  %v1849 = vpop.permute.xlu0 %1848
  %v1851 = vmul.f32 %v1828, %v1849
  %1853 = vrot.lane.b32.xlu0 %v1851, 96
  %v1854 = vpop.permute.xlu0 %1853
  %1856 = vst.msk [vmem:[#allocation2] sm:$0x3] %vm176, %v1854
  %1858 = vrot.lane.b32.xlu0 %v1845, 112
  %v1859 = vpop.permute.xlu0 %1858
  %1861 = vst.msk [vmem:[#allocation4] sm:$0x3] %vm176, %v1859
  %s1862 = scalar_lea.vmem %s4, 14
  %1863 = vst.msk [vmem:[%s1862] sm:$0x3] %vm176, %v1854
  %v1864 = vld [vmem:[%s44] sm:$0x3]
  %v1865 = vld [vmem:[#allocation3] sm:$0x3]
  %v1866 = vld [vmem:[%s3] sm:$0xff]
  %v1867 = vld [vmem:[%s3 + $0x8] sm:$0xff]
  %v1869 = vsel %vm68, %v1865, 0
  %1871 = vmatprep.subr.mxu0 0.0
  %1872 = vmatpush1.msra.mxu0 %v1866
  %1873 = vmatprep.subr.mxu0 0.0
  %1874 = vmatpush1.msra.mxu0 %v1867
  %1875 = vmatprep.subr.mxu0 0.0
  %1876 = vmatpush1.msra.mxu0 0.0
  %1877 = vmatprep.subr.mxu0 0.0
  %1878 = vmatpush1.msra.mxu0 0.0
  %1879 = vmatprep.subr.mxu0 0.0
  %1880 = vmatpush1.msra.mxu0 0.0
  %1881 = vmatprep.subr.mxu0 0.0
  %1882 = vmatpush1.msra.mxu0 0.0
  %1883 = vmatprep.subr.mxu0 0.0
  %1884 = vmatpush1.msra.mxu0 0.0
  %1885 = vmatprep.subr.mxu0 0.0
  %1886 = vmatpush1.msra.mxu0 0.0
  %1887 = vmatprep.subr.mxu0 0.0
  %1888 = vmatpush1.msra.mxu0 0.0
  %1889 = vmatprep.subr.mxu0 0.0
  %1890 = vmatpush1.msra.mxu0 0.0
  %1891 = vmatprep.subr.mxu0 0.0
  %1892 = vmatpush1.msra.mxu0 0.0
  %1893 = vmatprep.subr.mxu0 0.0
  %1894 = vmatpush1.msra.mxu0 0.0
  %1895 = vmatprep.subr.mxu0 0.0
  %1896 = vmatpush1.msra.mxu0 0.0
  %1897 = vmatprep.subr.mxu0 0.0
  %1898 = vmatpush1.msra.mxu0 0.0
  %1899 = vmatprep.subr.mxu0 0.0
  %1900 = vmatpush1.msra.mxu0 0.0
  %1901 = vmatprep.subr.mxu0 0.0
  %1902 = vmatpush1.msra.mxu0 0.0
  %1903 = vmatprep.subr.mxu0 0.0
  %1904 = vmatpush1.msra.mxu0 0.0
  %1905 = vmatprep.subr.mxu0 0.0
  %1906 = vmatpush1.msra.mxu0 0.0
  %1907 = vmatprep.subr.mxu0 0.0
  %1908 = vmatpush1.msra.mxu0 0.0
  %1909 = vmatprep.subr.mxu0 0.0
  %1910 = vmatpush1.msra.mxu0 0.0
  %1911 = vmatprep.subr.mxu0 0.0
  %1912 = vmatpush1.msra.mxu0 0.0
  %1913 = vmatprep.subr.mxu0 0.0
  %1914 = vmatpush1.msra.mxu0 0.0
  %1915 = vmatprep.subr.mxu0 0.0
  %1916 = vmatpush1.msra.mxu0 0.0
  %1917 = vmatprep.subr.mxu0 0.0
  %1918 = vmatpush1.msra.mxu0 0.0
  %1919 = vmatprep.subr.mxu0 0.0
  %1920 = vmatpush1.msra.mxu0 0.0
  %1921 = vmatprep.subr.mxu0 0.0
  %1922 = vmatpush1.msra.mxu0 0.0
  %1923 = vmatprep.subr.mxu0 0.0
  %1924 = vmatpush1.msra.mxu0 0.0
  %1925 = vmatprep.subr.mxu0 0.0
  %1926 = vmatpush1.msra.mxu0 0.0
  %1927 = vmatprep.subr.mxu0 0.0
  %1928 = vmatpush1.msra.mxu0 0.0
  %1929 = vmatprep.subr.mxu0 0.0
  %1930 = vmatpush1.msra.mxu0 0.0
  %1931 = vmatprep.subr.mxu0 0.0
  %1932 = vmatpush1.msra.mxu0 0.0
  %1933 = vmatprep.subr.mxu0 0.0
  %1934 = vmatpush1.msra.mxu0 0.0
  %1935 = vmatprep.mubr.f32.mxu0 0.0
  %1936 = vmatmul.mubr.f32.gmra.mrb[0].mxu0 %v1869
  %v1937 = vpop.f32.mrb[0].mxu0
  %v1938 = vadd.f32 0.0, %v1937
  %v1939 = vpop.f32.mrb[0].mxu0
  %1940 = vdwg.mxu0
  %v1941 = vadd.f32 %v1864, %v1938
  %v1942 = vxor.u32 %v1941, 2147483648
  %v1943 = vmul.f32 %v1942, 1.442695
  %v1944 = vpow.pop %v1943
  %v1945 = vadd.f32 %v1944, 1.0
  %v1946 = vrcp.pop %v1945
  %v1947 = vmul.f32 1.0, %v1946
  %v1948 = vtanh.pop %v1941
  %v1949 = vld [vmem:[#allocation5] sm:$0x3]
  %1951 = vrot.lane.b32.xlu0 %v1949, 16
  %v1952 = vpop.permute.xlu0 %1951
  %v1954 = vmul.f32 %v1947, %v1952
  %1956 = vrot.lane.b32.xlu0 %v1948, 80
  %v1957 = vpop.permute.xlu0 %1956
  %v1959 = vmul.f32 %v1947, %v1957
  %1961 = vrot.lane.b32.xlu0 %v1959, 16
  %v1962 = vpop.permute.xlu0 %1961
  %v1964 = vadd.f32 %v1954, %v1962
  %v1965 = vtanh.pop %v1964
  %1967 = vrot.lane.b32.xlu0 %v1965, 16
  %v1968 = vpop.permute.xlu0 %1967
  %v1970 = vmul.f32 %v1947, %v1968
  %1972 = vrot.lane.b32.xlu0 %v1970, 96
  %v1973 = vpop.permute.xlu0 %1972
  %1975 = vst.msk [vmem:[#allocation3] sm:$0x3] %vm176, %v1973
  %1977 = vrot.lane.b32.xlu0 %v1964, 112
  %v1978 = vpop.permute.xlu0 %1977
  %1980 = vst.msk [vmem:[#allocation5] sm:$0x3] %vm176, %v1978
  %1981 = vst.msk [vmem:[%s52] sm:$0x3] %vm176, %v1973
  %s1982 = ssub.s32 0, 0
  %s1983 = smul.u32 8, %s1982
  %p1984 = scmp.lt.s32.totalorder %s1983, 7
  %s1985 = scalar_select %p1984, %s1983, 7
  %s1986 = smul.addr %s1985, 2
  %s1987 = scalar_lea.vmem %s5, %s1986
  // Predicated region
  $region22: #{custom_model_forward.5} parent=0 // pred_check
    _
  $region23: #{custom_model_forward.5} parent=0 // pred_check_branch
    %1989 = sbr.rel (0) target = $region25
  $region24: #{custom_model_forward.5} parent=0 // pred_region
    _
  $region25: #{custom_model_forward.5} parent=0 // pred_fallthru
    _
  // Predicated region
  $region26: #{custom_model_forward.5} parent=0 // pred_check
    _
  $region27: #{custom_model_forward.5} parent=0 // pred_check_branch
    %1991 = sbr.rel (0) target = $region29
  $region28: #{custom_model_forward.5} parent=0 // pred_region
    %s1992 = ssub.s32 0, 0
    %s1993 = smul.u32 8, %s1992
  $region29: #{custom_model_forward.5} parent=0 // pred_fallthru
    _
  // Predicated region
  $region30: #{custom_model_forward.5} parent=0 // pred_check
    _
  $region31: #{custom_model_forward.5} parent=0 // pred_check_branch
    %1995 = sbr.rel (0) target = $region33
  $region32: #{custom_model_forward.5} parent=0 // pred_region
    _
  $region33: #{custom_model_forward.5} parent=0 // pred_fallthru
    _
  // Predicated region
  $region34: #{custom_model_forward.5} parent=0 // pred_check
    _
  $region35: #{custom_model_forward.5} parent=0 // pred_check_branch
    %1997 = sbr.rel (0) target = $region37
  $region36: #{custom_model_forward.5} parent=0 // pred_region
    %s1998 = ssub.s32 0, 0
    %s1999 = smul.u32 8, %s1998
    %p2000 = scmp.lt.s32.totalorder %s1999, 7
    %s2001 = scalar_select %p2000, %s1999, 7
    %s2002 = smul.addr %s2001, 2
    %s2003 = scalar_lea.vmem %s5, %s2002
  $region37: #{custom_model_forward.5} parent=0 // pred_fallthru
    _

</llo_original>
